<compile_context>
chip_gen: v5e
topology: v5e:2x2
jax: 0.10.0
libtpu: 0.0.40
codegen_flags: <defaults>
</compile_context>

<pallas_src>
import jax
import jax.numpy as jnp
from jax.experimental import pallas as pl
from jax.experimental.pallas import tpu as pltpu


# ---------------------------------------------------------------------------
# Kernels
# ---------------------------------------------------------------------------

def _double_ffn_kernel(x_ref, w1_ref, b1_ref, w2_ref, b2_ref, ls_ref, o_ref):
    """o = x + ls * ffn(ffn(x)); ffn = Linear(H,4H) -> SiLU -> Linear(4H,H)."""
    x = x_ref[...].astype(jnp.float32)            # (TB, S, H)
    tb, seq, h = x.shape
    y = x.reshape(tb * seq, h)
    for _ in range(2):                            # ffn applied twice (same weights)
        z = jnp.dot(y.astype(jnp.bfloat16), w1_ref[...],
                    preferred_element_type=jnp.float32) + b1_ref[...]
        z = z * jax.nn.sigmoid(z)                 # SiLU (f32)
        y = jnp.dot(z.astype(jnp.bfloat16), w2_ref[...],
                    preferred_element_type=jnp.float32) + b2_ref[...]
    o_ref[...] = (x + ls_ref[...] * y.reshape(tb, seq, h)).astype(o_ref.dtype)


def _nla_kernel(x_ref, wqkv_ref, bqkv_ref, wo_ref, bo_ref, ls_ref, o_ref):
    """o = x + ls * NonLinearAttention(x), fused (H,3H) QKV projection."""
    x = x_ref[...].astype(jnp.float32)            # (TB, S, H)
    tb, seq, h = x.shape
    xf = x.reshape(tb * seq, h)
    qkv = jnp.dot(xf.astype(jnp.bfloat16), wqkv_ref[...],
                  preferred_element_type=jnp.float32) + bqkv_ref[...]
    q = qkv[:, :h].reshape(tb, seq, h)
    k = qkv[:, h:2 * h].reshape(tb, seq, h)
    v = qkv[:, 2 * h:].reshape(tb, seq, h)
    sc = jnp.tanh(q) * k                          # (TB, S, H)
    # softmax over the sequence axis (dim=1 of the (B,S,H) input)
    m = jnp.max(sc, axis=1, keepdims=True)
    e = jnp.exp(sc - m)
    denom = jnp.sum(e, axis=1, keepdims=True)
    w = e * pl.reciprocal(denom, approx=True)
    ctx = (w * v).reshape(tb * seq, h)
    out = jnp.dot(ctx.astype(jnp.bfloat16), wo_ref[...],
                  preferred_element_type=jnp.float32) + bo_ref[...]
    o_ref[...] = (x + ls_ref[...] * out.reshape(tb, seq, h)).astype(o_ref.dtype)


def _make_mha_kernel(num_heads):
    def kernel(x_ref, win_ref, bin_ref, wout_ref, bout_ref, ls_ref, o_ref):
        """o = x + ls * MultiheadAttention(x, x, x) (eval mode)."""
        x = x_ref[...].astype(jnp.float32)        # (TB, S, H)
        tb, seq, h = x.shape
        hd = h // num_heads
        scale = 1.0 / (hd ** 0.5)
        xf = x.reshape(tb * seq, h)
        qkv = jnp.dot(xf.astype(jnp.bfloat16), win_ref[...],
                      preferred_element_type=jnp.float32) + bin_ref[...]
        q = (qkv[:, :h] * scale).reshape(tb, seq, h)
        k = qkv[:, h:2 * h].reshape(tb, seq, h)
        v = qkv[:, 2 * h:].reshape(tb, seq, h)
        acc = jnp.zeros((tb * seq, h), jnp.float32)
        for hh in range(num_heads):               # static unroll over heads
            lo, hi = hh * hd, (hh + 1) * hd
            qh = q[:, :, lo:hi]
            kh = k[:, :, lo:hi]
            vh = v[:, :, lo:hi]
            sc = jnp.einsum("bqd,bkd->bqk", qh, kh,
                            preferred_element_type=jnp.float32)   # (TB, S, S)
            m = jnp.max(sc, axis=-1, keepdims=True)
            e = jnp.exp(sc - m)
            p = e * pl.reciprocal(jnp.sum(e, axis=-1, keepdims=True), approx=True)
            ctx = jnp.einsum("bqk,bkd->bqd", p, vh,
                             preferred_element_type=jnp.float32)  # (TB, S, hd)
            # fold the per-head slice of the out-projection in here (avoids
            # a lane-concat of the head contexts)
            acc = acc + jnp.dot(ctx.reshape(tb * seq, hd).astype(jnp.bfloat16),
                                wout_ref[lo:hi, :],
                                preferred_element_type=jnp.float32)
        y = acc + bout_ref[...]
        o_ref[...] = (x + ls_ref[...] * y.reshape(tb, seq, h)).astype(o_ref.dtype)
    return kernel


def _conv_module_kernel(x_ref, nb_ref, nsc_ref, w1_ref, b1_ref, dw_ref, db_ref,
                        bns_ref, bnb_ref, w2_ref, b2_ref, ls_ref, o_ref):
    """o = x + ls * ConvModule(x) (inference: BN eval, dropout identity)."""
    x = x_ref[...].astype(jnp.float32)            # (TB, S, H)
    tb, seq, h = x.shape
    # BiasNorm
    d = x - nb_ref[...]
    rms = jnp.sqrt(jnp.mean(d * d, axis=-1, keepdims=True) + 1e-5)
    y = x * pl.reciprocal(rms, approx=False) * nsc_ref[...]
    # pointwise conv 1 (1x1 conv == matmul H -> 2H) + GLU over channels
    z = jnp.dot(y.reshape(tb * seq, h).astype(jnp.bfloat16), w1_ref[...],
                preferred_element_type=jnp.float32) + b1_ref[...]     # (TB*S, 2H)
    y = (z[:, :h] * jax.nn.sigmoid(z[:, h:])).reshape(tb, seq, h)
    # depthwise conv (kernel=3, padding=1) along the sequence axis
    t_idx = jax.lax.broadcasted_iota(jnp.int32, (tb, seq, h), 1)
    y_prev = jnp.where(t_idx >= 1, pltpu.roll(y, shift=1, axis=1), 0.0)
    y_next = jnp.where(t_idx <= seq - 2, pltpu.roll(y, shift=seq - 1, axis=1), 0.0)
    y = (y_prev * dw_ref[0:1, :] + y * dw_ref[1:2, :] + y_next * dw_ref[2:3, :]
         + db_ref[...])
    # BatchNorm (eval; folded into scale/shift on the host) + SiLU
    y = y * bns_ref[...] + bnb_ref[...]
    y = y * jax.nn.sigmoid(y)
    # pointwise conv 2 (H -> H)
    out = jnp.dot(y.reshape(tb * seq, h).astype(jnp.bfloat16), w2_ref[...],
                  preferred_element_type=jnp.float32) + b2_ref[...]
    o_ref[...] = (x + ls_ref[...] * out.reshape(tb, seq, h)).astype(o_ref.dtype)


def _bypass_mid_kernel(res_ref, x_ref, c_ref, o_ref):
    """Replicates: c_mid = Bypass(res, x); o = (1 - c_mid)*res + c_mid*x."""
    res = res_ref[...].astype(jnp.float32)
    x = x_ref[...].astype(jnp.float32)
    c = c_ref[...]                                # (1, H), already clipped to [0,1]
    c_mid = (1.0 - c) * res + c * x               # Bypass.forward output (a tensor)
    o_ref[...] = ((1.0 - c_mid) * res + c_mid * x).astype(o_ref.dtype)


def _final_norm_bypass_kernel(res_ref, x_ref, nb_ref, nsc_ref, c_ref, o_ref):
    """xn = BiasNorm(x); c_f = Bypass(res, xn); o = (1 - c_f)*res + c_f*xn."""
    res = res_ref[...].astype(jnp.float32)
    x = x_ref[...].astype(jnp.float32)
    d = x - nb_ref[...]
    rms = jnp.sqrt(jnp.mean(d * d, axis=-1, keepdims=True) + 1e-5)
    xn = x * pl.reciprocal(rms, approx=False) * nsc_ref[...]
    c = c_ref[...]
    c_f = (1.0 - c) * res + c * xn
    o_ref[...] = ((1.0 - c_f) * res + c_f * xn).astype(o_ref.dtype)


# ---------------------------------------------------------------------------
# pallas_call plumbing
# ---------------------------------------------------------------------------

def _pick_block_b(batch, seq, target_rows=256):
    """Batches per grid step so that TB*S targets >=256 matmul rows."""
    tb = max(1, min(batch, -(-target_rows // seq)))
    while batch % tb != 0:
        tb -= 1
    return tb


def _run_blockwise(kernel, tensors, params, out_dtype, block_b):
    """Run `kernel` over batch blocks; `tensors` are (B,S,H) arrays blocked on
    batch, `params` are grid-invariant arrays passed as full blocks."""
    b, seq, h = tensors[0].shape
    grid = (b // block_b,)
    x_spec = pl.BlockSpec((block_b, seq, h), lambda i: (i, 0, 0))

    def const_spec(p):
        nd = p.ndim
        return pl.BlockSpec(p.shape, lambda i, _nd=nd: (0,) * _nd)

    in_specs = [x_spec] * len(tensors) + [const_spec(p) for p in params]
    # NOTE: at production H, weight specs should be single-buffered (they are
    # grid-invariant) and vmem_limit_bytes set explicitly; unnecessary at the
    # demo shape.
    return pl.pallas_call(
        kernel,
        out_shape=jax.ShapeDtypeStruct((b, seq, h), out_dtype),
        grid_spec=pltpu.PrefetchScalarGridSpec(
            num_scalar_prefetch=0,
            grid=grid,
            in_specs=in_specs,
            out_specs=x_spec,
        ),
        compiler_params=pltpu.CompilerParams(
            dimension_semantics=("parallel",)),
    )(*tensors, *params)


def zipformer_block_forward(x, kp, num_heads, block_b=None):
    b, seq, h = x.shape
    if block_b is None:
        block_b = _pick_block_b(b, seq)
    ls = kp["ls"]
    mha_kernel = _make_mha_kernel(num_heads)

    def ffn(y, p):
        return _run_blockwise(_double_ffn_kernel, [y],
                              [p["w1"], p["b1"], p["w2"], p["b2"], ls],
                              y.dtype, block_b)

    def nla(y):
        p = kp["nla"]
        return _run_blockwise(_nla_kernel, [y],
                              [p["wqkv"], p["bqkv"], p["wo"], p["bo"], ls],
                              y.dtype, block_b)

    def mha(y, p):
        return _run_blockwise(mha_kernel, [y],
                              [p["w_in"], p["b_in"], p["w_out"], p["b_out"], ls],
                              y.dtype, block_b)

    def conv(y, p):
        return _run_blockwise(_conv_module_kernel, [y],
                              [p["nb"], p["nsc"], p["w1"], p["b1"], p["dw"],
                               p["db"], p["bn_scale"], p["bn_shift"],
                               p["w2"], p["b2"], ls],
                              y.dtype, block_b)

    residual = x
    x = ffn(x, kp["ffn1"])
    x = nla(x)
    x = mha(x, kp["attn1"])
    x = conv(x, kp["conv1"])
    x = ffn(x, kp["ffn2"])
    x = _run_blockwise(_bypass_mid_kernel, [residual, x],
                       [kp["bypass_mid_c"]], x.dtype, block_b)
    x = mha(x, kp["attn2"])
    x = conv(x, kp["conv2"])
    x = ffn(x, kp["ffn3"])
    x = _run_blockwise(_final_norm_bypass_kernel, [residual, x],
                       [kp["fn_b"], kp["fn_sc"], kp["bypass_final_c"]],
                       x.dtype, block_b)
    return x


# ---------------------------------------------------------------------------
# Parameter preparation (done ONCE, outside the hot path): transpose torch
# (out,in) weights to (in,out), fuse QKV, fold BatchNorm, cast matmul weights
# to bf16, reshape vectors to lane-dense (1,H) rows.
# ---------------------------------------------------------------------------

def prepare_params(rp):
    bf16 = jnp.bfloat16

    def t(w):
        return jnp.asarray(w.T, dtype=bf16)

    def row(v):
        return jnp.asarray(v, jnp.float32).reshape(1, -1)

    kp = {"ls": row(rp["layer_scale"])}
    for name in ("ffn1", "ffn2", "ffn3"):
        p = rp[name]
        kp[name] = dict(w1=t(p["w1"]), b1=row(p["b1"]),
                        w2=t(p["w2"]), b2=row(p["b2"]))
    p = rp["nla"]
    wqkv = jnp.concatenate([p["wq"].T, p["wk"].T, p["wv"].T], axis=1)   # (H, 3H)
    bqkv = jnp.concatenate([p["bq"], p["bk"], p["bv"]])
    kp["nla"] = dict(wqkv=wqkv.astype(bf16), bqkv=row(bqkv),
                     wo=t(p["wo"]), bo=row(p["bo"]))
    for name in ("attn1", "attn2"):
        p = rp[name]
        kp[name] = dict(w_in=t(p["w_in"]), b_in=row(p["b_in"]),
                        w_out=t(p["w_out"]), b_out=row(p["b_out"]))
    for name in ("conv1", "conv2"):
        p = rp[name]
        bn_scale = p["bn_w"] / jnp.sqrt(p["bn_rv"] + 1e-5)
        bn_shift = p["bn_b"] - p["bn_rm"] * bn_scale
        kp[name] = dict(
            nb=row(p["norm"]["bias"]), nsc=row(jnp.exp(p["norm"]["log_scale"])),
            w1=jnp.asarray(p["pw1_w"][:, :, 0].T, bf16), b1=row(p["pw1_b"]),
            dw=jnp.asarray(p["dw_w"][:, 0, :].T, jnp.float32),  # (3, H)
            db=row(p["dw_b"]),
            bn_scale=row(bn_scale), bn_shift=row(bn_shift),
            w2=jnp.asarray(p["pw2_w"][:, :, 0].T, bf16), b2=row(p["pw2_b"]))
    kp["bypass_mid_c"] = row(jnp.clip(rp["bypass_mid_c"], 0.0, 1.0))
    kp["bypass_final_c"] = row(jnp.clip(rp["bypass_final_c"], 0.0, 1.0))
    kp["fn_b"] = row(rp["norm_final"]["bias"])
    kp["fn_sc"] = row(jnp.exp(rp["norm_final"]["log_scale"]))
    return kp


# ---------------------------------------------------------------------------
# Pure-JAX f32 reference matching the PyTorch forward (inference mode).
# ---------------------------------------------------------------------------

def _reference_block(x, rp, num_heads):
    h = x.shape[-1]
    ls = rp["layer_scale"]

    def linear(y, w, b):                                   # torch (out, in) layout
        return y @ w.T + b

    def ffn(y, p):
        z = linear(y, p["w1"], p["b1"])
        z = z * jax.nn.sigmoid(z)
        return linear(z, p["w2"], p["b2"])

    def bias_norm(y, p):
        rms = jnp.sqrt(jnp.mean((y - p["bias"]) ** 2, axis=-1, keepdims=True) + 1e-5)
        return y / rms * jnp.exp(p["log_scale"])

    def nla(y, p):
        q = linear(y, p["wq"], p["bq"])
        k = linear(y, p["wk"], p["bk"])
        v = linear(y, p["wv"], p["bv"])
        w = jax.nn.softmax(jnp.tanh(q) * k, axis=1)
        return linear(w * v, p["wo"], p["bo"])

    def mha(y, p):
        b, s, _ = y.shape
        hd = h // num_heads
        qkv = linear(y, p["w_in"], p["b_in"])
        q, k, v = qkv[..., :h], qkv[..., h:2 * h], qkv[..., 2 * h:]

        def split(t):
            return t.reshape(b, s, num_heads, hd).transpose(0, 2, 1, 3)

        q, k, v = split(q), split(k), split(v)
        scores = jnp.einsum("bhqd,bhkd->bhqk", q, k) / jnp.sqrt(float(hd))
        attn = jax.nn.softmax(scores, axis=-1)
        ctx = jnp.einsum("bhqk,bhkd->bhqd", attn, v).transpose(0, 2, 1, 3)
        return linear(ctx.reshape(b, s, h), p["w_out"], p["b_out"])

    def conv_module(y, p):
        z = bias_norm(y, p["norm"])
        z = jnp.einsum("bsh,oh->bso", z, p["pw1_w"][:, :, 0]) + p["pw1_b"]
        z = z[..., :h] * jax.nn.sigmoid(z[..., h:])
        zp = jnp.pad(z, ((0, 0), (1, 1), (0, 0)))
        z = (zp[:, :-2, :] * p["dw_w"][:, 0, 0]
             + zp[:, 1:-1, :] * p["dw_w"][:, 0, 1]
             + zp[:, 2:, :] * p["dw_w"][:, 0, 2]) + p["dw_b"]
        z = (z - p["bn_rm"]) / jnp.sqrt(p["bn_rv"] + 1e-5) * p["bn_w"] + p["bn_b"]
        z = z * jax.nn.sigmoid(z)
        return jnp.einsum("bsh,oh->bso", z, p["pw2_w"][:, :, 0]) + p["pw2_b"]

    def bypass_coeff(res, y, c):
        c = jnp.clip(c, 0.0, 1.0)
        return (1.0 - c) * res + c * y

    residual = x
    x = x + ls * ffn(ffn(x, rp["ffn1"]), rp["ffn1"])
    x = x + ls * nla(x, rp["nla"])
    x = x + ls * mha(x, rp["attn1"])
    x = x + ls * conv_module(x, rp["conv1"])
    x = x + ls * ffn(ffn(x, rp["ffn2"]), rp["ffn2"])
    c_mid = bypass_coeff(residual, x, rp["bypass_mid_c"])
    x = (1 - c_mid) * residual + c_mid * x
    x = x + ls * mha(x, rp["attn2"])
    x = x + ls * conv_module(x, rp["conv2"])
    x = x + ls * ffn(ffn(x, rp["ffn3"]), rp["ffn3"])
    xn = bias_norm(x, rp["norm_final"])
    c_f = bypass_coeff(residual, xn, rp["bypass_final_c"])
    return (1 - c_f) * residual + c_f * xn


# ---------------------------------------------------------------------------
# Deterministic synthetic parameter init (torch layouts).
# ---------------------------------------------------------------------------

def _init_raw_params(key, h, ff=4):
    keys = iter(jax.random.split(key, 64))

    def lin(out_dim, in_dim):
        s = 1.0 / (in_dim ** 0.5)
        w = jax.random.uniform(next(keys), (out_dim, in_dim), jnp.float32, -s, s)
        b = jax.random.uniform(next(keys), (out_dim,), jnp.float32, -s, s)
        return w, b

    def ffn_p():
        w1, b1 = lin(ff * h, h)
        w2, b2 = lin(h, ff * h)
        return dict(w1=w1, b1=b1, w2=w2, b2=b2)

    def attn_p():
        w_in, b_in = lin(3 * h, h)
        w_out, b_out = lin(h, h)
        return dict(w_in=w_in, b_in=b_in, w_out=w_out, b_out=b_out)

    def conv_p():
        norm = dict(bias=0.1 * jax.random.normal(next(keys), (h,)),
                    log_scale=0.1 * jax.random.normal(next(keys), (h,)))
        pw1_w, pw1_b = lin(2 * h, h)
        s3 = 1.0 / (3.0 ** 0.5)
        dw_w = jax.random.uniform(next(keys), (h, 1, 3), jnp.float32, -s3, s3)
        dw_b = jax.random.uniform(next(keys), (h,), jnp.float32, -s3, s3)
        pw2_w, pw2_b = lin(h, h)
        return dict(norm=norm,
                    pw1_w=pw1_w[:, :, None], pw1_b=pw1_b,
                    dw_w=dw_w, dw_b=dw_b,
                    bn_w=1.0 + 0.1 * jax.random.normal(next(keys), (h,)),
                    bn_b=0.1 * jax.random.normal(next(keys), (h,)),
                    bn_rm=jnp.zeros((h,), jnp.float32),
                    bn_rv=jnp.ones((h,), jnp.float32),
                    pw2_w=pw2_w[:, :, None], pw2_b=pw2_b)

    def nla_p():
        wq, bq = lin(h, h)
        wk, bk = lin(h, h)
        wv, bv = lin(h, h)
        wo, bo = lin(h, h)
        return dict(wq=wq, bq=bq, wk=wk, bk=bk, wv=wv, bv=bv, wo=wo, bo=bo)

    # layer_scale set to 0.1 (it is a learnable parameter; default 1e-5 would
    # make the numerical comparison trivially easy).
    return dict(
        layer_scale=0.1 * jnp.ones((h,), jnp.float32),
        ffn1=ffn_p(), nla=nla_p(), attn1=attn_p(), conv1=conv_p(),
        ffn2=ffn_p(),
        bypass_mid_c=jax.random.uniform(next(keys), (h,), jnp.float32, 0.9, 1.0),
        attn2=attn_p(), conv2=conv_p(), ffn3=ffn_p(),
        norm_final=dict(bias=0.1 * jax.random.normal(next(keys), (h,)),
                        log_scale=0.1 * jax.random.normal(next(keys), (h,))),
        bypass_final_c=jax.random.uniform(next(keys), (h,), jnp.float32, 0.9, 1.0),
    )


if __name__ == "__main__":
    key = jax.random.PRNGKey(0)
    k_x, k_p = jax.random.split(key)

    B, S, H, NH = 2, 8, 128, 4           # S multiple of 8, H multiple of 128
    x = jax.random.normal(k_x, (B, S, H), dtype=jnp.float32)
    raw_params = _init_raw_params(k_p, H)
    kernel_params = prepare_params(raw_params)

    fwd = jax.jit(lambda xx, pp: zipformer_block_forward(xx, pp, num_heads=NH))
    out = jax.block_until_ready(fwd(x, kernel_params))

    ref = _reference_block(x, raw_params, NH)
    assert out.shape == (B, S, H)
    max_err = float(jnp.max(jnp.abs(out - ref)))
    assert jnp.allclose(out, ref, atol=2e-2, rtol=2e-2), (
        f"mismatch vs reference, max abs err {max_err}")

    print("KERNEL_OK")
</pallas_src>

<mosaic_0001>
module attributes {stable_mosaic.version = 11 : i64} {
  func.func @_nla_kernel(%arg0: i32, %arg1: memref<2x8x128xf32, #tpu.memory_space<vmem>>, %arg2: memref<128x384xbf16, #tpu.memory_space<vmem>>, %arg3: memref<1x384xf32, #tpu.memory_space<vmem>>, %arg4: memref<128x128xbf16, #tpu.memory_space<vmem>>, %arg5: memref<1x128xf32, #tpu.memory_space<vmem>>, %arg6: memref<1x128xf32, #tpu.memory_space<vmem>>, %arg7: memref<2x8x128xf32, #tpu.memory_space<vmem>>) attributes {dimension_semantics = [#tpu.dimension_semantics<parallel>], iteration_bounds = array<i64: 1>, scalar_prefetch = 0 : i64, scratch_operands = 0 : i64, tpu.core_type = #tpu.core_type<tc>, window_params = [{transform_indices = @transform_0, window_bounds = array<i64: 2, 8, 128>}, {pipeline_mode = #tpu.pipeline_mode<synchronous>, transform_indices = @transform_1, window_bounds = array<i64: 128, 384>}, {pipeline_mode = #tpu.pipeline_mode<synchronous>, transform_indices = @transform_2, window_bounds = array<i64: 1, 384>}, {pipeline_mode = #tpu.pipeline_mode<synchronous>, transform_indices = @transform_3, window_bounds = array<i64: 128, 128>}, {pipeline_mode = #tpu.pipeline_mode<synchronous>, transform_indices = @transform_4, window_bounds = array<i64: 1, 128>}, {pipeline_mode = #tpu.pipeline_mode<synchronous>, transform_indices = @transform_5, window_bounds = array<i64: 1, 128>}, {transform_indices = @transform_6, window_bounds = array<i64: 2, 8, 128>}]} {
    %c0 = arith.constant 0 : index
    %c0_0 = arith.constant 0 : index
    %c0_1 = arith.constant 0 : index
    %0 = vector.load %arg1[%c0, %c0_0, %c0_1] : memref<2x8x128xf32, #tpu.memory_space<vmem>>, vector<2x8x128xf32>
    %1 = vector.shape_cast %0 : vector<2x8x128xf32> to vector<16x128xf32>
    %2 = arith.truncf %1 : vector<16x128xf32> to vector<16x128xbf16>
    %c0_2 = arith.constant 0 : index
    %c0_3 = arith.constant 0 : index
    %3 = vector.load %arg2[%c0_2, %c0_3] : memref<128x384xbf16, #tpu.memory_space<vmem>>, vector<128x384xbf16>
    %cst = arith.constant dense<0.000000e+00> : vector<16x384xf32>
    %4 = tpu.matmul %2, %3, %cst {dimension_numbers = #tpu.dot_dimension_numbers<[1], [0], [0], [1], [0, 0, 1, 1], [], []>} : vector<16x128xbf16>, vector<128x384xbf16>, vector<16x384xf32> -> vector<16x384xf32>
    %c0_4 = arith.constant 0 : index
    %c0_5 = arith.constant 0 : index
    %5 = vector.load %arg3[%c0_4, %c0_5] : memref<1x384xf32, #tpu.memory_space<vmem>>, vector<1x384xf32>
    %6 = vector.broadcast %5 : vector<1x384xf32> to vector<16x384xf32>
    %7 = arith.addf %4, %6 : vector<16x384xf32>
    %8 = vector.extract_strided_slice %7 {offsets = [0, 0], sizes = [16, 128], strides = [1, 1]} : vector<16x384xf32> to vector<16x128xf32>
    %9 = vector.shape_cast %8 : vector<16x128xf32> to vector<2x8x128xf32>
    %10 = vector.extract_strided_slice %7 {offsets = [0, 128], sizes = [16, 128], strides = [1, 1]} : vector<16x384xf32> to vector<16x128xf32>
    %11 = vector.shape_cast %10 : vector<16x128xf32> to vector<2x8x128xf32>
    %12 = vector.extract_strided_slice %7 {offsets = [0, 256], sizes = [16, 128], strides = [1, 1]} : vector<16x384xf32> to vector<16x128xf32>
    %13 = vector.shape_cast %12 : vector<16x128xf32> to vector<2x8x128xf32>
    %14 = math.tanh %9 : vector<2x8x128xf32>
    %15 = arith.mulf %14, %11 : vector<2x8x128xf32>
    %cst_6 = arith.constant dense<0xFF800000> : vector<2x128xf32>
    %16 = vector.multi_reduction <maximumf>, %15, %cst_6 [1] : vector<2x8x128xf32> to vector<2x128xf32>
    %17 = vector.shape_cast %16 : vector<2x128xf32> to vector<2x1x128xf32>
    %18 = vector.broadcast %17 : vector<2x1x128xf32> to vector<2x8x128xf32>
    %19 = arith.subf %15, %18 : vector<2x8x128xf32>
    %20 = math.exp %19 : vector<2x8x128xf32>
    %cst_7 = arith.constant dense<0.000000e+00> : vector<2x128xf32>
    %21 = vector.multi_reduction <add>, %20, %cst_7 [1] : vector<2x8x128xf32> to vector<2x128xf32>
    %22 = vector.shape_cast %21 : vector<2x128xf32> to vector<2x1x128xf32>
    %23 = tpu.reciprocal %22 {approx = true} : vector<2x1x128xf32> -> vector<2x1x128xf32>
    %24 = vector.broadcast %23 : vector<2x1x128xf32> to vector<2x8x128xf32>
    %25 = arith.mulf %20, %24 : vector<2x8x128xf32>
    %26 = arith.mulf %25, %13 : vector<2x8x128xf32>
    %27 = vector.shape_cast %26 : vector<2x8x128xf32> to vector<16x128xf32>
    %28 = arith.truncf %27 : vector<16x128xf32> to vector<16x128xbf16>
    %c0_8 = arith.constant 0 : index
    %c0_9 = arith.constant 0 : index
    %29 = vector.load %arg4[%c0_8, %c0_9] : memref<128x128xbf16, #tpu.memory_space<vmem>>, vector<128x128xbf16>
    %cst_10 = arith.constant dense<0.000000e+00> : vector<16x128xf32>
    %30 = tpu.matmul %28, %29, %cst_10 {dimension_numbers = #tpu.dot_dimension_numbers<[1], [0], [0], [1], [0, 0, 1, 1], [], []>} : vector<16x128xbf16>, vector<128x128xbf16>, vector<16x128xf32> -> vector<16x128xf32>
    %c0_11 = arith.constant 0 : index
    %c0_12 = arith.constant 0 : index
    %31 = vector.load %arg5[%c0_11, %c0_12] : memref<1x128xf32, #tpu.memory_space<vmem>>, vector<1x128xf32>
    %32 = vector.broadcast %31 : vector<1x128xf32> to vector<16x128xf32>
    %33 = arith.addf %30, %32 : vector<16x128xf32>
    %c0_13 = arith.constant 0 : index
    %c0_14 = arith.constant 0 : index
    %34 = vector.load %arg6[%c0_13, %c0_14] : memref<1x128xf32, #tpu.memory_space<vmem>>, vector<1x128xf32>
    %35 = vector.shape_cast %33 : vector<16x128xf32> to vector<2x8x128xf32>
    %36 = vector.shape_cast %34 : vector<1x128xf32> to vector<1x1x128xf32>
    %37 = vector.broadcast %36 : vector<1x1x128xf32> to vector<2x8x128xf32>
    %38 = arith.mulf %37, %35 : vector<2x8x128xf32>
    %39 = arith.addf %0, %38 : vector<2x8x128xf32>
    %c0_15 = arith.constant 0 : index
    %c0_16 = arith.constant 0 : index
    %c0_17 = arith.constant 0 : index
    %40 = vector.load %arg7[%c0_15, %c0_16, %c0_17] : memref<2x8x128xf32, #tpu.memory_space<vmem>>, vector<2x8x128xf32>
    tpu.vector_store %arg7[%c0_15, %c0_16, %c0_17], %39 {strides = array<i32>} : memref<2x8x128xf32, #tpu.memory_space<vmem>>, vector<2x8x128xf32>,
    return
  }
  func.func @transform_0(%arg0: i32) -> (i32, i32, i32) {
    %c0_i32 = arith.constant 0 : i32
    %c0_i32_0 = arith.constant 0 : i32
    %c0_i32_1 = arith.constant 0 : i32
    return %arg0, %c0_i32, %c0_i32_0 : i32, i32, i32
  }
  func.func @transform_1(%arg0: i32) -> (i32, i32) {
    %c0_i32 = arith.constant 0 : i32
    %c0_i32_0 = arith.constant 0 : i32
    %c0_i32_1 = arith.constant 0 : i32
    return %c0_i32, %c0_i32_0 : i32, i32
  }
  func.func @transform_2(%arg0: i32) -> (i32, i32) {
    %c0_i32 = arith.constant 0 : i32
    %c0_i32_0 = arith.constant 0 : i32
    %c0_i32_1 = arith.constant 0 : i32
    return %c0_i32, %c0_i32_0 : i32, i32
  }
  func.func @transform_3(%arg0: i32) -> (i32, i32) {
    %c0_i32 = arith.constant 0 : i32
    %c0_i32_0 = arith.constant 0 : i32
    %c0_i32_1 = arith.constant 0 : i32
    return %c0_i32, %c0_i32_0 : i32, i32
  }
  func.func @transform_4(%arg0: i32) -> (i32, i32) {
    %c0_i32 = arith.constant 0 : i32
    %c0_i32_0 = arith.constant 0 : i32
    %c0_i32_1 = arith.constant 0 : i32
    return %c0_i32, %c0_i32_0 : i32, i32
  }
  func.func @transform_5(%arg0: i32) -> (i32, i32) {
    %c0_i32 = arith.constant 0 : i32
    %c0_i32_0 = arith.constant 0 : i32
    %c0_i32_1 = arith.constant 0 : i32
    return %c0_i32, %c0_i32_0 : i32, i32
  }
  func.func @transform_6(%arg0: i32) -> (i32, i32, i32) {
    %c0_i32 = arith.constant 0 : i32
    %c0_i32_0 = arith.constant 0 : i32
    %c0_i32_1 = arith.constant 0 : i32
    return %arg0, %c0_i32, %c0_i32_0 : i32, i32, i32
  }
}

module attributes {stable_mosaic.version = 11 : i64} {
  func.func @kernel(%arg0: i32, %arg1: memref<2x8x128xf32, #tpu.memory_space<vmem>>, %arg2: memref<128x384xbf16, #tpu.memory_space<vmem>>, %arg3: memref<1x384xf32, #tpu.memory_space<vmem>>, %arg4: memref<128x128xbf16, #tpu.memory_space<vmem>>, %arg5: memref<1x128xf32, #tpu.memory_space<vmem>>, %arg6: memref<1x128xf32, #tpu.memory_space<vmem>>, %arg7: memref<2x8x128xf32, #tpu.memory_space<vmem>>) attributes {dimension_semantics = [#tpu.dimension_semantics<parallel>], iteration_bounds = array<i64: 1>, scalar_prefetch = 0 : i64, scratch_operands = 0 : i64, tpu.core_type = #tpu.core_type<tc>, window_params = [{transform_indices = @transform_0, window_bounds = array<i64: 2, 8, 128>}, {pipeline_mode = #tpu.pipeline_mode<synchronous>, transform_indices = @transform_1, window_bounds = array<i64: 128, 384>}, {pipeline_mode = #tpu.pipeline_mode<synchronous>, transform_indices = @transform_2, window_bounds = array<i64: 1, 384>}, {pipeline_mode = #tpu.pipeline_mode<synchronous>, transform_indices = @transform_3, window_bounds = array<i64: 128, 128>}, {pipeline_mode = #tpu.pipeline_mode<synchronous>, transform_indices = @transform_4, window_bounds = array<i64: 1, 128>}, {pipeline_mode = #tpu.pipeline_mode<synchronous>, transform_indices = @transform_5, window_bounds = array<i64: 1, 128>}, {transform_indices = @transform_6, window_bounds = array<i64: 2, 8, 128>}]} {
    %c0 = arith.constant 0 : index
    %c0_0 = arith.constant 0 : index
    %c0_1 = arith.constant 0 : index
    %0 = vector.load %arg1[%c0, %c0_0, %c0_1] : memref<2x8x128xf32, #tpu.memory_space<vmem>>, vector<2x8x128xf32>
    %1 = vector.shape_cast %0 : vector<2x8x128xf32> to vector<16x128xf32>
    %2 = arith.truncf %1 : vector<16x128xf32> to vector<16x128xbf16>
    %c0_2 = arith.constant 0 : index
    %c0_3 = arith.constant 0 : index
    %3 = vector.load %arg2[%c0_2, %c0_3] : memref<128x384xbf16, #tpu.memory_space<vmem>>, vector<128x384xbf16>
    %cst = arith.constant dense<0.000000e+00> : vector<16x384xf32>
    %4 = tpu.matmul %2, %3, %cst {dimension_numbers = #tpu.dot_dimension_numbers<[1], [0], [0], [1], [0, 0, 1, 1], [], []>} : vector<16x128xbf16>, vector<128x384xbf16>, vector<16x384xf32> -> vector<16x384xf32>
    %c0_4 = arith.constant 0 : index
    %c0_5 = arith.constant 0 : index
    %5 = vector.load %arg3[%c0_4, %c0_5] : memref<1x384xf32, #tpu.memory_space<vmem>>, vector<1x384xf32>
    %6 = vector.broadcast %5 : vector<1x384xf32> to vector<16x384xf32>
    %7 = arith.addf %4, %6 : vector<16x384xf32>
    %8 = vector.extract_strided_slice %7 {offsets = [0, 0], sizes = [16, 128], strides = [1, 1]} : vector<16x384xf32> to vector<16x128xf32>
    %cst_6 = arith.constant 0.176776692 : f32
    %9 = vector.broadcast %cst_6 : f32 to vector<16x128xf32>
    %10 = arith.mulf %8, %9 : vector<16x128xf32>
    %11 = vector.shape_cast %10 : vector<16x128xf32> to vector<2x8x128xf32>
    %12 = vector.extract_strided_slice %7 {offsets = [0, 128], sizes = [16, 128], strides = [1, 1]} : vector<16x384xf32> to vector<16x128xf32>
    %13 = vector.shape_cast %12 : vector<16x128xf32> to vector<2x8x128xf32>
    %14 = vector.extract_strided_slice %7 {offsets = [0, 256], sizes = [16, 128], strides = [1, 1]} : vector<16x384xf32> to vector<16x128xf32>
    %15 = vector.shape_cast %14 : vector<16x128xf32> to vector<2x8x128xf32>
    %cst_7 = arith.constant 0.000000e+00 : f32
    %16 = vector.broadcast %cst_7 : f32 to vector<16x128xf32>
    %17 = vector.extract_strided_slice %11 {offsets = [0, 0, 0], sizes = [2, 8, 32], strides = [1, 1, 1]} : vector<2x8x128xf32> to vector<2x8x32xf32>
    %18 = vector.extract_strided_slice %13 {offsets = [0, 0, 0], sizes = [2, 8, 32], strides = [1, 1, 1]} : vector<2x8x128xf32> to vector<2x8x32xf32>
    %19 = vector.extract_strided_slice %15 {offsets = [0, 0, 0], sizes = [2, 8, 32], strides = [1, 1, 1]} : vector<2x8x128xf32> to vector<2x8x32xf32>
    "tpu.trace_start"() <{level = 10 : i32, message = "bqd,bkd->bqk"}> : () -> ()
    %cst_8 = arith.constant dense<0.000000e+00> : vector<2x8x8xf32>
    %20 = tpu.matmul %17, %18, %cst_8 {dimension_numbers = #tpu.dot_dimension_numbers<[2], [2], [1], [1], [0, 0, 0, 1, 1, 1], [0], [0]>} : vector<2x8x32xf32>, vector<2x8x32xf32>, vector<2x8x8xf32> -> vector<2x8x8xf32>
    "tpu.trace_stop"() : () -> ()
    %cst_9 = arith.constant dense<0xFF800000> : vector<2x8xf32>
    %21 = vector.multi_reduction <maximumf>, %20, %cst_9 [2] : vector<2x8x8xf32> to vector<2x8xf32>
    %22 = vector.shape_cast %21 : vector<2x8xf32> to vector<2x8x1xf32>
    %23 = vector.broadcast %22 : vector<2x8x1xf32> to vector<2x8x8xf32>
    %24 = arith.subf %20, %23 : vector<2x8x8xf32>
    %25 = math.exp %24 : vector<2x8x8xf32>
    %cst_10 = arith.constant dense<0.000000e+00> : vector<2x8xf32>
    %26 = vector.multi_reduction <add>, %25, %cst_10 [2] : vector<2x8x8xf32> to vector<2x8xf32>
    %27 = vector.shape_cast %26 : vector<2x8xf32> to vector<2x8x1xf32>
    %28 = tpu.reciprocal %27 {approx = true} : vector<2x8x1xf32> -> vector<2x8x1xf32>
    %29 = vector.broadcast %28 : vector<2x8x1xf32> to vector<2x8x8xf32>
    %30 = arith.mulf %25, %29 : vector<2x8x8xf32>
    "tpu.trace_start"() <{level = 10 : i32, message = "bqk,bkd->bqd"}> : () -> ()
    %cst_11 = arith.constant dense<0.000000e+00> : vector<2x8x32xf32>
    %31 = tpu.matmul %30, %19, %cst_11 {dimension_numbers = #tpu.dot_dimension_numbers<[2], [1], [1], [2], [0, 0, 0, 1, 1, 2], [0], [0]>} : vector<2x8x8xf32>, vector<2x8x32xf32>, vector<2x8x32xf32> -> vector<2x8x32xf32>
    "tpu.trace_stop"() : () -> ()
    %32 = vector.shape_cast %31 : vector<2x8x32xf32> to vector<16x32xf32>
    %33 = arith.truncf %32 : vector<16x32xf32> to vector<16x32xbf16>
    %c0_12 = arith.constant 0 : index
    %c0_13 = arith.constant 0 : index
    %34 = vector.load %arg4[%c0_12, %c0_13] : memref<128x128xbf16, #tpu.memory_space<vmem>>, vector<32x128xbf16>
    %cst_14 = arith.constant dense<0.000000e+00> : vector<16x128xf32>
    %35 = tpu.matmul %33, %34, %cst_14 {dimension_numbers = #tpu.dot_dimension_numbers<[1], [0], [0], [1], [0, 0, 1, 1], [], []>} : vector<16x32xbf16>, vector<32x128xbf16>, vector<16x128xf32> -> vector<16x128xf32>
    %36 = arith.addf %16, %35 : vector<16x128xf32>
    %37 = vector.extract_strided_slice %11 {offsets = [0, 0, 32], sizes = [2, 8, 32], strides = [1, 1, 1]} : vector<2x8x128xf32> to vector<2x8x32xf32>
    %38 = vector.extract_strided_slice %13 {offsets = [0, 0, 32], sizes = [2, 8, 32], strides = [1, 1, 1]} : vector<2x8x128xf32> to vector<2x8x32xf32>
    %39 = vector.extract_strided_slice %15 {offsets = [0, 0, 32], sizes = [2, 8, 32], strides = [1, 1, 1]} : vector<2x8x128xf32> to vector<2x8x32xf32>
    "tpu.trace_start"() <{level = 10 : i32, message = "bqd,bkd->bqk"}> : () -> ()
    %cst_15 = arith.constant dense<0.000000e+00> : vector<2x8x8xf32>
    %40 = tpu.matmul %37, %38, %cst_15 {dimension_numbers = #tpu.dot_dimension_numbers<[2], [2], [1], [1], [0, 0, 0, 1, 1, 1], [0], [0]>} : vector<2x8x32xf32>, vector<2x8x32xf32>, vector<2x8x8xf32> -> vector<2x8x8xf32>
    "tpu.trace_stop"() : () -> ()
    %cst_16 = arith.constant dense<0xFF800000> : vector<2x8xf32>
    %41 = vector.multi_reduction <maximumf>, %40, %cst_16 [2] : vector<2x8x8xf32> to vector<2x8xf32>
    %42 = vector.shape_cast %41 : vector<2x8xf32> to vector<2x8x1xf32>
    %43 = vector.broadcast %42 : vector<2x8x1xf32> to vector<2x8x8xf32>
    %44 = arith.subf %40, %43 : vector<2x8x8xf32>
    %45 = math.exp %44 : vector<2x8x8xf32>
    %cst_17 = arith.constant dense<0.000000e+00> : vector<2x8xf32>
    %46 = vector.multi_reduction <add>, %45, %cst_17 [2] : vector<2x8x8xf32> to vector<2x8xf32>
    %47 = vector.shape_cast %46 : vector<2x8xf32> to vector<2x8x1xf32>
    %48 = tpu.reciprocal %47 {approx = true} : vector<2x8x1xf32> -> vector<2x8x1xf32>
    %49 = vector.broadcast %48 : vector<2x8x1xf32> to vector<2x8x8xf32>
    %50 = arith.mulf %45, %49 : vector<2x8x8xf32>
    "tpu.trace_start"() <{level = 10 : i32, message = "bqk,bkd->bqd"}> : () -> ()
    %cst_18 = arith.constant dense<0.000000e+00> : vector<2x8x32xf32>
    %51 = tpu.matmul %50, %39, %cst_18 {dimension_numbers = #tpu.dot_dimension_numbers<[2], [1], [1], [2], [0, 0, 0, 1, 1, 2], [0], [0]>} : vector<2x8x8xf32>, vector<2x8x32xf32>, vector<2x8x32xf32> -> vector<2x8x32xf32>
    "tpu.trace_stop"() : () -> ()
    %52 = vector.shape_cast %51 : vector<2x8x32xf32> to vector<16x32xf32>
    %53 = arith.truncf %52 : vector<16x32xf32> to vector<16x32xbf16>
    %c32 = arith.constant 32 : index
    %c0_19 = arith.constant 0 : index
    %54 = vector.load %arg4[%c32, %c0_19] : memref<128x128xbf16, #tpu.memory_space<vmem>>, vector<32x128xbf16>
    %cst_20 = arith.constant dense<0.000000e+00> : vector<16x128xf32>
    %55 = tpu.matmul %53, %54, %cst_20 {dimension_numbers = #tpu.dot_dimension_numbers<[1], [0], [0], [1], [0, 0, 1, 1], [], []>} : vector<16x32xbf16>, vector<32x128xbf16>, vector<16x128xf32> -> vector<16x128xf32>
    %56 = arith.addf %36, %55 : vector<16x128xf32>
    %57 = vector.extract_strided_slice %11 {offsets = [0, 0, 64], sizes = [2, 8, 32], strides = [1, 1, 1]} : vector<2x8x128xf32> to vector<2x8x32xf32>
    %58 = vector.extract_strided_slice %13 {offsets = [0, 0, 64], sizes = [2, 8, 32], strides = [1, 1, 1]} : vector<2x8x128xf32> to vector<2x8x32xf32>
    %59 = vector.extract_strided_slice %15 {offsets = [0, 0, 64], sizes = [2, 8, 32], strides = [1, 1, 1]} : vector<2x8x128xf32> to vector<2x8x32xf32>
    "tpu.trace_start"() <{level = 10 : i32, message = "bqd,bkd->bqk"}> : () -> ()
    %cst_21 = arith.constant dense<0.000000e+00> : vector<2x8x8xf32>
    %60 = tpu.matmul %57, %58, %cst_21 {dimension_numbers = #tpu.dot_dimension_numbers<[2], [2], [1], [1], [0, 0, 0, 1, 1, 1], [0], [0]>} : vector<2x8x32xf32>, vector<2x8x32xf32>, vector<2x8x8xf32> -> vector<2x8x8xf32>
    "tpu.trace_stop"() : () -> ()
    %cst_22 = arith.constant dense<0xFF800000> : vector<2x8xf32>
    %61 = vector.multi_reduction <maximumf>, %60, %cst_22 [2] : vector<2x8x8xf32> to vector<2x8xf32>
    %62 = vector.shape_cast %61 : vector<2x8xf32> to vector<2x8x1xf32>
    %63 = vector.broadcast %62 : vector<2x8x1xf32> to vector<2x8x8xf32>
    %64 = arith.subf %60, %63 : vector<2x8x8xf32>
    %65 = math.exp %64 : vector<2x8x8xf32>
    %cst_23 = arith.constant dense<0.000000e+00> : vector<2x8xf32>
    %66 = vector.multi_reduction <add>, %65, %cst_23 [2] : vector<2x8x8xf32> to vector<2x8xf32>
    %67 = vector.shape_cast %66 : vector<2x8xf32> to vector<2x8x1xf32>
    %68 = tpu.reciprocal %67 {approx = true} : vector<2x8x1xf32> -> vector<2x8x1xf32>
    %69 = vector.broadcast %68 : vector<2x8x1xf32> to vector<2x8x8xf32>
    %70 = arith.mulf %65, %69 : vector<2x8x8xf32>
    "tpu.trace_start"() <{level = 10 : i32, message = "bqk,bkd->bqd"}> : () -> ()
    %cst_24 = arith.constant dense<0.000000e+00> : vector<2x8x32xf32>
    %71 = tpu.matmul %70, %59, %cst_24 {dimension_numbers = #tpu.dot_dimension_numbers<[2], [1], [1], [2], [0, 0, 0, 1, 1, 2], [0], [0]>} : vector<2x8x8xf32>, vector<2x8x32xf32>, vector<2x8x32xf32> -> vector<2x8x32xf32>
    "tpu.trace_stop"() : () -> ()
    %72 = vector.shape_cast %71 : vector<2x8x32xf32> to vector<16x32xf32>
    %73 = arith.truncf %72 : vector<16x32xf32> to vector<16x32xbf16>
    %c64 = arith.constant 64 : index
    %c0_25 = arith.constant 0 : index
    %74 = vector.load %arg4[%c64, %c0_25] : memref<128x128xbf16, #tpu.memory_space<vmem>>, vector<32x128xbf16>
    %cst_26 = arith.constant dense<0.000000e+00> : vector<16x128xf32>
    %75 = tpu.matmul %73, %74, %cst_26 {dimension_numbers = #tpu.dot_dimension_numbers<[1], [0], [0], [1], [0, 0, 1, 1], [], []>} : vector<16x32xbf16>, vector<32x128xbf16>, vector<16x128xf32> -> vector<16x128xf32>
    %76 = arith.addf %56, %75 : vector<16x128xf32>
    %77 = vector.extract_strided_slice %11 {offsets = [0, 0, 96], sizes = [2, 8, 32], strides = [1, 1, 1]} : vector<2x8x128xf32> to vector<2x8x32xf32>
    %78 = vector.extract_strided_slice %13 {offsets = [0, 0, 96], sizes = [2, 8, 32], strides = [1, 1, 1]} : vector<2x8x128xf32> to vector<2x8x32xf32>
    %79 = vector.extract_strided_slice %15 {offsets = [0, 0, 96], sizes = [2, 8, 32], strides = [1, 1, 1]} : vector<2x8x128xf32> to vector<2x8x32xf32>
    "tpu.trace_start"() <{level = 10 : i32, message = "bqd,bkd->bqk"}> : () -> ()
    %cst_27 = arith.constant dense<0.000000e+00> : vector<2x8x8xf32>
    %80 = tpu.matmul %77, %78, %cst_27 {dimension_numbers = #tpu.dot_dimension_numbers<[2], [2], [1], [1], [0, 0, 0, 1, 1, 1], [0], [0]>} : vector<2x8x32xf32>, vector<2x8x32xf32>, vector<2x8x8xf32> -> vector<2x8x8xf32>
    "tpu.trace_stop"() : () -> ()
    %cst_28 = arith.constant dense<0xFF800000> : vector<2x8xf32>
    %81 = vector.multi_reduction <maximumf>, %80, %cst_28 [2] : vector<2x8x8xf32> to vector<2x8xf32>
    %82 = vector.shape_cast %81 : vector<2x8xf32> to vector<2x8x1xf32>
    %83 = vector.broadcast %82 : vector<2x8x1xf32> to vector<2x8x8xf32>
    %84 = arith.subf %80, %83 : vector<2x8x8xf32>
    %85 = math.exp %84 : vector<2x8x8xf32>
    %cst_29 = arith.constant dense<0.000000e+00> : vector<2x8xf32>
    %86 = vector.multi_reduction <add>, %85, %cst_29 [2] : vector<2x8x8xf32> to vector<2x8xf32>
    %87 = vector.shape_cast %86 : vector<2x8xf32> to vector<2x8x1xf32>
    %88 = tpu.reciprocal %87 {approx = true} : vector<2x8x1xf32> -> vector<2x8x1xf32>
    %89 = vector.broadcast %88 : vector<2x8x1xf32> to vector<2x8x8xf32>
    %90 = arith.mulf %85, %89 : vector<2x8x8xf32>
    "tpu.trace_start"() <{level = 10 : i32, message = "bqk,bkd->bqd"}> : () -> ()
    %cst_30 = arith.constant dense<0.000000e+00> : vector<2x8x32xf32>
    %91 = tpu.matmul %90, %79, %cst_30 {dimension_numbers = #tpu.dot_dimension_numbers<[2], [1], [1], [2], [0, 0, 0, 1, 1, 2], [0], [0]>} : vector<2x8x8xf32>, vector<2x8x32xf32>, vector<2x8x32xf32> -> vector<2x8x32xf32>
    "tpu.trace_stop"() : () -> ()
    %92 = vector.shape_cast %91 : vector<2x8x32xf32> to vector<16x32xf32>
    %93 = arith.truncf %92 : vector<16x32xf32> to vector<16x32xbf16>
    %c96 = arith.constant 96 : index
    %c0_31 = arith.constant 0 : index
    %94 = vector.load %arg4[%c96, %c0_31] : memref<128x128xbf16, #tpu.memory_space<vmem>>, vector<32x128xbf16>
    %cst_32 = arith.constant dense<0.000000e+00> : vector<16x128xf32>
    %95 = tpu.matmul %93, %94, %cst_32 {dimension_numbers = #tpu.dot_dimension_numbers<[1], [0], [0], [1], [0, 0, 1, 1], [], []>} : vector<16x32xbf16>, vector<32x128xbf16>, vector<16x128xf32> -> vector<16x128xf32>
    %96 = arith.addf %76, %95 : vector<16x128xf32>
    %c0_33 = arith.constant 0 : index
    %c0_34 = arith.constant 0 : index
    %97 = vector.load %arg5[%c0_33, %c0_34] : memref<1x128xf32, #tpu.memory_space<vmem>>, vector<1x128xf32>
    %98 = vector.broadcast %97 : vector<1x128xf32> to vector<16x128xf32>
    %99 = arith.addf %96, %98 : vector<16x128xf32>
    %c0_35 = arith.constant 0 : index
    %c0_36 = arith.constant 0 : index
    %100 = vector.load %arg6[%c0_35, %c0_36] : memref<1x128xf32, #tpu.memory_space<vmem>>, vector<1x128xf32>
    %101 = vector.shape_cast %99 : vector<16x128xf32> to vector<2x8x128xf32>
    %102 = vector.shape_cast %100 : vector<1x128xf32> to vector<1x1x128xf32>
    %103 = vector.broadcast %102 : vector<1x1x128xf32> to vector<2x8x128xf32>
    %104 = arith.mulf %103, %101 : vector<2x8x128xf32>
    %105 = arith.addf %0, %104 : vector<2x8x128xf32>
    %c0_37 = arith.constant 0 : index
    %c0_38 = arith.constant 0 : index
    %c0_39 = arith.constant 0 : index
    %106 = vector.load %arg7[%c0_37, %c0_38, %c0_39] : memref<2x8x128xf32, #tpu.memory_space<vmem>>, vector<2x8x128xf32>
    tpu.vector_store %arg7[%c0_37, %c0_38, %c0_39], %105 {strides = array<i32>} : memref<2x8x128xf32, #tpu.memory_space<vmem>>, vector<2x8x128xf32>,
    return
  }
  func.func @transform_0(%arg0: i32) -> (i32, i32, i32) {
    %c0_i32 = arith.constant 0 : i32
    %c0_i32_0 = arith.constant 0 : i32
    %c0_i32_1 = arith.constant 0 : i32
    return %arg0, %c0_i32, %c0_i32_0 : i32, i32, i32
  }
  func.func @transform_1(%arg0: i32) -> (i32, i32) {
    %c0_i32 = arith.constant 0 : i32
    %c0_i32_0 = arith.constant 0 : i32
    %c0_i32_1 = arith.constant 0 : i32
    return %c0_i32, %c0_i32_0 : i32, i32
  }
  func.func @transform_2(%arg0: i32) -> (i32, i32) {
    %c0_i32 = arith.constant 0 : i32
    %c0_i32_0 = arith.constant 0 : i32
    %c0_i32_1 = arith.constant 0 : i32
    return %c0_i32, %c0_i32_0 : i32, i32
  }
  func.func @transform_3(%arg0: i32) -> (i32, i32) {
    %c0_i32 = arith.constant 0 : i32
    %c0_i32_0 = arith.constant 0 : i32
    %c0_i32_1 = arith.constant 0 : i32
    return %c0_i32, %c0_i32_0 : i32, i32
  }
  func.func @transform_4(%arg0: i32) -> (i32, i32) {
    %c0_i32 = arith.constant 0 : i32
    %c0_i32_0 = arith.constant 0 : i32
    %c0_i32_1 = arith.constant 0 : i32
    return %c0_i32, %c0_i32_0 : i32, i32
  }
  func.func @transform_5(%arg0: i32) -> (i32, i32) {
    %c0_i32 = arith.constant 0 : i32
    %c0_i32_0 = arith.constant 0 : i32
    %c0_i32_1 = arith.constant 0 : i32
    return %c0_i32, %c0_i32_0 : i32, i32
  }
  func.func @transform_6(%arg0: i32) -> (i32, i32, i32) {
    %c0_i32 = arith.constant 0 : i32
    %c0_i32_0 = arith.constant 0 : i32
    %c0_i32_1 = arith.constant 0 : i32
    return %arg0, %c0_i32, %c0_i32_0 : i32, i32, i32
  }
}

module attributes {stable_mosaic.version = 11 : i64} {
  func.func @_double_ffn_kernel(%arg0: i32, %arg1: memref<2x8x128xf32, #tpu.memory_space<vmem>>, %arg2: memref<128x512xbf16, #tpu.memory_space<vmem>>, %arg3: memref<1x512xf32, #tpu.memory_space<vmem>>, %arg4: memref<512x128xbf16, #tpu.memory_space<vmem>>, %arg5: memref<1x128xf32, #tpu.memory_space<vmem>>, %arg6: memref<1x128xf32, #tpu.memory_space<vmem>>, %arg7: memref<2x8x128xf32, #tpu.memory_space<vmem>>) attributes {dimension_semantics = [#tpu.dimension_semantics<parallel>], iteration_bounds = array<i64: 1>, scalar_prefetch = 0 : i64, scratch_operands = 0 : i64, tpu.core_type = #tpu.core_type<tc>, window_params = [{transform_indices = @transform_0, window_bounds = array<i64: 2, 8, 128>}, {pipeline_mode = #tpu.pipeline_mode<synchronous>, transform_indices = @transform_1, window_bounds = array<i64: 128, 512>}, {pipeline_mode = #tpu.pipeline_mode<synchronous>, transform_indices = @transform_2, window_bounds = array<i64: 1, 512>}, {pipeline_mode = #tpu.pipeline_mode<synchronous>, transform_indices = @transform_3, window_bounds = array<i64: 512, 128>}, {pipeline_mode = #tpu.pipeline_mode<synchronous>, transform_indices = @transform_4, window_bounds = array<i64: 1, 128>}, {pipeline_mode = #tpu.pipeline_mode<synchronous>, transform_indices = @transform_5, window_bounds = array<i64: 1, 128>}, {transform_indices = @transform_6, window_bounds = array<i64: 2, 8, 128>}]} {
    %c0 = arith.constant 0 : index
    %c0_0 = arith.constant 0 : index
    %c0_1 = arith.constant 0 : index
    %0 = vector.load %arg1[%c0, %c0_0, %c0_1] : memref<2x8x128xf32, #tpu.memory_space<vmem>>, vector<2x8x128xf32>
    %1 = vector.shape_cast %0 : vector<2x8x128xf32> to vector<16x128xf32>
    %2 = arith.truncf %1 : vector<16x128xf32> to vector<16x128xbf16>
    %c0_2 = arith.constant 0 : index
    %c0_3 = arith.constant 0 : index
    %3 = vector.load %arg2[%c0_2, %c0_3] : memref<128x512xbf16, #tpu.memory_space<vmem>>, vector<128x512xbf16>
    %cst = arith.constant dense<0.000000e+00> : vector<16x512xf32>
    %4 = tpu.matmul %2, %3, %cst {dimension_numbers = #tpu.dot_dimension_numbers<[1], [0], [0], [1], [0, 0, 1, 1], [], []>} : vector<16x128xbf16>, vector<128x512xbf16>, vector<16x512xf32> -> vector<16x512xf32>
    %c0_4 = arith.constant 0 : index
    %c0_5 = arith.constant 0 : index
    %5 = vector.load %arg3[%c0_4, %c0_5] : memref<1x512xf32, #tpu.memory_space<vmem>>, vector<1x512xf32>
    %6 = vector.broadcast %5 : vector<1x512xf32> to vector<16x512xf32>
    %7 = arith.addf %4, %6 : vector<16x512xf32>
    %8 = arith.negf %7 : vector<16x512xf32>
    %9 = math.exp %8 : vector<16x512xf32>
    %cst_6 = arith.constant 1.000000e+00 : f32
    %10 = vector.broadcast %cst_6 : f32 to vector<16x512xf32>
    %11 = arith.addf %10, %9 : vector<16x512xf32>
    %12 = arith.divf %10, %11 : vector<16x512xf32>
    %13 = arith.mulf %7, %12 : vector<16x512xf32>
    %14 = arith.truncf %13 : vector<16x512xf32> to vector<16x512xbf16>
    %c0_7 = arith.constant 0 : index
    %c0_8 = arith.constant 0 : index
    %15 = vector.load %arg4[%c0_7, %c0_8] : memref<512x128xbf16, #tpu.memory_space<vmem>>, vector<512x128xbf16>
    %cst_9 = arith.constant dense<0.000000e+00> : vector<16x128xf32>
    %16 = tpu.matmul %14, %15, %cst_9 {dimension_numbers = #tpu.dot_dimension_numbers<[1], [0], [0], [1], [0, 0, 1, 1], [], []>} : vector<16x512xbf16>, vector<512x128xbf16>, vector<16x128xf32> -> vector<16x128xf32>
    %c0_10 = arith.constant 0 : index
    %c0_11 = arith.constant 0 : index
    %17 = vector.load %arg5[%c0_10, %c0_11] : memref<1x128xf32, #tpu.memory_space<vmem>>, vector<1x128xf32>
    %18 = vector.broadcast %17 : vector<1x128xf32> to vector<16x128xf32>
    %19 = arith.addf %16, %18 : vector<16x128xf32>
    %20 = arith.truncf %19 : vector<16x128xf32> to vector<16x128xbf16>
    %c0_12 = arith.constant 0 : index
    %c0_13 = arith.constant 0 : index
    %21 = vector.load %arg2[%c0_12, %c0_13] : memref<128x512xbf16, #tpu.memory_space<vmem>>, vector<128x512xbf16>
    %cst_14 = arith.constant dense<0.000000e+00> : vector<16x512xf32>
    %22 = tpu.matmul %20, %21, %cst_14 {dimension_numbers = #tpu.dot_dimension_numbers<[1], [0], [0], [1], [0, 0, 1, 1], [], []>} : vector<16x128xbf16>, vector<128x512xbf16>, vector<16x512xf32> -> vector<16x512xf32>
    %c0_15 = arith.constant 0 : index
    %c0_16 = arith.constant 0 : index
    %23 = vector.load %arg3[%c0_15, %c0_16] : memref<1x512xf32, #tpu.memory_space<vmem>>, vector<1x512xf32>
    %24 = vector.broadcast %23 : vector<1x512xf32> to vector<16x512xf32>
    %25 = arith.addf %22, %24 : vector<16x512xf32>
    %26 = arith.negf %25 : vector<16x512xf32>
    %27 = math.exp %26 : vector<16x512xf32>
    %cst_17 = arith.constant 1.000000e+00 : f32
    %28 = vector.broadcast %cst_17 : f32 to vector<16x512xf32>
    %29 = arith.addf %28, %27 : vector<16x512xf32>
    %30 = arith.divf %28, %29 : vector<16x512xf32>
    %31 = arith.mulf %25, %30 : vector<16x512xf32>
    %32 = arith.truncf %31 : vector<16x512xf32> to vector<16x512xbf16>
    %c0_18 = arith.constant 0 : index
    %c0_19 = arith.constant 0 : index
    %33 = vector.load %arg4[%c0_18, %c0_19] : memref<512x128xbf16, #tpu.memory_space<vmem>>, vector<512x128xbf16>
    %cst_20 = arith.constant dense<0.000000e+00> : vector<16x128xf32>
    %34 = tpu.matmul %32, %33, %cst_20 {dimension_numbers = #tpu.dot_dimension_numbers<[1], [0], [0], [1], [0, 0, 1, 1], [], []>} : vector<16x512xbf16>, vector<512x128xbf16>, vector<16x128xf32> -> vector<16x128xf32>
    %c0_21 = arith.constant 0 : index
    %c0_22 = arith.constant 0 : index
    %35 = vector.load %arg5[%c0_21, %c0_22] : memref<1x128xf32, #tpu.memory_space<vmem>>, vector<1x128xf32>
    %36 = vector.broadcast %35 : vector<1x128xf32> to vector<16x128xf32>
    %37 = arith.addf %34, %36 : vector<16x128xf32>
    %c0_23 = arith.constant 0 : index
    %c0_24 = arith.constant 0 : index
    %38 = vector.load %arg6[%c0_23, %c0_24] : memref<1x128xf32, #tpu.memory_space<vmem>>, vector<1x128xf32>
    %39 = vector.shape_cast %37 : vector<16x128xf32> to vector<2x8x128xf32>
    %40 = vector.shape_cast %38 : vector<1x128xf32> to vector<1x1x128xf32>
    %41 = vector.broadcast %40 : vector<1x1x128xf32> to vector<2x8x128xf32>
    %42 = arith.mulf %41, %39 : vector<2x8x128xf32>
    %43 = arith.addf %0, %42 : vector<2x8x128xf32>
    %c0_25 = arith.constant 0 : index
    %c0_26 = arith.constant 0 : index
    %c0_27 = arith.constant 0 : index
    %44 = vector.load %arg7[%c0_25, %c0_26, %c0_27] : memref<2x8x128xf32, #tpu.memory_space<vmem>>, vector<2x8x128xf32>
    tpu.vector_store %arg7[%c0_25, %c0_26, %c0_27], %43 {strides = array<i32>} : memref<2x8x128xf32, #tpu.memory_space<vmem>>, vector<2x8x128xf32>,
    return
  }
  func.func @transform_0(%arg0: i32) -> (i32, i32, i32) {
    %c0_i32 = arith.constant 0 : i32
    %c0_i32_0 = arith.constant 0 : i32
    %c0_i32_1 = arith.constant 0 : i32
    return %arg0, %c0_i32, %c0_i32_0 : i32, i32, i32
  }
  func.func @transform_1(%arg0: i32) -> (i32, i32) {
    %c0_i32 = arith.constant 0 : i32
    %c0_i32_0 = arith.constant 0 : i32
    %c0_i32_1 = arith.constant 0 : i32
    return %c0_i32, %c0_i32_0 : i32, i32
  }
  func.func @transform_2(%arg0: i32) -> (i32, i32) {
    %c0_i32 = arith.constant 0 : i32
    %c0_i32_0 = arith.constant 0 : i32
    %c0_i32_1 = arith.constant 0 : i32
    return %c0_i32, %c0_i32_0 : i32, i32
  }
  func.func @transform_3(%arg0: i32) -> (i32, i32) {
    %c0_i32 = arith.constant 0 : i32
    %c0_i32_0 = arith.constant 0 : i32
    %c0_i32_1 = arith.constant 0 : i32
    return %c0_i32, %c0_i32_0 : i32, i32
  }
  func.func @transform_4(%arg0: i32) -> (i32, i32) {
    %c0_i32 = arith.constant 0 : i32
    %c0_i32_0 = arith.constant 0 : i32
    %c0_i32_1 = arith.constant 0 : i32
    return %c0_i32, %c0_i32_0 : i32, i32
  }
  func.func @transform_5(%arg0: i32) -> (i32, i32) {
    %c0_i32 = arith.constant 0 : i32
    %c0_i32_0 = arith.constant 0 : i32
    %c0_i32_1 = arith.constant 0 : i32
    return %c0_i32, %c0_i32_0 : i32, i32
  }
  func.func @transform_6(%arg0: i32) -> (i32, i32, i32) {
    %c0_i32 = arith.constant 0 : i32
    %c0_i32_0 = arith.constant 0 : i32
    %c0_i32_1 = arith.constant 0 : i32
    return %arg0, %c0_i32, %c0_i32_0 : i32, i32, i32
  }
}

module attributes {stable_mosaic.version = 11 : i64} {
  func.func @_conv_module_kernel(%arg0: i32, %arg1: memref<2x8x128xf32, #tpu.memory_space<vmem>>, %arg2: memref<1x128xf32, #tpu.memory_space<vmem>>, %arg3: memref<1x128xf32, #tpu.memory_space<vmem>>, %arg4: memref<128x256xbf16, #tpu.memory_space<vmem>>, %arg5: memref<1x256xf32, #tpu.memory_space<vmem>>, %arg6: memref<3x128xf32, #tpu.memory_space<vmem>>, %arg7: memref<1x128xf32, #tpu.memory_space<vmem>>, %arg8: memref<1x128xf32, #tpu.memory_space<vmem>>, %arg9: memref<1x128xf32, #tpu.memory_space<vmem>>, %arg10: memref<128x128xbf16, #tpu.memory_space<vmem>>, %arg11: memref<1x128xf32, #tpu.memory_space<vmem>>, %arg12: memref<1x128xf32, #tpu.memory_space<vmem>>, %arg13: memref<2x8x128xf32, #tpu.memory_space<vmem>>) attributes {dimension_semantics = [#tpu.dimension_semantics<parallel>], iteration_bounds = array<i64: 1>, scalar_prefetch = 0 : i64, scratch_operands = 0 : i64, tpu.core_type = #tpu.core_type<tc>, window_params = [{transform_indices = @transform_0, window_bounds = array<i64: 2, 8, 128>}, {pipeline_mode = #tpu.pipeline_mode<synchronous>, transform_indices = @transform_1, window_bounds = array<i64: 1, 128>}, {pipeline_mode = #tpu.pipeline_mode<synchronous>, transform_indices = @transform_2, window_bounds = array<i64: 1, 128>}, {pipeline_mode = #tpu.pipeline_mode<synchronous>, transform_indices = @transform_3, window_bounds = array<i64: 128, 256>}, {pipeline_mode = #tpu.pipeline_mode<synchronous>, transform_indices = @transform_4, window_bounds = array<i64: 1, 256>}, {pipeline_mode = #tpu.pipeline_mode<synchronous>, transform_indices = @transform_5, window_bounds = array<i64: 3, 128>}, {pipeline_mode = #tpu.pipeline_mode<synchronous>, transform_indices = @transform_6, window_bounds = array<i64: 1, 128>}, {pipeline_mode = #tpu.pipeline_mode<synchronous>, transform_indices = @transform_7, window_bounds = array<i64: 1, 128>}, {pipeline_mode = #tpu.pipeline_mode<synchronous>, transform_indices = @transform_8, window_bounds = array<i64: 1, 128>}, {pipeline_mode = #tpu.pipeline_mode<synchronous>, transform_indices = @transform_9, window_bounds = array<i64: 128, 128>}, {pipeline_mode = #tpu.pipeline_mode<synchronous>, transform_indices = @transform_10, window_bounds = array<i64: 1, 128>}, {pipeline_mode = #tpu.pipeline_mode<synchronous>, transform_indices = @transform_11, window_bounds = array<i64: 1, 128>}, {transform_indices = @transform_12, window_bounds = array<i64: 2, 8, 128>}]} {
    %c0 = arith.constant 0 : index
    %c0_0 = arith.constant 0 : index
    %c0_1 = arith.constant 0 : index
    %0 = vector.load %arg1[%c0, %c0_0, %c0_1] : memref<2x8x128xf32, #tpu.memory_space<vmem>>, vector<2x8x128xf32>
    %c0_2 = arith.constant 0 : index
    %c0_3 = arith.constant 0 : index
    %1 = vector.load %arg2[%c0_2, %c0_3] : memref<1x128xf32, #tpu.memory_space<vmem>>, vector<1x128xf32>
    %2 = vector.shape_cast %1 : vector<1x128xf32> to vector<1x1x128xf32>
    %3 = vector.broadcast %2 : vector<1x1x128xf32> to vector<2x8x128xf32>
    %4 = arith.subf %0, %3 : vector<2x8x128xf32>
    %5 = arith.mulf %4, %4 : vector<2x8x128xf32>
    %cst = arith.constant dense<0.000000e+00> : vector<2x8xf32>
    %6 = vector.multi_reduction <add>, %5, %cst [2] : vector<2x8x128xf32> to vector<2x8xf32>
    %7 = vector.shape_cast %6 : vector<2x8xf32> to vector<2x8x1xf32>
    %cst_4 = arith.constant 1.280000e+02 : f32
    %8 = vector.broadcast %cst_4 : f32 to vector<2x8x1xf32>
    %9 = arith.divf %7, %8 : vector<2x8x1xf32>
    %cst_5 = arith.constant 9.99999974E-6 : f32
    %10 = vector.broadcast %cst_5 : f32 to vector<2x8x1xf32>
    %11 = arith.addf %9, %10 : vector<2x8x1xf32>
    %12 = math.sqrt %11 : vector<2x8x1xf32>
    %13 = tpu.reciprocal %12 : vector<2x8x1xf32> -> vector<2x8x1xf32>
    %14 = vector.broadcast %13 : vector<2x8x1xf32> to vector<2x8x128xf32>
    %15 = arith.mulf %0, %14 : vector<2x8x128xf32>
    %c0_6 = arith.constant 0 : index
    %c0_7 = arith.constant 0 : index
    %16 = vector.load %arg3[%c0_6, %c0_7] : memref<1x128xf32, #tpu.memory_space<vmem>>, vector<1x128xf32>
    %17 = vector.shape_cast %16 : vector<1x128xf32> to vector<1x1x128xf32>
    %18 = vector.broadcast %17 : vector<1x1x128xf32> to vector<2x8x128xf32>
    %19 = arith.mulf %15, %18 : vector<2x8x128xf32>
    %20 = vector.shape_cast %19 : vector<2x8x128xf32> to vector<16x128xf32>
    %21 = arith.truncf %20 : vector<16x128xf32> to vector<16x128xbf16>
    %c0_8 = arith.constant 0 : index
    %c0_9 = arith.constant 0 : index
    %22 = vector.load %arg4[%c0_8, %c0_9] : memref<128x256xbf16, #tpu.memory_space<vmem>>, vector<128x256xbf16>
    %cst_10 = arith.constant dense<0.000000e+00> : vector<16x256xf32>
    %23 = tpu.matmul %21, %22, %cst_10 {dimension_numbers = #tpu.dot_dimension_numbers<[1], [0], [0], [1], [0, 0, 1, 1], [], []>} : vector<16x128xbf16>, vector<128x256xbf16>, vector<16x256xf32> -> vector<16x256xf32>
    %c0_11 = arith.constant 0 : index
    %c0_12 = arith.constant 0 : index
    %24 = vector.load %arg5[%c0_11, %c0_12] : memref<1x256xf32, #tpu.memory_space<vmem>>, vector<1x256xf32>
    %25 = vector.broadcast %24 : vector<1x256xf32> to vector<16x256xf32>
    %26 = arith.addf %23, %25 : vector<16x256xf32>
    %27 = vector.extract_strided_slice %26 {offsets = [0, 0], sizes = [16, 128], strides = [1, 1]} : vector<16x256xf32> to vector<16x128xf32>
    %28 = vector.extract_strided_slice %26 {offsets = [0, 128], sizes = [16, 128], strides = [1, 1]} : vector<16x256xf32> to vector<16x128xf32>
    %29 = arith.negf %28 : vector<16x128xf32>
    %30 = math.exp %29 : vector<16x128xf32>
    %cst_13 = arith.constant 1.000000e+00 : f32
    %31 = vector.broadcast %cst_13 : f32 to vector<16x128xf32>
    %32 = arith.addf %31, %30 : vector<16x128xf32>
    %33 = arith.divf %31, %32 : vector<16x128xf32>
    %34 = arith.mulf %27, %33 : vector<16x128xf32>
    %35 = vector.shape_cast %34 : vector<16x128xf32> to vector<2x8x128xf32>
    %36 = tpu.iota {dimensions = array<i32: 1>} : vector<2x8x128xi32>
    %c1_i32 = arith.constant 1 : i32
    %37 = vector.broadcast %c1_i32 : i32 to vector<2x8x128xi32>
    %38 = arith.cmpi sge, %36, %37 : vector<2x8x128xi32>
    %c1_i32_14 = arith.constant 1 : i32
    %39 = tpu.dynamic_rotate %35 by %c1_i32_14 dim 1 : vector<2x8x128xf32>, i32 -> vector<2x8x128xf32>
    %cst_15 = arith.constant 0.000000e+00 : f32
    %40 = vector.broadcast %cst_15 : f32 to vector<2x8x128xf32>
    %41 = arith.select %38, %39, %40 : vector<2x8x128xi1>, vector<2x8x128xf32>
    %c6_i32 = arith.constant 6 : i32
    %42 = vector.broadcast %c6_i32 : i32 to vector<2x8x128xi32>
    %43 = arith.cmpi sle, %36, %42 : vector<2x8x128xi32>
    %c7_i32 = arith.constant 7 : i32
    %44 = tpu.dynamic_rotate %35 by %c7_i32 dim 1 : vector<2x8x128xf32>, i32 -> vector<2x8x128xf32>
    %cst_16 = arith.constant 0.000000e+00 : f32
    %45 = vector.broadcast %cst_16 : f32 to vector<2x8x128xf32>
    %46 = arith.select %43, %44, %45 : vector<2x8x128xi1>, vector<2x8x128xf32>
    %c0_17 = arith.constant 0 : index
    %c0_18 = arith.constant 0 : index
    %47 = vector.load %arg6[%c0_17, %c0_18] : memref<3x128xf32, #tpu.memory_space<vmem>>, vector<1x128xf32>
    %48 = vector.shape_cast %47 : vector<1x128xf32> to vector<1x1x128xf32>
    %49 = vector.broadcast %48 : vector<1x1x128xf32> to vector<2x8x128xf32>
    %50 = arith.mulf %41, %49 : vector<2x8x128xf32>
    %c1 = arith.constant 1 : index
    %c0_19 = arith.constant 0 : index
    %51 = vector.load %arg6[%c1, %c0_19] : memref<3x128xf32, #tpu.memory_space<vmem>>, vector<1x128xf32>
    %52 = vector.shape_cast %51 : vector<1x128xf32> to vector<1x1x128xf32>
    %53 = vector.broadcast %52 : vector<1x1x128xf32> to vector<2x8x128xf32>
    %54 = arith.mulf %35, %53 : vector<2x8x128xf32>
    %55 = arith.addf %50, %54 : vector<2x8x128xf32>
    %c2 = arith.constant 2 : index
    %c0_20 = arith.constant 0 : index
    %56 = vector.load %arg6[%c2, %c0_20] : memref<3x128xf32, #tpu.memory_space<vmem>>, vector<1x128xf32>
    %57 = vector.shape_cast %56 : vector<1x128xf32> to vector<1x1x128xf32>
    %58 = vector.broadcast %57 : vector<1x1x128xf32> to vector<2x8x128xf32>
    %59 = arith.mulf %46, %58 : vector<2x8x128xf32>
    %60 = arith.addf %55, %59 : vector<2x8x128xf32>
    %c0_21 = arith.constant 0 : index
    %c0_22 = arith.constant 0 : index
    %61 = vector.load %arg7[%c0_21, %c0_22] : memref<1x128xf32, #tpu.memory_space<vmem>>, vector<1x128xf32>
    %62 = vector.shape_cast %61 : vector<1x128xf32> to vector<1x1x128xf32>
    %63 = vector.broadcast %62 : vector<1x1x128xf32> to vector<2x8x128xf32>
    %64 = arith.addf %60, %63 : vector<2x8x128xf32>
    %c0_23 = arith.constant 0 : index
    %c0_24 = arith.constant 0 : index
    %65 = vector.load %arg8[%c0_23, %c0_24] : memref<1x128xf32, #tpu.memory_space<vmem>>, vector<1x128xf32>
    %66 = vector.shape_cast %65 : vector<1x128xf32> to vector<1x1x128xf32>
    %67 = vector.broadcast %66 : vector<1x1x128xf32> to vector<2x8x128xf32>
    %68 = arith.mulf %64, %67 : vector<2x8x128xf32>
    %c0_25 = arith.constant 0 : index
    %c0_26 = arith.constant 0 : index
    %69 = vector.load %arg9[%c0_25, %c0_26] : memref<1x128xf32, #tpu.memory_space<vmem>>, vector<1x128xf32>
    %70 = vector.shape_cast %69 : vector<1x128xf32> to vector<1x1x128xf32>
    %71 = vector.broadcast %70 : vector<1x1x128xf32> to vector<2x8x128xf32>
    %72 = arith.addf %68, %71 : vector<2x8x128xf32>
    %73 = arith.negf %72 : vector<2x8x128xf32>
    %74 = math.exp %73 : vector<2x8x128xf32>
    %cst_27 = arith.constant 1.000000e+00 : f32
    %75 = vector.broadcast %cst_27 : f32 to vector<2x8x128xf32>
    %76 = arith.addf %75, %74 : vector<2x8x128xf32>
    %77 = arith.divf %75, %76 : vector<2x8x128xf32>
    %78 = arith.mulf %72, %77 : vector<2x8x128xf32>
    %79 = vector.shape_cast %78 : vector<2x8x128xf32> to vector<16x128xf32>
    %80 = arith.truncf %79 : vector<16x128xf32> to vector<16x128xbf16>
    %c0_28 = arith.constant 0 : index
    %c0_29 = arith.constant 0 : index
    %81 = vector.load %arg10[%c0_28, %c0_29] : memref<128x128xbf16, #tpu.memory_space<vmem>>, vector<128x128xbf16>
    %cst_30 = arith.constant dense<0.000000e+00> : vector<16x128xf32>
    %82 = tpu.matmul %80, %81, %cst_30 {dimension_numbers = #tpu.dot_dimension_numbers<[1], [0], [0], [1], [0, 0, 1, 1], [], []>} : vector<16x128xbf16>, vector<128x128xbf16>, vector<16x128xf32> -> vector<16x128xf32>
    %c0_31 = arith.constant 0 : index
    %c0_32 = arith.constant 0 : index
    %83 = vector.load %arg11[%c0_31, %c0_32] : memref<1x128xf32, #tpu.memory_space<vmem>>, vector<1x128xf32>
    %84 = vector.broadcast %83 : vector<1x128xf32> to vector<16x128xf32>
    %85 = arith.addf %82, %84 : vector<16x128xf32>
    %c0_33 = arith.constant 0 : index
    %c0_34 = arith.constant 0 : index
    %86 = vector.load %arg12[%c0_33, %c0_34] : memref<1x128xf32, #tpu.memory_space<vmem>>, vector<1x128xf32>
    %87 = vector.shape_cast %85 : vector<16x128xf32> to vector<2x8x128xf32>
    %88 = vector.shape_cast %86 : vector<1x128xf32> to vector<1x1x128xf32>
    %89 = vector.broadcast %88 : vector<1x1x128xf32> to vector<2x8x128xf32>
    %90 = arith.mulf %89, %87 : vector<2x8x128xf32>
    %91 = arith.addf %0, %90 : vector<2x8x128xf32>
    %c0_35 = arith.constant 0 : index
    %c0_36 = arith.constant 0 : index
    %c0_37 = arith.constant 0 : index
    %92 = vector.load %arg13[%c0_35, %c0_36, %c0_37] : memref<2x8x128xf32, #tpu.memory_space<vmem>>, vector<2x8x128xf32>
    tpu.vector_store %arg13[%c0_35, %c0_36, %c0_37], %91 {strides = array<i32>} : memref<2x8x128xf32, #tpu.memory_space<vmem>>, vector<2x8x128xf32>,
    return
  }
  func.func @transform_0(%arg0: i32) -> (i32, i32, i32) {
    %c0_i32 = arith.constant 0 : i32
    %c0_i32_0 = arith.constant 0 : i32
    %c0_i32_1 = arith.constant 0 : i32
    return %arg0, %c0_i32, %c0_i32_0 : i32, i32, i32
  }
  func.func @transform_1(%arg0: i32) -> (i32, i32) {
    %c0_i32 = arith.constant 0 : i32
    %c0_i32_0 = arith.constant 0 : i32
    %c0_i32_1 = arith.constant 0 : i32
    return %c0_i32, %c0_i32_0 : i32, i32
  }
  func.func @transform_2(%arg0: i32) -> (i32, i32) {
    %c0_i32 = arith.constant 0 : i32
    %c0_i32_0 = arith.constant 0 : i32
    %c0_i32_1 = arith.constant 0 : i32
    return %c0_i32, %c0_i32_0 : i32, i32
  }
  func.func @transform_3(%arg0: i32) -> (i32, i32) {
    %c0_i32 = arith.constant 0 : i32
    %c0_i32_0 = arith.constant 0 : i32
    %c0_i32_1 = arith.constant 0 : i32
    return %c0_i32, %c0_i32_0 : i32, i32
  }
  func.func @transform_4(%arg0: i32) -> (i32, i32) {
    %c0_i32 = arith.constant 0 : i32
    %c0_i32_0 = arith.constant 0 : i32
    %c0_i32_1 = arith.constant 0 : i32
    return %c0_i32, %c0_i32_0 : i32, i32
  }
  func.func @transform_5(%arg0: i32) -> (i32, i32) {
    %c0_i32 = arith.constant 0 : i32
    %c0_i32_0 = arith.constant 0 : i32
    %c0_i32_1 = arith.constant 0 : i32
    return %c0_i32, %c0_i32_0 : i32, i32
  }
  func.func @transform_6(%arg0: i32) -> (i32, i32) {
    %c0_i32 = arith.constant 0 : i32
    %c0_i32_0 = arith.constant 0 : i32
    %c0_i32_1 = arith.constant 0 : i32
    return %c0_i32, %c0_i32_0 : i32, i32
  }
  func.func @transform_7(%arg0: i32) -> (i32, i32) {
    %c0_i32 = arith.constant 0 : i32
    %c0_i32_0 = arith.constant 0 : i32
    %c0_i32_1 = arith.constant 0 : i32
    return %c0_i32, %c0_i32_0 : i32, i32
  }
  func.func @transform_8(%arg0: i32) -> (i32, i32) {
    %c0_i32 = arith.constant 0 : i32
    %c0_i32_0 = arith.constant 0 : i32
    %c0_i32_1 = arith.constant 0 : i32
    return %c0_i32, %c0_i32_0 : i32, i32
  }
  func.func @transform_9(%arg0: i32) -> (i32, i32) {
    %c0_i32 = arith.constant 0 : i32
    %c0_i32_0 = arith.constant 0 : i32
    %c0_i32_1 = arith.constant 0 : i32
    return %c0_i32, %c0_i32_0 : i32, i32
  }
  func.func @transform_10(%arg0: i32) -> (i32, i32) {
    %c0_i32 = arith.constant 0 : i32
    %c0_i32_0 = arith.constant 0 : i32
    %c0_i32_1 = arith.constant 0 : i32
    return %c0_i32, %c0_i32_0 : i32, i32
  }
  func.func @transform_11(%arg0: i32) -> (i32, i32) {
    %c0_i32 = arith.constant 0 : i32
    %c0_i32_0 = arith.constant 0 : i32
    %c0_i32_1 = arith.constant 0 : i32
    return %c0_i32, %c0_i32_0 : i32, i32
  }
  func.func @transform_12(%arg0: i32) -> (i32, i32, i32) {
    %c0_i32 = arith.constant 0 : i32
    %c0_i32_0 = arith.constant 0 : i32
    %c0_i32_1 = arith.constant 0 : i32
    return %arg0, %c0_i32, %c0_i32_0 : i32, i32, i32
  }
}

module attributes {stable_mosaic.version = 11 : i64} {
  func.func @_bypass_mid_kernel(%arg0: i32, %arg1: memref<2x8x128xf32, #tpu.memory_space<vmem>>, %arg2: memref<2x8x128xf32, #tpu.memory_space<vmem>>, %arg3: memref<1x128xf32, #tpu.memory_space<vmem>>, %arg4: memref<2x8x128xf32, #tpu.memory_space<vmem>>) attributes {dimension_semantics = [#tpu.dimension_semantics<parallel>], iteration_bounds = array<i64: 1>, scalar_prefetch = 0 : i64, scratch_operands = 0 : i64, tpu.core_type = #tpu.core_type<tc>, window_params = [{transform_indices = @transform_0, window_bounds = array<i64: 2, 8, 128>}, {transform_indices = @transform_1, window_bounds = array<i64: 2, 8, 128>}, {pipeline_mode = #tpu.pipeline_mode<synchronous>, transform_indices = @transform_2, window_bounds = array<i64: 1, 128>}, {transform_indices = @transform_3, window_bounds = array<i64: 2, 8, 128>}]} {
    %c0 = arith.constant 0 : index
    %c0_0 = arith.constant 0 : index
    %c0_1 = arith.constant 0 : index
    %0 = vector.load %arg1[%c0, %c0_0, %c0_1] : memref<2x8x128xf32, #tpu.memory_space<vmem>>, vector<2x8x128xf32>
    %c0_2 = arith.constant 0 : index
    %c0_3 = arith.constant 0 : index
    %c0_4 = arith.constant 0 : index
    %1 = vector.load %arg2[%c0_2, %c0_3, %c0_4] : memref<2x8x128xf32, #tpu.memory_space<vmem>>, vector<2x8x128xf32>
    %c0_5 = arith.constant 0 : index
    %c0_6 = arith.constant 0 : index
    %2 = vector.load %arg3[%c0_5, %c0_6] : memref<1x128xf32, #tpu.memory_space<vmem>>, vector<1x128xf32>
    %cst = arith.constant 1.000000e+00 : f32
    %3 = vector.broadcast %cst : f32 to vector<1x128xf32>
    %4 = arith.subf %3, %2 : vector<1x128xf32>
    %5 = vector.shape_cast %4 : vector<1x128xf32> to vector<1x1x128xf32>
    %6 = vector.broadcast %5 : vector<1x1x128xf32> to vector<2x8x128xf32>
    %7 = arith.mulf %6, %0 : vector<2x8x128xf32>
    %8 = vector.shape_cast %2 : vector<1x128xf32> to vector<1x1x128xf32>
    %9 = vector.broadcast %8 : vector<1x1x128xf32> to vector<2x8x128xf32>
    %10 = arith.mulf %9, %1 : vector<2x8x128xf32>
    %11 = arith.addf %7, %10 : vector<2x8x128xf32>
    %cst_7 = arith.constant 1.000000e+00 : f32
    %12 = vector.broadcast %cst_7 : f32 to vector<2x8x128xf32>
    %13 = arith.subf %12, %11 : vector<2x8x128xf32>
    %14 = arith.mulf %13, %0 : vector<2x8x128xf32>
    %15 = arith.mulf %11, %1 : vector<2x8x128xf32>
    %16 = arith.addf %14, %15 : vector<2x8x128xf32>
    %c0_8 = arith.constant 0 : index
    %c0_9 = arith.constant 0 : index
    %c0_10 = arith.constant 0 : index
    %17 = vector.load %arg4[%c0_8, %c0_9, %c0_10] : memref<2x8x128xf32, #tpu.memory_space<vmem>>, vector<2x8x128xf32>
    tpu.vector_store %arg4[%c0_8, %c0_9, %c0_10], %16 {strides = array<i32>} : memref<2x8x128xf32, #tpu.memory_space<vmem>>, vector<2x8x128xf32>,
    return
  }
  func.func @transform_0(%arg0: i32) -> (i32, i32, i32) {
    %c0_i32 = arith.constant 0 : i32
    %c0_i32_0 = arith.constant 0 : i32
    %c0_i32_1 = arith.constant 0 : i32
    return %arg0, %c0_i32, %c0_i32_0 : i32, i32, i32
  }
  func.func @transform_1(%arg0: i32) -> (i32, i32, i32) {
    %c0_i32 = arith.constant 0 : i32
    %c0_i32_0 = arith.constant 0 : i32
    %c0_i32_1 = arith.constant 0 : i32
    return %arg0, %c0_i32, %c0_i32_0 : i32, i32, i32
  }
  func.func @transform_2(%arg0: i32) -> (i32, i32) {
    %c0_i32 = arith.constant 0 : i32
    %c0_i32_0 = arith.constant 0 : i32
    %c0_i32_1 = arith.constant 0 : i32
    return %c0_i32, %c0_i32_0 : i32, i32
  }
  func.func @transform_3(%arg0: i32) -> (i32, i32, i32) {
    %c0_i32 = arith.constant 0 : i32
    %c0_i32_0 = arith.constant 0 : i32
    %c0_i32_1 = arith.constant 0 : i32
    return %arg0, %c0_i32, %c0_i32_0 : i32, i32, i32
  }
}

module attributes {stable_mosaic.version = 11 : i64} {
  func.func @_double_ffn_kernel(%arg0: i32, %arg1: memref<2x8x128xf32, #tpu.memory_space<vmem>>, %arg2: memref<128x512xbf16, #tpu.memory_space<vmem>>, %arg3: memref<1x512xf32, #tpu.memory_space<vmem>>, %arg4: memref<512x128xbf16, #tpu.memory_space<vmem>>, %arg5: memref<1x128xf32, #tpu.memory_space<vmem>>, %arg6: memref<1x128xf32, #tpu.memory_space<vmem>>, %arg7: memref<2x8x128xf32, #tpu.memory_space<vmem>>) attributes {dimension_semantics = [#tpu.dimension_semantics<parallel>], iteration_bounds = array<i64: 1>, scalar_prefetch = 0 : i64, scratch_operands = 0 : i64, tpu.core_type = #tpu.core_type<tc>, window_params = [{transform_indices = @transform_0, window_bounds = array<i64: 2, 8, 128>}, {pipeline_mode = #tpu.pipeline_mode<synchronous>, transform_indices = @transform_1, window_bounds = array<i64: 128, 512>}, {pipeline_mode = #tpu.pipeline_mode<synchronous>, transform_indices = @transform_2, window_bounds = array<i64: 1, 512>}, {pipeline_mode = #tpu.pipeline_mode<synchronous>, transform_indices = @transform_3, window_bounds = array<i64: 512, 128>}, {pipeline_mode = #tpu.pipeline_mode<synchronous>, transform_indices = @transform_4, window_bounds = array<i64: 1, 128>}, {pipeline_mode = #tpu.pipeline_mode<synchronous>, transform_indices = @transform_5, window_bounds = array<i64: 1, 128>}, {transform_indices = @transform_6, window_bounds = array<i64: 2, 8, 128>}]} {
    %c0 = arith.constant 0 : index
    %c0_0 = arith.constant 0 : index
    %c0_1 = arith.constant 0 : index
    %0 = vector.load %arg1[%c0, %c0_0, %c0_1] : memref<2x8x128xf32, #tpu.memory_space<vmem>>, vector<2x8x128xf32>
    %1 = vector.shape_cast %0 : vector<2x8x128xf32> to vector<16x128xf32>
    %2 = arith.truncf %1 : vector<16x128xf32> to vector<16x128xbf16>
    %c0_2 = arith.constant 0 : index
    %c0_3 = arith.constant 0 : index
    %3 = vector.load %arg2[%c0_2, %c0_3] : memref<128x512xbf16, #tpu.memory_space<vmem>>, vector<128x512xbf16>
    %cst = arith.constant dense<0.000000e+00> : vector<16x512xf32>
    %4 = tpu.matmul %2, %3, %cst {dimension_numbers = #tpu.dot_dimension_numbers<[1], [0], [0], [1], [0, 0, 1, 1], [], []>} : vector<16x128xbf16>, vector<128x512xbf16>, vector<16x512xf32> -> vector<16x512xf32>
    %c0_4 = arith.constant 0 : index
    %c0_5 = arith.constant 0 : index
    %5 = vector.load %arg3[%c0_4, %c0_5] : memref<1x512xf32, #tpu.memory_space<vmem>>, vector<1x512xf32>
    %6 = vector.broadcast %5 : vector<1x512xf32> to vector<16x512xf32>
    %7 = arith.addf %4, %6 : vector<16x512xf32>
    %8 = arith.negf %7 : vector<16x512xf32>
    %9 = math.exp %8 : vector<16x512xf32>
    %cst_6 = arith.constant 1.000000e+00 : f32
    %10 = vector.broadcast %cst_6 : f32 to vector<16x512xf32>
    %11 = arith.addf %10, %9 : vector<16x512xf32>
    %12 = arith.divf %10, %11 : vector<16x512xf32>
    %13 = arith.mulf %7, %12 : vector<16x512xf32>
    %14 = arith.truncf %13 : vector<16x512xf32> to vector<16x512xbf16>
    %c0_7 = arith.constant 0 : index
    %c0_8 = arith.constant 0 : index
    %15 = vector.load %arg4[%c0_7, %c0_8] : memref<512x128xbf16, #tpu.memory_space<vmem>>, vector<512x128xbf16>
    %cst_9 = arith.constant dense<0.000000e+00> : vector<16x128xf32>
    %16 = tpu.matmul %14, %15, %cst_9 {dimension_numbers = #tpu.dot_dimension_numbers<[1], [0], [0], [1], [0, 0, 1, 1], [], []>} : vector<16x512xbf16>, vector<512x128xbf16>, vector<16x128xf32> -> vector<16x128xf32>
    %c0_10 = arith.constant 0 : index
    %c0_11 = arith.constant 0 : index
    %17 = vector.load %arg5[%c0_10, %c0_11] : memref<1x128xf32, #tpu.memory_space<vmem>>, vector<1x128xf32>
    %18 = vector.broadcast %17 : vector<1x128xf32> to vector<16x128xf32>
    %19 = arith.addf %16, %18 : vector<16x128xf32>
    %20 = arith.truncf %19 : vector<16x128xf32> to vector<16x128xbf16>
    %c0_12 = arith.constant 0 : index
    %c0_13 = arith.constant 0 : index
    %21 = vector.load %arg2[%c0_12, %c0_13] : memref<128x512xbf16, #tpu.memory_space<vmem>>, vector<128x512xbf16>
    %cst_14 = arith.constant dense<0.000000e+00> : vector<16x512xf32>
    %22 = tpu.matmul %20, %21, %cst_14 {dimension_numbers = #tpu.dot_dimension_numbers<[1], [0], [0], [1], [0, 0, 1, 1], [], []>} : vector<16x128xbf16>, vector<128x512xbf16>, vector<16x512xf32> -> vector<16x512xf32>
    %c0_15 = arith.constant 0 : index
    %c0_16 = arith.constant 0 : index
    %23 = vector.load %arg3[%c0_15, %c0_16] : memref<1x512xf32, #tpu.memory_space<vmem>>, vector<1x512xf32>
    %24 = vector.broadcast %23 : vector<1x512xf32> to vector<16x512xf32>
    %25 = arith.addf %22, %24 : vector<16x512xf32>
    %26 = arith.negf %25 : vector<16x512xf32>
    %27 = math.exp %26 : vector<16x512xf32>
    %cst_17 = arith.constant 1.000000e+00 : f32
    %28 = vector.broadcast %cst_17 : f32 to vector<16x512xf32>
    %29 = arith.addf %28, %27 : vector<16x512xf32>
    %30 = arith.divf %28, %29 : vector<16x512xf32>
    %31 = arith.mulf %25, %30 : vector<16x512xf32>
    %32 = arith.truncf %31 : vector<16x512xf32> to vector<16x512xbf16>
    %c0_18 = arith.constant 0 : index
    %c0_19 = arith.constant 0 : index
    %33 = vector.load %arg4[%c0_18, %c0_19] : memref<512x128xbf16, #tpu.memory_space<vmem>>, vector<512x128xbf16>
    %cst_20 = arith.constant dense<0.000000e+00> : vector<16x128xf32>
    %34 = tpu.matmul %32, %33, %cst_20 {dimension_numbers = #tpu.dot_dimension_numbers<[1], [0], [0], [1], [0, 0, 1, 1], [], []>} : vector<16x512xbf16>, vector<512x128xbf16>, vector<16x128xf32> -> vector<16x128xf32>
    %c0_21 = arith.constant 0 : index
    %c0_22 = arith.constant 0 : index
    %35 = vector.load %arg5[%c0_21, %c0_22] : memref<1x128xf32, #tpu.memory_space<vmem>>, vector<1x128xf32>
    %36 = vector.broadcast %35 : vector<1x128xf32> to vector<16x128xf32>
    %37 = arith.addf %34, %36 : vector<16x128xf32>
    %c0_23 = arith.constant 0 : index
    %c0_24 = arith.constant 0 : index
    %38 = vector.load %arg6[%c0_23, %c0_24] : memref<1x128xf32, #tpu.memory_space<vmem>>, vector<1x128xf32>
    %39 = vector.shape_cast %37 : vector<16x128xf32> to vector<2x8x128xf32>
    %40 = vector.shape_cast %38 : vector<1x128xf32> to vector<1x1x128xf32>
    %41 = vector.broadcast %40 : vector<1x1x128xf32> to vector<2x8x128xf32>
    %42 = arith.mulf %41, %39 : vector<2x8x128xf32>
    %43 = arith.addf %0, %42 : vector<2x8x128xf32>
    %c0_25 = arith.constant 0 : index
    %c0_26 = arith.constant 0 : index
    %c0_27 = arith.constant 0 : index
    %44 = vector.load %arg7[%c0_25, %c0_26, %c0_27] : memref<2x8x128xf32, #tpu.memory_space<vmem>>, vector<2x8x128xf32>
    tpu.vector_store %arg7[%c0_25, %c0_26, %c0_27], %43 {strides = array<i32>} : memref<2x8x128xf32, #tpu.memory_space<vmem>>, vector<2x8x128xf32>,
    return
  }
  func.func @transform_0(%arg0: i32) -> (i32, i32, i32) {
    %c0_i32 = arith.constant 0 : i32
    %c0_i32_0 = arith.constant 0 : i32
    %c0_i32_1 = arith.constant 0 : i32
    return %arg0, %c0_i32, %c0_i32_0 : i32, i32, i32
  }
  func.func @transform_1(%arg0: i32) -> (i32, i32) {
    %c0_i32 = arith.constant 0 : i32
    %c0_i32_0 = arith.constant 0 : i32
    %c0_i32_1 = arith.constant 0 : i32
    return %c0_i32, %c0_i32_0 : i32, i32
  }
  func.func @transform_2(%arg0: i32) -> (i32, i32) {
    %c0_i32 = arith.constant 0 : i32
    %c0_i32_0 = arith.constant 0 : i32
    %c0_i32_1 = arith.constant 0 : i32
    return %c0_i32, %c0_i32_0 : i32, i32
  }
  func.func @transform_3(%arg0: i32) -> (i32, i32) {
    %c0_i32 = arith.constant 0 : i32
    %c0_i32_0 = arith.constant 0 : i32
    %c0_i32_1 = arith.constant 0 : i32
    return %c0_i32, %c0_i32_0 : i32, i32
  }
  func.func @transform_4(%arg0: i32) -> (i32, i32) {
    %c0_i32 = arith.constant 0 : i32
    %c0_i32_0 = arith.constant 0 : i32
    %c0_i32_1 = arith.constant 0 : i32
    return %c0_i32, %c0_i32_0 : i32, i32
  }
  func.func @transform_5(%arg0: i32) -> (i32, i32) {
    %c0_i32 = arith.constant 0 : i32
    %c0_i32_0 = arith.constant 0 : i32
    %c0_i32_1 = arith.constant 0 : i32
    return %c0_i32, %c0_i32_0 : i32, i32
  }
  func.func @transform_6(%arg0: i32) -> (i32, i32, i32) {
    %c0_i32 = arith.constant 0 : i32
    %c0_i32_0 = arith.constant 0 : i32
    %c0_i32_1 = arith.constant 0 : i32
    return %arg0, %c0_i32, %c0_i32_0 : i32, i32, i32
  }
}

module attributes {stable_mosaic.version = 11 : i64} {
  func.func @_final_norm_bypass_kernel(%arg0: i32, %arg1: memref<2x8x128xf32, #tpu.memory_space<vmem>>, %arg2: memref<2x8x128xf32, #tpu.memory_space<vmem>>, %arg3: memref<1x128xf32, #tpu.memory_space<vmem>>, %arg4: memref<1x128xf32, #tpu.memory_space<vmem>>, %arg5: memref<1x128xf32, #tpu.memory_space<vmem>>, %arg6: memref<2x8x128xf32, #tpu.memory_space<vmem>>) attributes {dimension_semantics = [#tpu.dimension_semantics<parallel>], iteration_bounds = array<i64: 1>, scalar_prefetch = 0 : i64, scratch_operands = 0 : i64, tpu.core_type = #tpu.core_type<tc>, window_params = [{transform_indices = @transform_0, window_bounds = array<i64: 2, 8, 128>}, {transform_indices = @transform_1, window_bounds = array<i64: 2, 8, 128>}, {pipeline_mode = #tpu.pipeline_mode<synchronous>, transform_indices = @transform_2, window_bounds = array<i64: 1, 128>}, {pipeline_mode = #tpu.pipeline_mode<synchronous>, transform_indices = @transform_3, window_bounds = array<i64: 1, 128>}, {pipeline_mode = #tpu.pipeline_mode<synchronous>, transform_indices = @transform_4, window_bounds = array<i64: 1, 128>}, {transform_indices = @transform_5, window_bounds = array<i64: 2, 8, 128>}]} {
    %c0 = arith.constant 0 : index
    %c0_0 = arith.constant 0 : index
    %c0_1 = arith.constant 0 : index
    %0 = vector.load %arg1[%c0, %c0_0, %c0_1] : memref<2x8x128xf32, #tpu.memory_space<vmem>>, vector<2x8x128xf32>
    %c0_2 = arith.constant 0 : index
    %c0_3 = arith.constant 0 : index
    %c0_4 = arith.constant 0 : index
    %1 = vector.load %arg2[%c0_2, %c0_3, %c0_4] : memref<2x8x128xf32, #tpu.memory_space<vmem>>, vector<2x8x128xf32>
    %c0_5 = arith.constant 0 : index
    %c0_6 = arith.constant 0 : index
    %2 = vector.load %arg3[%c0_5, %c0_6] : memref<1x128xf32, #tpu.memory_space<vmem>>, vector<1x128xf32>
    %3 = vector.shape_cast %2 : vector<1x128xf32> to vector<1x1x128xf32>
    %4 = vector.broadcast %3 : vector<1x1x128xf32> to vector<2x8x128xf32>
    %5 = arith.subf %1, %4 : vector<2x8x128xf32>
    %6 = arith.mulf %5, %5 : vector<2x8x128xf32>
    %cst = arith.constant dense<0.000000e+00> : vector<2x8xf32>
    %7 = vector.multi_reduction <add>, %6, %cst [2] : vector<2x8x128xf32> to vector<2x8xf32>
    %8 = vector.shape_cast %7 : vector<2x8xf32> to vector<2x8x1xf32>
    %cst_7 = arith.constant 1.280000e+02 : f32
    %9 = vector.broadcast %cst_7 : f32 to vector<2x8x1xf32>
    %10 = arith.divf %8, %9 : vector<2x8x1xf32>
    %cst_8 = arith.constant 9.99999974E-6 : f32
    %11 = vector.broadcast %cst_8 : f32 to vector<2x8x1xf32>
    %12 = arith.addf %10, %11 : vector<2x8x1xf32>
    %13 = math.sqrt %12 : vector<2x8x1xf32>
    %14 = tpu.reciprocal %13 : vector<2x8x1xf32> -> vector<2x8x1xf32>
    %15 = vector.broadcast %14 : vector<2x8x1xf32> to vector<2x8x128xf32>
    %16 = arith.mulf %1, %15 : vector<2x8x128xf32>
    %c0_9 = arith.constant 0 : index
    %c0_10 = arith.constant 0 : index
    %17 = vector.load %arg4[%c0_9, %c0_10] : memref<1x128xf32, #tpu.memory_space<vmem>>, vector<1x128xf32>
    %18 = vector.shape_cast %17 : vector<1x128xf32> to vector<1x1x128xf32>
    %19 = vector.broadcast %18 : vector<1x1x128xf32> to vector<2x8x128xf32>
    %20 = arith.mulf %16, %19 : vector<2x8x128xf32>
    %c0_11 = arith.constant 0 : index
    %c0_12 = arith.constant 0 : index
    %21 = vector.load %arg5[%c0_11, %c0_12] : memref<1x128xf32, #tpu.memory_space<vmem>>, vector<1x128xf32>
    %cst_13 = arith.constant 1.000000e+00 : f32
    %22 = vector.broadcast %cst_13 : f32 to vector<1x128xf32>
    %23 = arith.subf %22, %21 : vector<1x128xf32>
    %24 = vector.shape_cast %23 : vector<1x128xf32> to vector<1x1x128xf32>
    %25 = vector.broadcast %24 : vector<1x1x128xf32> to vector<2x8x128xf32>
    %26 = arith.mulf %25, %0 : vector<2x8x128xf32>
    %27 = vector.shape_cast %21 : vector<1x128xf32> to vector<1x1x128xf32>
    %28 = vector.broadcast %27 : vector<1x1x128xf32> to vector<2x8x128xf32>
    %29 = arith.mulf %28, %20 : vector<2x8x128xf32>
    %30 = arith.addf %26, %29 : vector<2x8x128xf32>
    %cst_14 = arith.constant 1.000000e+00 : f32
    %31 = vector.broadcast %cst_14 : f32 to vector<2x8x128xf32>
    %32 = arith.subf %31, %30 : vector<2x8x128xf32>
    %33 = arith.mulf %32, %0 : vector<2x8x128xf32>
    %34 = arith.mulf %30, %20 : vector<2x8x128xf32>
    %35 = arith.addf %33, %34 : vector<2x8x128xf32>
    %c0_15 = arith.constant 0 : index
    %c0_16 = arith.constant 0 : index
    %c0_17 = arith.constant 0 : index
    %36 = vector.load %arg6[%c0_15, %c0_16, %c0_17] : memref<2x8x128xf32, #tpu.memory_space<vmem>>, vector<2x8x128xf32>
    tpu.vector_store %arg6[%c0_15, %c0_16, %c0_17], %35 {strides = array<i32>} : memref<2x8x128xf32, #tpu.memory_space<vmem>>, vector<2x8x128xf32>,
    return
  }
  func.func @transform_0(%arg0: i32) -> (i32, i32, i32) {
    %c0_i32 = arith.constant 0 : i32
    %c0_i32_0 = arith.constant 0 : i32
    %c0_i32_1 = arith.constant 0 : i32
    return %arg0, %c0_i32, %c0_i32_0 : i32, i32, i32
  }
  func.func @transform_1(%arg0: i32) -> (i32, i32, i32) {
    %c0_i32 = arith.constant 0 : i32
    %c0_i32_0 = arith.constant 0 : i32
    %c0_i32_1 = arith.constant 0 : i32
    return %arg0, %c0_i32, %c0_i32_0 : i32, i32, i32
  }
  func.func @transform_2(%arg0: i32) -> (i32, i32) {
    %c0_i32 = arith.constant 0 : i32
    %c0_i32_0 = arith.constant 0 : i32
    %c0_i32_1 = arith.constant 0 : i32
    return %c0_i32, %c0_i32_0 : i32, i32
  }
  func.func @transform_3(%arg0: i32) -> (i32, i32) {
    %c0_i32 = arith.constant 0 : i32
    %c0_i32_0 = arith.constant 0 : i32
    %c0_i32_1 = arith.constant 0 : i32
    return %c0_i32, %c0_i32_0 : i32, i32
  }
  func.func @transform_4(%arg0: i32) -> (i32, i32) {
    %c0_i32 = arith.constant 0 : i32
    %c0_i32_0 = arith.constant 0 : i32
    %c0_i32_1 = arith.constant 0 : i32
    return %c0_i32, %c0_i32_0 : i32, i32
  }
  func.func @transform_5(%arg0: i32) -> (i32, i32, i32) {
    %c0_i32 = arith.constant 0 : i32
    %c0_i32_0 = arith.constant 0 : i32
    %c0_i32_1 = arith.constant 0 : i32
    return %arg0, %c0_i32, %c0_i32_0 : i32, i32, i32
  }
}

</mosaic_0001>

<llo_original>
// kernel: _lambda_.13
$region0: #{_lambda_.13}
  #allocation0 [shape = 'u32[]', space=smem, size = 0x4, offset = 0x4, fixed_abs, tag = 'smem constant byte address 0x4 - core index']
  #allocation1 [shape = 'u32[72,128]{1,0:T(1,128)}', space=vmem, size = 0x9000, scoped, tag = 'internal scratch']
  %s0 = inlined_call_operand.vmem [shape: f32[2,8,128], index: 0, kind: input, shape index: {}]
  %s1 = inlined_call_operand.hbm [shape: f32[1,128], index: 1, kind: input, shape index: {}]
  %s2 = inlined_call_operand.hbm [shape: f32[1,128], index: 2, kind: input, shape index: {}]
  %s3 = inlined_call_operand.hbm [shape: bf16[128,256], index: 3, kind: input, shape index: {}]
  %s4 = inlined_call_operand.hbm [shape: f32[1,256], index: 4, kind: input, shape index: {}]
  %s5 = inlined_call_operand.vmem [shape: f32[3,128], index: 5, kind: input, shape index: {}]
  %s6 = inlined_call_operand.hbm [shape: f32[1,128], index: 6, kind: input, shape index: {}]
  %s7 = inlined_call_operand.hbm [shape: f32[1,128], index: 7, kind: input, shape index: {}]
  %s8 = inlined_call_operand.hbm [shape: f32[1,128], index: 8, kind: input, shape index: {}]
  %s9 = inlined_call_operand.hbm [shape: bf16[128,128], index: 9, kind: input, shape index: {}]
  %s10 = inlined_call_operand.hbm [shape: f32[1,128], index: 10, kind: input, shape index: {}]
  %s11 = inlined_call_operand.vmem [shape: f32[1,128], index: 11, kind: input, shape index: {}]
  %s12 = inlined_call_operand.vmem [shape: f32[2,8,128], index: 12, kind: output, shape index: {}]
  %s13 = sld [smem:[#allocation0]]
  $region94: #{_lambda_.13} parent=0
    _
  %s15 = ssub.s32 1, %s13
  %s16 = scalar_select 0, %s15, %s13
  $region1: #{_lambda_.13} parent=0
    #allocation2 [shape = 'u8[512]{0}', space=vmem, size = 0x400, scoped, tag = 'input window, operand 1, single buffered']
    #allocation3 [shape = 's32[1]{0}', space=sflag, size = 0x4, scoped, tag = 'scoped memory for _lambda_.13']
    #allocation4 [shape = 'u8[512]{0}', space=vmem, size = 0x400, scoped, tag = 'input window, operand 2, single buffered']
    #allocation5 [shape = 's32[1]{0}', space=sflag, size = 0x4, scoped, tag = 'scoped memory for _lambda_.13']
    #allocation6 [shape = 'u8[65536]{0}', space=vmem, size = 0x10000, scoped, tag = 'input window, operand 3, single buffered']
    #allocation7 [shape = 'u8[1024]{0}', space=vmem, size = 0x400, scoped, tag = 'input window, operand 4, single buffered']
    #allocation8 [shape = 's32[1]{0}', space=sflag, size = 0x4, scoped, tag = 'scoped memory for _lambda_.13']
    #allocation9 [shape = 'u8[512]{0}', space=vmem, size = 0x400, scoped, tag = 'input window, operand 6, single buffered']
    #allocation10 [shape = 'u8[512]{0}', space=vmem, size = 0x400, scoped, tag = 'input window, operand 7, single buffered']
    #allocation11 [shape = 's32[1]{0}', space=sflag, size = 0x4, scoped, tag = 'scoped memory for _lambda_.13']
    #allocation12 [shape = 'u8[512]{0}', space=vmem, size = 0x400, scoped, tag = 'input window, operand 8, single buffered']
    #allocation13 [shape = 'u8[32768]{0}', space=vmem, size = 0x8000, scoped, tag = 'input window, operand 9, single buffered']
    #allocation14 [shape = 's32[1]{0}', space=sflag, size = 0x4, scoped, tag = 'scoped memory for _lambda_.13']
    #allocation15 [shape = 'u8[512]{0}', space=vmem, size = 0x400, scoped, tag = 'input window, operand 10, single buffered']
    %17 = vsyncpa [#allocation3], 0
    %18 = vsyncpa [#allocation5], 0
    %19 = vsyncpa [#allocation8], 0
    %20 = vsyncpa [#allocation11], 0
    %21 = vsyncpa [#allocation14], 0
    // Predicated region
    $region2: #{_lambda_.13} parent=1 // pred_check
      _
    $region3: #{_lambda_.13} parent=1 // pred_check_branch
      %23 = sbr.rel (0) target = $region5
    $region4: #{_lambda_.13} parent=1 // pred_region
      _
    $region5: #{_lambda_.13} parent=1 // pred_fallthru
      _
    // Predicated region
    $region6: #{_lambda_.13} parent=1 // pred_check
      _
    $region7: #{_lambda_.13} parent=1 // pred_check_branch
      %25 = sbr.rel (0) target = $region9
    $region8: #{_lambda_.13} parent=1 // pred_region
      %27 = vsyncadd [#allocation3], 0
      %s29 = sshll.u32 %s1, 4
      %s30 = int_to_ptr.hbm [resolvable:$true] %s29
      %s31 = sshll.u32 [#allocation2], 4
      %s32 = int_to_ptr.vmem [resolvable:$true] %s31
      %34 = dma.hbm_to_vmem [thread:$0]  %s30, 16, %s32, [#allocation3]
    $region9: #{_lambda_.13} parent=1 // pred_fallthru
      _
    // Predicated region
    $region10: #{_lambda_.13} parent=1 // pred_check
      _
    $region11: #{_lambda_.13} parent=1 // pred_check_branch
      %36 = sbr.rel (0) target = $region13
    $region12: #{_lambda_.13} parent=1 // pred_region
      %38 = vsyncadd [#allocation5], 0
      %s40 = sshll.u32 %s2, 4
      %s41 = int_to_ptr.hbm [resolvable:$true] %s40
      %s42 = sshll.u32 [#allocation4], 4
      %s43 = int_to_ptr.vmem [resolvable:$true] %s42
      %45 = dma.hbm_to_vmem [thread:$0]  %s41, 16, %s43, [#allocation5]
    $region13: #{_lambda_.13} parent=1 // pred_fallthru
      _
    // Predicated region
    $region14: #{_lambda_.13} parent=1 // pred_check
      _
    $region15: #{_lambda_.13} parent=1 // pred_check_branch
      %47 = sbr.rel (0) target = $region17
    $region16: #{_lambda_.13} parent=1 // pred_region
      %49 = vsyncadd [#allocation5], 0
      %s50 = sshll.u32 %s3, 4
      %s51 = int_to_ptr.hbm [resolvable:$true] %s50
      %s52 = sshll.u32 [#allocation6], 4
      %s53 = int_to_ptr.vmem [resolvable:$true] %s52
      %58 = dma.hbm_to_vmem [thread:$0]  %s51, 2048, %s53, [#allocation5], 128, 128, 8
    $region17: #{_lambda_.13} parent=1 // pred_fallthru
      _
    // Predicated region
    $region18: #{_lambda_.13} parent=1 // pred_check
      _
    $region19: #{_lambda_.13} parent=1 // pred_check_branch
      %60 = sbr.rel (0) target = $region21
    $region20: #{_lambda_.13} parent=1 // pred_region
      %62 = vsyncadd [#allocation8], 0
      %s64 = sshll.u32 %s4, 4
      %s65 = int_to_ptr.hbm [resolvable:$true] %s64
      %s66 = sshll.u32 [#allocation7], 4
      %s67 = int_to_ptr.vmem [resolvable:$true] %s66
      %69 = dma.hbm_to_vmem [thread:$0]  %s65, 32, %s67, [#allocation8]
    $region21: #{_lambda_.13} parent=1 // pred_fallthru
      _
    // Predicated region
    $region22: #{_lambda_.13} parent=1 // pred_check
      _
    $region23: #{_lambda_.13} parent=1 // pred_check_branch
      %71 = sbr.rel (0) target = $region25
    $region24: #{_lambda_.13} parent=1 // pred_region
      _
    $region25: #{_lambda_.13} parent=1 // pred_fallthru
      _
    // Predicated region
    $region26: #{_lambda_.13} parent=1 // pred_check
      _
    $region27: #{_lambda_.13} parent=1 // pred_check_branch
      %73 = sbr.rel (0) target = $region29
    $region28: #{_lambda_.13} parent=1 // pred_region
      %75 = vsyncadd [#allocation8], 0
      %s77 = sshll.u32 %s6, 4
      %s78 = int_to_ptr.hbm [resolvable:$true] %s77
      %s79 = sshll.u32 [#allocation9], 4
      %s80 = int_to_ptr.vmem [resolvable:$true] %s79
      %82 = dma.hbm_to_vmem [thread:$0]  %s78, 16, %s80, [#allocation8]
    $region29: #{_lambda_.13} parent=1 // pred_fallthru
      _
    // Predicated region
    $region30: #{_lambda_.13} parent=1 // pred_check
      _
    $region31: #{_lambda_.13} parent=1 // pred_check_branch
      %84 = sbr.rel (0) target = $region33
    $region32: #{_lambda_.13} parent=1 // pred_region
      %86 = vsyncadd [#allocation11], 0
      %s88 = sshll.u32 %s7, 4
      %s89 = int_to_ptr.hbm [resolvable:$true] %s88
      %s90 = sshll.u32 [#allocation10], 4
      %s91 = int_to_ptr.vmem [resolvable:$true] %s90
      %93 = dma.hbm_to_vmem [thread:$0]  %s89, 16, %s91, [#allocation11]
    $region33: #{_lambda_.13} parent=1 // pred_fallthru
      _
    // Predicated region
    $region34: #{_lambda_.13} parent=1 // pred_check
      _
    $region35: #{_lambda_.13} parent=1 // pred_check_branch
      %95 = sbr.rel (0) target = $region37
    $region36: #{_lambda_.13} parent=1 // pred_region
      %97 = vsyncadd [#allocation11], 0
      %s99 = sshll.u32 %s8, 4
      %s100 = int_to_ptr.hbm [resolvable:$true] %s99
      %s101 = sshll.u32 [#allocation12], 4
      %s102 = int_to_ptr.vmem [resolvable:$true] %s101
      %104 = dma.hbm_to_vmem [thread:$0]  %s100, 16, %s102, [#allocation11]
    $region37: #{_lambda_.13} parent=1 // pred_fallthru
      _
    // Predicated region
    $region38: #{_lambda_.13} parent=1 // pred_check
      _
    $region39: #{_lambda_.13} parent=1 // pred_check_branch
      %106 = sbr.rel (0) target = $region41
    $region40: #{_lambda_.13} parent=1 // pred_region
      %108 = vsyncadd [#allocation14], 0
      %s109 = sshll.u32 %s9, 4
      %s110 = int_to_ptr.hbm [resolvable:$true] %s109
      %s111 = sshll.u32 [#allocation13], 4
      %s112 = int_to_ptr.vmem [resolvable:$true] %s111
      %117 = dma.hbm_to_vmem [thread:$0]  %s110, 1024, %s112, [#allocation14], 64, 64, 4
    $region41: #{_lambda_.13} parent=1 // pred_fallthru
      _
    // Predicated region
    $region42: #{_lambda_.13} parent=1 // pred_check
      _
    $region43: #{_lambda_.13} parent=1 // pred_check_branch
      %119 = sbr.rel (0) target = $region45
    $region44: #{_lambda_.13} parent=1 // pred_region
      %121 = vsyncadd [#allocation14], 0
      %s123 = sshll.u32 %s10, 4
      %s124 = int_to_ptr.hbm [resolvable:$true] %s123
      %s125 = sshll.u32 [#allocation15], 4
      %s126 = int_to_ptr.vmem [resolvable:$true] %s125
      %128 = dma.hbm_to_vmem [thread:$0]  %s124, 16, %s126, [#allocation14]
    $region45: #{_lambda_.13} parent=1 // pred_fallthru
      _
    // Predicated region
    $region46: #{_lambda_.13} parent=1 // pred_check
      _
    $region47: #{_lambda_.13} parent=1 // pred_check_branch
      %130 = sbr.rel (0) target = $region49
    $region48: #{_lambda_.13} parent=1 // pred_region
      _
    $region49: #{_lambda_.13} parent=1 // pred_fallthru
      _
    // Predicated region
    $region50: #{_lambda_.13} parent=1 // pred_check
      _
    $region51: #{_lambda_.13} parent=1 // pred_check_branch
      %132 = sbr.rel (0) target = $region53
    $region52: #{_lambda_.13} parent=1 // pred_region
      %134 = dma.done [#allocation3], 16
    $region53: #{_lambda_.13} parent=1 // pred_fallthru
      _
    // Predicated region
    $region54: #{_lambda_.13} parent=1 // pred_check
      _
    $region55: #{_lambda_.13} parent=1 // pred_check_branch
      %136 = sbr.rel (0) target = $region57
    $region56: #{_lambda_.13} parent=1 // pred_region
      %138 = dma.done [#allocation5], 16
    $region57: #{_lambda_.13} parent=1 // pred_fallthru
      _
    // Predicated region
    $region58: #{_lambda_.13} parent=1 // pred_check
      _
    $region59: #{_lambda_.13} parent=1 // pred_check_branch
      %140 = sbr.rel (0) target = $region61
    $region60: #{_lambda_.13} parent=1 // pred_region
      %142 = dma.done [#allocation5], 2048
    $region61: #{_lambda_.13} parent=1 // pred_fallthru
      _
    // Predicated region
    $region62: #{_lambda_.13} parent=1 // pred_check
      _
    $region63: #{_lambda_.13} parent=1 // pred_check_branch
      %144 = sbr.rel (0) target = $region65
    $region64: #{_lambda_.13} parent=1 // pred_region
      %146 = dma.done [#allocation8], 32
    $region65: #{_lambda_.13} parent=1 // pred_fallthru
      _
    // Predicated region
    $region66: #{_lambda_.13} parent=1 // pred_check
      _
    $region67: #{_lambda_.13} parent=1 // pred_check_branch
      %148 = sbr.rel (0) target = $region69
    $region68: #{_lambda_.13} parent=1 // pred_region
      %150 = dma.done [#allocation8], 16
    $region69: #{_lambda_.13} parent=1 // pred_fallthru
      _
    // Predicated region
    $region70: #{_lambda_.13} parent=1 // pred_check
      _
    $region71: #{_lambda_.13} parent=1 // pred_check_branch
      %152 = sbr.rel (0) target = $region73
    $region72: #{_lambda_.13} parent=1 // pred_region
      %154 = dma.done [#allocation11], 16
    $region73: #{_lambda_.13} parent=1 // pred_fallthru
      _
    // Predicated region
    $region74: #{_lambda_.13} parent=1 // pred_check
      _
    $region75: #{_lambda_.13} parent=1 // pred_check_branch
      %156 = sbr.rel (0) target = $region77
    $region76: #{_lambda_.13} parent=1 // pred_region
      %158 = dma.done [#allocation11], 16
    $region77: #{_lambda_.13} parent=1 // pred_fallthru
      _
    // Predicated region
    $region78: #{_lambda_.13} parent=1 // pred_check
      _
    $region79: #{_lambda_.13} parent=1 // pred_check_branch
      %160 = sbr.rel (0) target = $region81
    $region80: #{_lambda_.13} parent=1 // pred_region
      %162 = dma.done [#allocation14], 1024
    $region81: #{_lambda_.13} parent=1 // pred_fallthru
      _
    // Predicated region
    $region82: #{_lambda_.13} parent=1 // pred_check
      _
    $region83: #{_lambda_.13} parent=1 // pred_check_branch
      %164 = sbr.rel (0) target = $region85
    $region84: #{_lambda_.13} parent=1 // pred_region
      %166 = dma.done [#allocation14], 16
    $region85: #{_lambda_.13} parent=1 // pred_fallthru
      _
    %v167 = vld [vmem:[%s0] sm:$0xff]
    %v168 = vld [vmem:[%s0 + $0x8] sm:$0xff]
    %v169 = vld [vmem:[#allocation2] sm:$0x1]
    %v171 = vperm.slane %v169, 0
    %v173 = vsub.f32 %v167, %v171
    %v174 = vsub.f32 %v168, %v171
    %v175 = vmul.f32 %v173, %v173
    %v176 = vmul.f32 %v174, %v174
    %177 = vadd.xlane.f32.xlu0 %v175
    %v178 = vpop.xlane.xlu0 %177
    %179 = vadd.xlane.f32.xlu0 %v176
    %v180 = vpop.xlane.xlu0 %179
    %v181 = vrcp.pop 128.0
    %v182 = vmul.f32 128.0, %v181
    %v183 = vsub.f32 1.0, %v182
    %v184 = vmul.f32 %v181, %v183
    %v185 = vadd.f32 %v181, %v184
    %vm186 = vweird.f32 %v181
    %v187 = vsel %vm186, %v181, %v185
    %v188 = vmul.f32 %v178, %v187
    %v189 = vmul.f32 %v180, %v187
    %v190 = vadd.f32 %v188, 1e-05
    %v191 = vadd.f32 %v189, 1e-05
    %v192 = vrsqrt.pop %v190
    %v193 = vmul.f32 %v192, %v190
    %v194 = vmul.f32 %v193, %v192
    %v195 = vmul.f32 0.5, %v194
    %v196 = vsub.f32 1.5, %v195
    %v197 = vmul.f32 %v192, %v196
    %v198 = vmul.f32 %v190, %v197
    %vm199 = vcmp.eq.f32.partialorder %v190, inf
    %v200 = vsel %vm199, %v190, %v198
    %vm201 = vcmp.eq.f32.partialorder %v190, 0.0
    %v202 = vand.u32 %v190, 2147483648
    %v203 = vsel %vm201, %v202, %v200
    %v204 = vrsqrt.pop %v191
    %v205 = vmul.f32 %v204, %v191
    %v206 = vmul.f32 %v205, %v204
    %v207 = vmul.f32 0.5, %v206
    %v208 = vsub.f32 1.5, %v207
    %v209 = vmul.f32 %v204, %v208
    %v210 = vmul.f32 %v191, %v209
    %vm211 = vcmp.eq.f32.partialorder %v191, inf
    %v212 = vsel %vm211, %v191, %v210
    %vm213 = vcmp.eq.f32.partialorder %v191, 0.0
    %v214 = vand.u32 %v191, 2147483648
    %v215 = vsel %vm213, %v214, %v212
    %v216 = vrcp.pop %v203
    %v217 = vmul.f32 %v203, %v216
    %v218 = vsub.f32 1.0, %v217
    %v219 = vmul.f32 %v216, %v218
    %v220 = vadd.f32 %v216, %v219
    %vm221 = vweird.f32 %v203
    %vm222 = vweird.f32 %v216
    %vm223 = vmor %vm221, %vm222
    %v224 = vsel %vm223, %v216, %v220
    %v225 = vand.u32 2147483647, %v203
    %vm226 = vcmp.eq.f32.partialorder %v225, 8.507059e+37
    %v227 = vand.u32 %v203, 2147483648
    %v228 = vor.u32 1.1754944e-38, %v227
    %v229 = vsel %vm226, %v228, %v224
    %v230 = vrcp.pop %v215
    %v231 = vmul.f32 %v215, %v230
    %v232 = vsub.f32 1.0, %v231
    %v233 = vmul.f32 %v230, %v232
    %v234 = vadd.f32 %v230, %v233
    %vm235 = vweird.f32 %v215
    %vm236 = vweird.f32 %v230
    %vm237 = vmor %vm235, %vm236
    %v238 = vsel %vm237, %v230, %v234
    %v239 = vand.u32 2147483647, %v215
    %vm240 = vcmp.eq.f32.partialorder %v239, 8.507059e+37
    %v241 = vand.u32 %v215, 2147483648
    %v242 = vor.u32 1.1754944e-38, %v241
    %v243 = vsel %vm240, %v242, %v238
    %v244 = vmul.f32 %v167, %v229
    %v245 = vmul.f32 %v168, %v243
    %v246 = vld [vmem:[#allocation4] sm:$0x1]
    %v248 = vperm.slane %v246, 0
    %v250 = vmul.f32 %v244, %v248
    %v251 = vmul.f32 %v245, %v248
    %v252 = vpack.c.bf16 %v251, %v250
    %v253 = vld [vmem:[#allocation6] sm:$0xff]
    %v254 = vld [vmem:[#allocation6 + $0x8] sm:$0xff]
    %v255 = vld [vmem:[#allocation6 + $0x10] sm:$0xff]
    %v256 = vld [vmem:[#allocation6 + $0x18] sm:$0xff]
    %v257 = vld [vmem:[#allocation6 + $0x20] sm:$0xff]
    %v258 = vld [vmem:[#allocation6 + $0x28] sm:$0xff]
    %v259 = vld [vmem:[#allocation6 + $0x30] sm:$0xff]
    %v260 = vld [vmem:[#allocation6 + $0x38] sm:$0xff]
    %v261 = vld [vmem:[#allocation6 + $0x40] sm:$0xff]
    %v262 = vld [vmem:[#allocation6 + $0x48] sm:$0xff]
    %v263 = vld [vmem:[#allocation6 + $0x50] sm:$0xff]
    %v264 = vld [vmem:[#allocation6 + $0x58] sm:$0xff]
    %v265 = vld [vmem:[#allocation6 + $0x60] sm:$0xff]
    %v266 = vld [vmem:[#allocation6 + $0x68] sm:$0xff]
    %v267 = vld [vmem:[#allocation6 + $0x70] sm:$0xff]
    %v268 = vld [vmem:[#allocation6 + $0x78] sm:$0xff]
    %v269 = vld [vmem:[#allocation7] sm:$0x3]
    %v271 = vperm.slane %v269, 0
    %v272 = vperm.slane %v269, 1
    %v291 = vunpack.c.l.b16 %v253
    %v292 = vunpack.c.h.b16 %v253
    %v293 = vunpack.c.l.b16 %v254
    %v294 = vunpack.c.h.b16 %v254
    %v295 = vunpack.c.l.b16 %v255
    %v296 = vunpack.c.h.b16 %v255
    %v297 = vunpack.c.l.b16 %v256
    %v298 = vunpack.c.h.b16 %v256
    %v299 = vunpack.c.l.b16 %v257
    %v300 = vunpack.c.h.b16 %v257
    %v301 = vunpack.c.l.b16 %v258
    %v302 = vunpack.c.h.b16 %v258
    %v303 = vunpack.c.l.b16 %v259
    %v304 = vunpack.c.h.b16 %v259
    %v305 = vunpack.c.l.b16 %v260
    %v306 = vunpack.c.h.b16 %v260
    %v307 = vunpack.c.l.b16 %v261
    %v308 = vunpack.c.h.b16 %v261
    %v309 = vunpack.c.l.b16 %v262
    %v310 = vunpack.c.h.b16 %v262
    %v311 = vunpack.c.l.b16 %v263
    %v312 = vunpack.c.h.b16 %v263
    %v313 = vunpack.c.l.b16 %v264
    %v314 = vunpack.c.h.b16 %v264
    %v315 = vunpack.c.l.b16 %v265
    %v316 = vunpack.c.h.b16 %v265
    %v317 = vunpack.c.l.b16 %v266
    %v318 = vunpack.c.h.b16 %v266
    %v319 = vunpack.c.l.b16 %v267
    %v320 = vunpack.c.h.b16 %v267
    %v321 = vunpack.c.l.b16 %v268
    %v322 = vunpack.c.h.b16 %v268
    %v323 = vpack.c.b16 %v293, %v291
    %v324 = vpack.c.b16 %v294, %v292
    %v325 = vpack.c.b16 %v297, %v295
    %v326 = vpack.c.b16 %v298, %v296
    %v327 = vpack.c.b16 %v301, %v299
    %v328 = vpack.c.b16 %v302, %v300
    %v329 = vpack.c.b16 %v305, %v303
    %v330 = vpack.c.b16 %v306, %v304
    %v331 = vpack.c.b16 %v309, %v307
    %v332 = vpack.c.b16 %v310, %v308
    %v333 = vpack.c.b16 %v313, %v311
    %v334 = vpack.c.b16 %v314, %v312
    %v335 = vpack.c.b16 %v317, %v315
    %v336 = vpack.c.b16 %v318, %v316
    %v337 = vpack.c.b16 %v321, %v319
    %v338 = vpack.c.b16 %v322, %v320
    %355 = vmatpush.bf16.msra.mxu0 %v337
    %356 = vmatpush.bf16.msra.mxu0 %v335
    %357 = vmatpush.bf16.msra.mxu0 %v333
    %358 = vmatpush.bf16.msra.mxu0 %v331
    %359 = vmatpush.bf16.msra.mxu0 %v329
    %360 = vmatpush.bf16.msra.mxu0 %v327
    %361 = vmatpush.bf16.msra.mxu0 %v325
    %362 = vmatpush.bf16.msra.mxu0 %v323
    %363 = vmatmul.bf16.gmra.mxu0 %v252
    %v364 = vpop.f32.mrf.mxu0
    %v365 = vadd.f32 %v271, %v364
    %v366 = vpop.f32.mrf.mxu0
    %v367 = vadd.f32 %v271, %v366
    %368 = vdwg.mxu0
    %369 = vmatpush.bf16.msra.mxu0 %v338
    %370 = vmatpush.bf16.msra.mxu0 %v336
    %371 = vmatpush.bf16.msra.mxu0 %v334
    %372 = vmatpush.bf16.msra.mxu0 %v332
    %373 = vmatpush.bf16.msra.mxu0 %v330
    %374 = vmatpush.bf16.msra.mxu0 %v328
    %375 = vmatpush.bf16.msra.mxu0 %v326
    %376 = vmatpush.bf16.msra.mxu0 %v324
    %377 = vmatmul.bf16.gmra.mxu0 %v252
    %v378 = vpop.f32.mrf.mxu0
    %v379 = vadd.f32 %v272, %v378
    %v380 = vpop.f32.mrf.mxu0
    %v381 = vadd.f32 %v272, %v380
    %382 = vdwg.mxu0
    %v383 = vxor.u32 %v379, 2147483648
    %v384 = vxor.u32 %v381, 2147483648
    %v385 = vmul.f32 %v383, 1.442695
    %v386 = vpow.pop %v385
    %v387 = vmul.f32 %v384, 1.442695
    %v388 = vpow.pop %v387
    %v389 = vadd.f32 %v386, 1.0
    %v390 = vadd.f32 %v388, 1.0
    %v391 = vrcp.pop %v389
    %v392 = vmul.f32 %v389, %v391
    %v393 = vsub.f32 1.0, %v392
    %v394 = vmul.f32 %v391, %v393
    %v395 = vadd.f32 %v391, %v394
    %vm396 = vweird.f32 %v389
    %vm397 = vweird.f32 %v391
    %vm398 = vmor %vm396, %vm397
    %v399 = vsel %vm398, %v391, %v395
    %v400 = vand.u32 2147483647, %v389
    %vm401 = vcmp.eq.f32.partialorder %v400, 8.507059e+37
    %v402 = vand.u32 %v389, 2147483648
    %v403 = vor.u32 1.1754944e-38, %v402
    %v404 = vsel %vm401, %v403, %v399
    %v405 = vmul.f32 1.0, %v404
    %v406 = vrcp.pop %v390
    %v407 = vmul.f32 %v390, %v406
    %v408 = vsub.f32 1.0, %v407
    %v409 = vmul.f32 %v406, %v408
    %v410 = vadd.f32 %v406, %v409
    %vm411 = vweird.f32 %v390
    %vm412 = vweird.f32 %v406
    %vm413 = vmor %vm411, %vm412
    %v414 = vsel %vm413, %v406, %v410
    %v415 = vand.u32 2147483647, %v390
    %vm416 = vcmp.eq.f32.partialorder %v415, 8.507059e+37
    %v417 = vand.u32 %v390, 2147483648
    %v418 = vor.u32 1.1754944e-38, %v417
    %v419 = vsel %vm416, %v418, %v414
    %v420 = vmul.f32 1.0, %v419
    %v421 = vmul.f32 %v365, %v405
    %v422 = vmul.f32 %v367, %v420
    %v423 = vlaneseq
    %v424 = vshrl.u32 %v423, 7
    %vm425 = vcmp.ge.s32.totalorder %v424, 1
    %v426 = vrot.slane %v421, 7
    %v427 = vrot.slane %v422, 7
    %v428 = vsel %vm425, %v426, 0.0
    %v429 = vsel %vm425, %v427, 0.0
    %vm430 = vcmp.le.s32.totalorder %v424, 6
    %v431 = vrot.slane %v421, 1
    %v432 = vrot.slane %v422, 1
    %v433 = vsel %vm430, %v431, 0.0
    %v434 = vsel %vm430, %v432, 0.0
    %v435 = vld [vmem:[%s5] sm:$0x1]
    %v436 = vperm.slane %v435, 0
    %v437 = vmul.f32 %v428, %v436
    %v438 = vmul.f32 %v429, %v436
    %v439 = vld [vmem:[%s5 + $0x1] sm:$0x1]
    %v440 = vperm.slane %v439, 0
    %v441 = vmul.f32 %v421, %v440
    %v442 = vmul.f32 %v422, %v440
    %v443 = vadd.f32 %v437, %v441
    %v444 = vadd.f32 %v438, %v442
    %v445 = vld [vmem:[%s5 + $0x2] sm:$0x1]
    %v446 = vperm.slane %v445, 0
    %v447 = vmul.f32 %v433, %v446
    %v448 = vmul.f32 %v434, %v446
    %v449 = vadd.f32 %v443, %v447
    %v450 = vadd.f32 %v444, %v448
    %v451 = vld [vmem:[#allocation9] sm:$0x1]
    %v453 = vperm.slane %v451, 0
    %v455 = vadd.f32 %v449, %v453
    %v456 = vadd.f32 %v450, %v453
    %v457 = vld [vmem:[#allocation10] sm:$0x1]
    %v459 = vperm.slane %v457, 0
    %v461 = vmul.f32 %v455, %v459
    %v462 = vmul.f32 %v456, %v459
    %v463 = vld [vmem:[#allocation12] sm:$0x1]
    %v465 = vperm.slane %v463, 0
    %v467 = vadd.f32 %v461, %v465
    %v468 = vadd.f32 %v462, %v465
    %v469 = vxor.u32 %v467, 2147483648
    %v470 = vxor.u32 %v468, 2147483648
    %v471 = vmul.f32 %v469, 1.442695
    %v472 = vpow.pop %v471
    %v473 = vmul.f32 %v470, 1.442695
    %v474 = vpow.pop %v473
    %v475 = vadd.f32 %v472, 1.0
    %v476 = vadd.f32 %v474, 1.0
    %v477 = vrcp.pop %v475
    %v478 = vmul.f32 %v475, %v477
    %v479 = vsub.f32 1.0, %v478
    %v480 = vmul.f32 %v477, %v479
    %v481 = vadd.f32 %v477, %v480
    %vm482 = vweird.f32 %v475
    %vm483 = vweird.f32 %v477
    %vm484 = vmor %vm482, %vm483
    %v485 = vsel %vm484, %v477, %v481
    %v486 = vand.u32 2147483647, %v475
    %vm487 = vcmp.eq.f32.partialorder %v486, 8.507059e+37
    %v488 = vand.u32 %v475, 2147483648
    %v489 = vor.u32 1.1754944e-38, %v488
    %v490 = vsel %vm487, %v489, %v485
    %v491 = vmul.f32 1.0, %v490
    %v492 = vrcp.pop %v476
    %v493 = vmul.f32 %v476, %v492
    %v494 = vsub.f32 1.0, %v493
    %v495 = vmul.f32 %v492, %v494
    %v496 = vadd.f32 %v492, %v495
    %vm497 = vweird.f32 %v476
    %vm498 = vweird.f32 %v492
    %vm499 = vmor %vm497, %vm498
    %v500 = vsel %vm499, %v492, %v496
    %v501 = vand.u32 2147483647, %v476
    %vm502 = vcmp.eq.f32.partialorder %v501, 8.507059e+37
    %v503 = vand.u32 %v476, 2147483648
    %v504 = vor.u32 1.1754944e-38, %v503
    %v505 = vsel %vm502, %v504, %v500
    %v506 = vmul.f32 1.0, %v505
    %v507 = vmul.f32 %v467, %v491
    %v508 = vmul.f32 %v468, %v506
    %v509 = vpack.c.bf16 %v508, %v507
    %v510 = vld [vmem:[#allocation13] sm:$0xf]
    %v511 = vld [vmem:[#allocation13 + $0x4] sm:$0xf]
    %v512 = vld [vmem:[#allocation13 + $0x8] sm:$0xf]
    %v513 = vld [vmem:[#allocation13 + $0xc] sm:$0xf]
    %v514 = vld [vmem:[#allocation13 + $0x10] sm:$0xf]
    %v515 = vld [vmem:[#allocation13 + $0x14] sm:$0xf]
    %v516 = vld [vmem:[#allocation13 + $0x18] sm:$0xf]
    %v517 = vld [vmem:[#allocation13 + $0x1c] sm:$0xf]
    %v518 = vld [vmem:[#allocation13 + $0x20] sm:$0xf]
    %v519 = vld [vmem:[#allocation13 + $0x24] sm:$0xf]
    %v520 = vld [vmem:[#allocation13 + $0x28] sm:$0xf]
    %v521 = vld [vmem:[#allocation13 + $0x2c] sm:$0xf]
    %v522 = vld [vmem:[#allocation13 + $0x30] sm:$0xf]
    %v523 = vld [vmem:[#allocation13 + $0x34] sm:$0xf]
    %v524 = vld [vmem:[#allocation13 + $0x38] sm:$0xf]
    %v525 = vld [vmem:[#allocation13 + $0x3c] sm:$0xf]
    %v526 = vld [vmem:[#allocation15] sm:$0x1]
    %v528 = vperm.slane %v526, 0
    %v546 = vunpack.c.l.b16 %v510
    %v547 = vunpack.c.l.b16 %v511
    %v548 = vunpack.c.l.b16 %v512
    %v549 = vunpack.c.l.b16 %v513
    %v550 = vunpack.c.l.b16 %v514
    %v551 = vunpack.c.l.b16 %v515
    %v552 = vunpack.c.l.b16 %v516
    %v553 = vunpack.c.l.b16 %v517
    %v554 = vunpack.c.l.b16 %v518
    %v555 = vunpack.c.l.b16 %v519
    %v556 = vunpack.c.l.b16 %v520
    %v557 = vunpack.c.l.b16 %v521
    %v558 = vunpack.c.l.b16 %v522
    %v559 = vunpack.c.l.b16 %v523
    %v560 = vunpack.c.l.b16 %v524
    %v561 = vunpack.c.l.b16 %v525
    %v562 = vpack.c.b16 %v547, %v546
    %v563 = vpack.c.b16 %v549, %v548
    %v564 = vpack.c.b16 %v551, %v550
    %v565 = vpack.c.b16 %v553, %v552
    %v566 = vpack.c.b16 %v555, %v554
    %v567 = vpack.c.b16 %v557, %v556
    %v568 = vpack.c.b16 %v559, %v558
    %v569 = vpack.c.b16 %v561, %v560
    %578 = vmatpush.bf16.msra.mxu0 %v569
    %579 = vmatpush.bf16.msra.mxu0 %v568
    %580 = vmatpush.bf16.msra.mxu0 %v567
    %581 = vmatpush.bf16.msra.mxu0 %v566
    %582 = vmatpush.bf16.msra.mxu0 %v565
    %583 = vmatpush.bf16.msra.mxu0 %v564
    %584 = vmatpush.bf16.msra.mxu0 %v563
    %585 = vmatpush.bf16.msra.mxu0 %v562
    %586 = vmatmul.bf16.gmra.mxu0 %v509
    %v587 = vpop.f32.mrf.mxu0
    %v588 = vadd.f32 %v528, %v587
    %v589 = vpop.f32.mrf.mxu0
    %v590 = vadd.f32 %v528, %v589
    %591 = vdwg.mxu0
    %v592 = vld [vmem:[%s11] sm:$0x1]
    %v594 = vperm.slane %v592, 0
    %v596 = vmul.f32 %v594, %v588
    %v597 = vmul.f32 %v594, %v590
    %v598 = vadd.f32 %v167, %v596
    %v599 = vadd.f32 %v168, %v597
    %600 = vst [vmem:[%s12] sm:$0xff] %v598
    %601 = vst [vmem:[%s12 + $0x8] sm:$0xff] %v599
    // Predicated region
    $region86: #{_lambda_.13} parent=1 // pred_check
      _
    $region87: #{_lambda_.13} parent=1 // pred_check_branch
      %603 = sbr.rel (0) target = $region89
    $region88: #{_lambda_.13} parent=1 // pred_region
      _
    $region89: #{_lambda_.13} parent=1 // pred_fallthru
      _
    // Predicated region
    $region90: #{_lambda_.13} parent=1 // pred_check
      _
    $region91: #{_lambda_.13} parent=1 // pred_check_branch
      %605 = sbr.rel (0) target = $region93
    $region92: #{_lambda_.13} parent=1 // pred_region
      _
    $region93: #{_lambda_.13} parent=1 // pred_fallthru
      _
    %606 = vsyncpa [#allocation3], 1
    %607 = vsyncpa [#allocation5], 1
    %608 = vsyncpa [#allocation8], 1
    %609 = vsyncpa [#allocation11], 1
    %610 = vsyncpa [#allocation14], 1

// kernel: _lambda_.11
$region0: #{_lambda_.11}
  #allocation0 [shape = 'u32[]', space=smem, size = 0x4, offset = 0x4, fixed_abs, tag = 'smem constant byte address 0x4 - core index']
  #allocation1 [shape = 'u32[72,128]{1,0:T(1,128)}', space=vmem, size = 0x9000, scoped, tag = 'internal scratch']
  %s0 = inlined_call_operand.vmem [shape: f32[2,8,128], index: 0, kind: input, shape index: {}]
  %s1 = inlined_call_operand.hbm [shape: bf16[128,384], index: 1, kind: input, shape index: {}]
  %s2 = inlined_call_operand.vmem [shape: f32[1,384], index: 2, kind: input, shape index: {}]
  %s3 = inlined_call_operand.hbm [shape: bf16[128,128], index: 3, kind: input, shape index: {}]
  %s4 = inlined_call_operand.vmem [shape: f32[1,128], index: 4, kind: input, shape index: {}]
  %s5 = inlined_call_operand.vmem [shape: f32[1,128], index: 5, kind: input, shape index: {}]
  %s6 = inlined_call_operand.vmem [shape: f32[2,8,128], index: 6, kind: output, shape index: {}]
  %s7 = sld [smem:[#allocation0]]
  $region42: #{_lambda_.11} parent=0
    _
  %s9 = ssub.s32 1, %s7
  %s10 = scalar_select 0, %s9, %s7
  $region1: #{_lambda_.11} parent=0
    #allocation2 [shape = 'u8[98304]{0}', space=vmem, size = 0x18000, scoped, tag = 'input window, operand 1, single buffered']
    #allocation3 [shape = 's32[1]{0}', space=sflag, size = 0x4, scoped, tag = 'scoped memory for _lambda_.11']
    #allocation4 [shape = 'u8[32768]{0}', space=vmem, size = 0x8000, scoped, tag = 'input window, operand 3, single buffered']
    #allocation5 [shape = 's32[1]{0}', space=sflag, size = 0x4, scoped, tag = 'scoped memory for _lambda_.11']
    %11 = vsyncpa [#allocation3], 0
    %12 = vsyncpa [#allocation5], 0
    // Predicated region
    $region2: #{_lambda_.11} parent=1 // pred_check
      _
    $region3: #{_lambda_.11} parent=1 // pred_check_branch
      %14 = sbr.rel (0) target = $region5
    $region4: #{_lambda_.11} parent=1 // pred_region
      _
    $region5: #{_lambda_.11} parent=1 // pred_fallthru
      _
    // Predicated region
    $region6: #{_lambda_.11} parent=1 // pred_check
      _
    $region7: #{_lambda_.11} parent=1 // pred_check_branch
      %16 = sbr.rel (0) target = $region9
    $region8: #{_lambda_.11} parent=1 // pred_region
      %18 = vsyncadd [#allocation3], 0
      %s19 = sshll.u32 %s1, 4
      %s20 = int_to_ptr.hbm [resolvable:$true] %s19
      %s21 = sshll.u32 [#allocation2], 4
      %s22 = int_to_ptr.vmem [resolvable:$true] %s21
      %27 = dma.hbm_to_vmem [thread:$0]  %s20, 3072, %s22, [#allocation3], 192, 192, 12
    $region9: #{_lambda_.11} parent=1 // pred_fallthru
      _
    // Predicated region
    $region10: #{_lambda_.11} parent=1 // pred_check
      _
    $region11: #{_lambda_.11} parent=1 // pred_check_branch
      %29 = sbr.rel (0) target = $region13
    $region12: #{_lambda_.11} parent=1 // pred_region
      _
    $region13: #{_lambda_.11} parent=1 // pred_fallthru
      _
    // Predicated region
    $region14: #{_lambda_.11} parent=1 // pred_check
      _
    $region15: #{_lambda_.11} parent=1 // pred_check_branch
      %31 = sbr.rel (0) target = $region17
    $region16: #{_lambda_.11} parent=1 // pred_region
      %33 = vsyncadd [#allocation5], 0
      %s34 = sshll.u32 %s3, 4
      %s35 = int_to_ptr.hbm [resolvable:$true] %s34
      %s36 = sshll.u32 [#allocation4], 4
      %s37 = int_to_ptr.vmem [resolvable:$true] %s36
      %42 = dma.hbm_to_vmem [thread:$0]  %s35, 1024, %s37, [#allocation5], 64, 64, 4
    $region17: #{_lambda_.11} parent=1 // pred_fallthru
      _
    // Predicated region
    $region18: #{_lambda_.11} parent=1 // pred_check
      _
    $region19: #{_lambda_.11} parent=1 // pred_check_branch
      %44 = sbr.rel (0) target = $region21
    $region20: #{_lambda_.11} parent=1 // pred_region
      _
    $region21: #{_lambda_.11} parent=1 // pred_fallthru
      _
    // Predicated region
    $region22: #{_lambda_.11} parent=1 // pred_check
      _
    $region23: #{_lambda_.11} parent=1 // pred_check_branch
      %46 = sbr.rel (0) target = $region25
    $region24: #{_lambda_.11} parent=1 // pred_region
      _
    $region25: #{_lambda_.11} parent=1 // pred_fallthru
      _
    // Predicated region
    $region26: #{_lambda_.11} parent=1 // pred_check
      _
    $region27: #{_lambda_.11} parent=1 // pred_check_branch
      %48 = sbr.rel (0) target = $region29
    $region28: #{_lambda_.11} parent=1 // pred_region
      %50 = dma.done [#allocation3], 3072
    $region29: #{_lambda_.11} parent=1 // pred_fallthru
      _
    // Predicated region
    $region30: #{_lambda_.11} parent=1 // pred_check
      _
    $region31: #{_lambda_.11} parent=1 // pred_check_branch
      %52 = sbr.rel (0) target = $region33
    $region32: #{_lambda_.11} parent=1 // pred_region
      %54 = dma.done [#allocation5], 1024
    $region33: #{_lambda_.11} parent=1 // pred_fallthru
      _
    %v55 = vld [vmem:[%s0] sm:$0xff]
    %v56 = vld [vmem:[%s0 + $0x8] sm:$0xff]
    %v57 = vpack.c.bf16 %v56, %v55
    %v58 = vld [vmem:[#allocation2] sm:$0xff]
    %v59 = vld [vmem:[#allocation2 + $0x8] sm:$0xf]
    %v60 = vld [vmem:[#allocation2 + $0xc] sm:$0xff]
    %v61 = vld [vmem:[#allocation2 + $0x14] sm:$0xf]
    %v62 = vld [vmem:[#allocation2 + $0x18] sm:$0xff]
    %v63 = vld [vmem:[#allocation2 + $0x20] sm:$0xf]
    %v64 = vld [vmem:[#allocation2 + $0x24] sm:$0xff]
    %v65 = vld [vmem:[#allocation2 + $0x2c] sm:$0xf]
    %v66 = vld [vmem:[#allocation2 + $0x30] sm:$0xff]
    %v67 = vld [vmem:[#allocation2 + $0x38] sm:$0xf]
    %v68 = vld [vmem:[#allocation2 + $0x3c] sm:$0xff]
    %v69 = vld [vmem:[#allocation2 + $0x44] sm:$0xf]
    %v70 = vld [vmem:[#allocation2 + $0x48] sm:$0xff]
    %v71 = vld [vmem:[#allocation2 + $0x50] sm:$0xf]
    %v72 = vld [vmem:[#allocation2 + $0x54] sm:$0xff]
    %v73 = vld [vmem:[#allocation2 + $0x5c] sm:$0xf]
    %v74 = vld [vmem:[#allocation2 + $0x60] sm:$0xff]
    %v75 = vld [vmem:[#allocation2 + $0x68] sm:$0xf]
    %v76 = vld [vmem:[#allocation2 + $0x6c] sm:$0xff]
    %v77 = vld [vmem:[#allocation2 + $0x74] sm:$0xf]
    %v78 = vld [vmem:[#allocation2 + $0x78] sm:$0xff]
    %v79 = vld [vmem:[#allocation2 + $0x80] sm:$0xf]
    %v80 = vld [vmem:[#allocation2 + $0x84] sm:$0xff]
    %v81 = vld [vmem:[#allocation2 + $0x8c] sm:$0xf]
    %v82 = vld [vmem:[#allocation2 + $0x90] sm:$0xff]
    %v83 = vld [vmem:[#allocation2 + $0x98] sm:$0xf]
    %v84 = vld [vmem:[#allocation2 + $0x9c] sm:$0xff]
    %v85 = vld [vmem:[#allocation2 + $0xa4] sm:$0xf]
    %v86 = vld [vmem:[#allocation2 + $0xa8] sm:$0xff]
    %v87 = vld [vmem:[#allocation2 + $0xb0] sm:$0xf]
    %v88 = vld [vmem:[#allocation2 + $0xb4] sm:$0xff]
    %v89 = vld [vmem:[#allocation2 + $0xbc] sm:$0xf]
    %v90 = vld [vmem:[%s2] sm:$0x7]
    %v92 = vperm.slane %v90, 0
    %v93 = vperm.slane %v90, 1
    %v94 = vperm.slane %v90, 2
    %v130 = vunpack.c.l.b16 %v58
    %v131 = vunpack.c.h.b16 %v58
    %v132 = vunpack.c.l.b16 %v59
    %v133 = vunpack.c.l.b16 %v60
    %v134 = vunpack.c.h.b16 %v60
    %v135 = vunpack.c.l.b16 %v61
    %v136 = vunpack.c.l.b16 %v62
    %v137 = vunpack.c.h.b16 %v62
    %v138 = vunpack.c.l.b16 %v63
    %v139 = vunpack.c.l.b16 %v64
    %v140 = vunpack.c.h.b16 %v64
    %v141 = vunpack.c.l.b16 %v65
    %v142 = vunpack.c.l.b16 %v66
    %v143 = vunpack.c.h.b16 %v66
    %v144 = vunpack.c.l.b16 %v67
    %v145 = vunpack.c.l.b16 %v68
    %v146 = vunpack.c.h.b16 %v68
    %v147 = vunpack.c.l.b16 %v69
    %v148 = vunpack.c.l.b16 %v70
    %v149 = vunpack.c.h.b16 %v70
    %v150 = vunpack.c.l.b16 %v71
    %v151 = vunpack.c.l.b16 %v72
    %v152 = vunpack.c.h.b16 %v72
    %v153 = vunpack.c.l.b16 %v73
    %v154 = vunpack.c.l.b16 %v74
    %v155 = vunpack.c.h.b16 %v74
    %v156 = vunpack.c.l.b16 %v75
    %v157 = vunpack.c.l.b16 %v76
    %v158 = vunpack.c.h.b16 %v76
    %v159 = vunpack.c.l.b16 %v77
    %v160 = vunpack.c.l.b16 %v78
    %v161 = vunpack.c.h.b16 %v78
    %v162 = vunpack.c.l.b16 %v79
    %v163 = vunpack.c.l.b16 %v80
    %v164 = vunpack.c.h.b16 %v80
    %v165 = vunpack.c.l.b16 %v81
    %v166 = vunpack.c.l.b16 %v82
    %v167 = vunpack.c.h.b16 %v82
    %v168 = vunpack.c.l.b16 %v83
    %v169 = vunpack.c.l.b16 %v84
    %v170 = vunpack.c.h.b16 %v84
    %v171 = vunpack.c.l.b16 %v85
    %v172 = vunpack.c.l.b16 %v86
    %v173 = vunpack.c.h.b16 %v86
    %v174 = vunpack.c.l.b16 %v87
    %v175 = vunpack.c.l.b16 %v88
    %v176 = vunpack.c.h.b16 %v88
    %v177 = vunpack.c.l.b16 %v89
    %v178 = vpack.c.b16 %v133, %v130
    %v179 = vpack.c.b16 %v134, %v131
    %v180 = vpack.c.b16 %v135, %v132
    %v181 = vpack.c.b16 %v139, %v136
    %v182 = vpack.c.b16 %v140, %v137
    %v183 = vpack.c.b16 %v141, %v138
    %v184 = vpack.c.b16 %v145, %v142
    %v185 = vpack.c.b16 %v146, %v143
    %v186 = vpack.c.b16 %v147, %v144
    %v187 = vpack.c.b16 %v151, %v148
    %v188 = vpack.c.b16 %v152, %v149
    %v189 = vpack.c.b16 %v153, %v150
    %v190 = vpack.c.b16 %v157, %v154
    %v191 = vpack.c.b16 %v158, %v155
    %v192 = vpack.c.b16 %v159, %v156
    %v193 = vpack.c.b16 %v163, %v160
    %v194 = vpack.c.b16 %v164, %v161
    %v195 = vpack.c.b16 %v165, %v162
    %v196 = vpack.c.b16 %v169, %v166
    %v197 = vpack.c.b16 %v170, %v167
    %v198 = vpack.c.b16 %v171, %v168
    %v199 = vpack.c.b16 %v175, %v172
    %v200 = vpack.c.b16 %v176, %v173
    %v201 = vpack.c.b16 %v177, %v174
    %226 = vmatpush.bf16.msra.mxu0 %v199
    %227 = vmatpush.bf16.msra.mxu0 %v196
    %228 = vmatpush.bf16.msra.mxu0 %v193
    %229 = vmatpush.bf16.msra.mxu0 %v190
    %230 = vmatpush.bf16.msra.mxu0 %v187
    %231 = vmatpush.bf16.msra.mxu0 %v184
    %232 = vmatpush.bf16.msra.mxu0 %v181
    %233 = vmatpush.bf16.msra.mxu0 %v178
    %234 = vmatmul.bf16.gmra.mxu0 %v57
    %v235 = vpop.f32.mrf.mxu0
    %v236 = vadd.f32 %v92, %v235
    %v237 = vpop.f32.mrf.mxu0
    %v238 = vadd.f32 %v92, %v237
    %239 = vdwg.mxu0
    %240 = vmatpush.bf16.msra.mxu0 %v200
    %241 = vmatpush.bf16.msra.mxu0 %v197
    %242 = vmatpush.bf16.msra.mxu0 %v194
    %243 = vmatpush.bf16.msra.mxu0 %v191
    %244 = vmatpush.bf16.msra.mxu0 %v188
    %245 = vmatpush.bf16.msra.mxu0 %v185
    %246 = vmatpush.bf16.msra.mxu0 %v182
    %247 = vmatpush.bf16.msra.mxu0 %v179
    %248 = vmatmul.bf16.gmra.mxu0 %v57
    %v249 = vpop.f32.mrf.mxu0
    %v250 = vadd.f32 %v93, %v249
    %v251 = vpop.f32.mrf.mxu0
    %v252 = vadd.f32 %v93, %v251
    %253 = vdwg.mxu0
    %254 = vmatpush.bf16.msra.mxu0 %v201
    %255 = vmatpush.bf16.msra.mxu0 %v198
    %256 = vmatpush.bf16.msra.mxu0 %v195
    %257 = vmatpush.bf16.msra.mxu0 %v192
    %258 = vmatpush.bf16.msra.mxu0 %v189
    %259 = vmatpush.bf16.msra.mxu0 %v186
    %260 = vmatpush.bf16.msra.mxu0 %v183
    %261 = vmatpush.bf16.msra.mxu0 %v180
    %262 = vmatmul.bf16.gmra.mxu0 %v57
    %v263 = vpop.f32.mrf.mxu0
    %v264 = vadd.f32 %v94, %v263
    %v265 = vpop.f32.mrf.mxu0
    %v266 = vadd.f32 %v94, %v265
    %267 = vdwg.mxu0
    %v268 = vtanh.pop %v236
    %v269 = vtanh.pop %v238
    %v270 = vmul.f32 %v268, %v250
    %v271 = vmul.f32 %v269, %v252
    %v272 = vrot.slane %v270, 4
    %v273 = vmax.f32 %v270, %v272
    %v274 = vrot.slane %v273, 2
    %v275 = vmax.f32 %v273, %v274
    %v276 = vrot.slane %v275, 1
    %v277 = vmax.f32 %v275, %v276
    %v278 = vrot.slane %v271, 4
    %v279 = vmax.f32 %v271, %v278
    %v280 = vrot.slane %v279, 2
    %v281 = vmax.f32 %v279, %v280
    %v282 = vrot.slane %v281, 1
    %v283 = vmax.f32 %v281, %v282
    %v284 = vsub.f32 %v270, %v277
    %v285 = vsub.f32 %v271, %v283
    %v286 = vmul.f32 %v284, 1.442695
    %v287 = vpow.pop %v286
    %v288 = vmul.f32 %v285, 1.442695
    %v289 = vpow.pop %v288
    %v290 = vrot.slane %v287, 4
    %v291 = vadd.f32 %v287, %v290
    %v292 = vrot.slane %v291, 2
    %v293 = vadd.f32 %v291, %v292
    %v294 = vrot.slane %v293, 1
    %v295 = vadd.f32 %v293, %v294
    %v296 = vrot.slane %v289, 4
    %v297 = vadd.f32 %v289, %v296
    %v298 = vrot.slane %v297, 2
    %v299 = vadd.f32 %v297, %v298
    %v300 = vrot.slane %v299, 1
    %v301 = vadd.f32 %v299, %v300
    %v302 = vrcp.pop %v295
    %v303 = vrcp.pop %v301
    %v304 = vmul.f32 %v287, %v302
    %v305 = vmul.f32 %v289, %v303
    %v306 = vmul.f32 %v304, %v264
    %v307 = vmul.f32 %v305, %v266
    %v308 = vpack.c.bf16 %v307, %v306
    %v309 = vld [vmem:[#allocation4] sm:$0xf]
    %v310 = vld [vmem:[#allocation4 + $0x4] sm:$0xf]
    %v311 = vld [vmem:[#allocation4 + $0x8] sm:$0xf]
    %v312 = vld [vmem:[#allocation4 + $0xc] sm:$0xf]
    %v313 = vld [vmem:[#allocation4 + $0x10] sm:$0xf]
    %v314 = vld [vmem:[#allocation4 + $0x14] sm:$0xf]
    %v315 = vld [vmem:[#allocation4 + $0x18] sm:$0xf]
    %v316 = vld [vmem:[#allocation4 + $0x1c] sm:$0xf]
    %v317 = vld [vmem:[#allocation4 + $0x20] sm:$0xf]
    %v318 = vld [vmem:[#allocation4 + $0x24] sm:$0xf]
    %v319 = vld [vmem:[#allocation4 + $0x28] sm:$0xf]
    %v320 = vld [vmem:[#allocation4 + $0x2c] sm:$0xf]
    %v321 = vld [vmem:[#allocation4 + $0x30] sm:$0xf]
    %v322 = vld [vmem:[#allocation4 + $0x34] sm:$0xf]
    %v323 = vld [vmem:[#allocation4 + $0x38] sm:$0xf]
    %v324 = vld [vmem:[#allocation4 + $0x3c] sm:$0xf]
    %v325 = vld [vmem:[%s4] sm:$0x1]
    %v327 = vperm.slane %v325, 0
    %v345 = vunpack.c.l.b16 %v309
    %v346 = vunpack.c.l.b16 %v310
    %v347 = vunpack.c.l.b16 %v311
    %v348 = vunpack.c.l.b16 %v312
    %v349 = vunpack.c.l.b16 %v313
    %v350 = vunpack.c.l.b16 %v314
    %v351 = vunpack.c.l.b16 %v315
    %v352 = vunpack.c.l.b16 %v316
    %v353 = vunpack.c.l.b16 %v317
    %v354 = vunpack.c.l.b16 %v318
    %v355 = vunpack.c.l.b16 %v319
    %v356 = vunpack.c.l.b16 %v320
    %v357 = vunpack.c.l.b16 %v321
    %v358 = vunpack.c.l.b16 %v322
    %v359 = vunpack.c.l.b16 %v323
    %v360 = vunpack.c.l.b16 %v324
    %v361 = vpack.c.b16 %v346, %v345
    %v362 = vpack.c.b16 %v348, %v347
    %v363 = vpack.c.b16 %v350, %v349
    %v364 = vpack.c.b16 %v352, %v351
    %v365 = vpack.c.b16 %v354, %v353
    %v366 = vpack.c.b16 %v356, %v355
    %v367 = vpack.c.b16 %v358, %v357
    %v368 = vpack.c.b16 %v360, %v359
    %377 = vmatpush.bf16.msra.mxu0 %v368
    %378 = vmatpush.bf16.msra.mxu0 %v367
    %379 = vmatpush.bf16.msra.mxu0 %v366
    %380 = vmatpush.bf16.msra.mxu0 %v365
    %381 = vmatpush.bf16.msra.mxu0 %v364
    %382 = vmatpush.bf16.msra.mxu0 %v363
    %383 = vmatpush.bf16.msra.mxu0 %v362
    %384 = vmatpush.bf16.msra.mxu0 %v361
    %385 = vmatmul.bf16.gmra.mxu0 %v308
    %v386 = vpop.f32.mrf.mxu0
    %v387 = vadd.f32 %v327, %v386
    %v388 = vpop.f32.mrf.mxu0
    %v389 = vadd.f32 %v327, %v388
    %390 = vdwg.mxu0
    %v391 = vld [vmem:[%s5] sm:$0x1]
    %v393 = vperm.slane %v391, 0
    %v395 = vmul.f32 %v393, %v387
    %v396 = vmul.f32 %v393, %v389
    %v397 = vadd.f32 %v55, %v395
    %v398 = vadd.f32 %v56, %v396
    %399 = vst [vmem:[%s6] sm:$0xff] %v397
    %400 = vst [vmem:[%s6 + $0x8] sm:$0xff] %v398
    // Predicated region
    $region34: #{_lambda_.11} parent=1 // pred_check
      _
    $region35: #{_lambda_.11} parent=1 // pred_check_branch
      %402 = sbr.rel (0) target = $region37
    $region36: #{_lambda_.11} parent=1 // pred_region
      _
    $region37: #{_lambda_.11} parent=1 // pred_fallthru
      _
    // Predicated region
    $region38: #{_lambda_.11} parent=1 // pred_check
      _
    $region39: #{_lambda_.11} parent=1 // pred_check_branch
      %404 = sbr.rel (0) target = $region41
    $region40: #{_lambda_.11} parent=1 // pred_region
      _
    $region41: #{_lambda_.11} parent=1 // pred_fallthru
      _
    %405 = vsyncpa [#allocation3], 1
    %406 = vsyncpa [#allocation5], 1

// kernel: _lambda_.10
$region0: #{_lambda_.10}
  #allocation0 [shape = 'u32[]', space=smem, size = 0x4, offset = 0x4, fixed_abs, tag = 'smem constant byte address 0x4 - core index']
  #allocation1 [shape = 'u32[72,128]{1,0:T(1,128)}', space=vmem, size = 0x9000, scoped, tag = 'internal scratch']
  %s0 = inlined_call_operand.vmem [shape: f32[2,8,128], index: 0, kind: input, shape index: {}]
  %s1 = inlined_call_operand.hbm [shape: bf16[128,512], index: 1, kind: input, shape index: {}]
  %s2 = inlined_call_operand.vmem [shape: f32[1,512], index: 2, kind: input, shape index: {}]
  %s3 = inlined_call_operand.hbm [shape: bf16[512,128], index: 3, kind: input, shape index: {}]
  %s4 = inlined_call_operand.hbm [shape: f32[1,128], index: 4, kind: input, shape index: {}]
  %s5 = inlined_call_operand.vmem [shape: f32[1,128], index: 5, kind: input, shape index: {}]
  %s6 = inlined_call_operand.vmem [shape: f32[2,8,128], index: 6, kind: output, shape index: {}]
  %s7 = sld [smem:[#allocation0]]
  $region46: #{_lambda_.10} parent=0
    _
  %s9 = ssub.s32 1, %s7
  %s10 = scalar_select 0, %s9, %s7
  $region1: #{_lambda_.10} parent=0
    #allocation2 [shape = 'u8[131072]{0}', space=vmem, size = 0x20000, scoped, tag = 'input window, operand 1, single buffered']
    #allocation3 [shape = 's32[1]{0}', space=sflag, size = 0x4, scoped, tag = 'scoped memory for _lambda_.10']
    #allocation4 [shape = 'u8[131072]{0}', space=vmem, size = 0x20000, scoped, tag = 'input window, operand 3, single buffered']
    #allocation5 [shape = 's32[1]{0}', space=sflag, size = 0x4, scoped, tag = 'scoped memory for _lambda_.10']
    #allocation6 [shape = 'u8[512]{0}', space=vmem, size = 0x400, scoped, tag = 'input window, operand 4, single buffered']
    %11 = vsyncpa [#allocation3], 0
    %12 = vsyncpa [#allocation5], 0
    // Predicated region
    $region2: #{_lambda_.10} parent=1 // pred_check
      _
    $region3: #{_lambda_.10} parent=1 // pred_check_branch
      %14 = sbr.rel (0) target = $region5
    $region4: #{_lambda_.10} parent=1 // pred_region
      _
    $region5: #{_lambda_.10} parent=1 // pred_fallthru
      _
    // Predicated region
    $region6: #{_lambda_.10} parent=1 // pred_check
      _
    $region7: #{_lambda_.10} parent=1 // pred_check_branch
      %16 = sbr.rel (0) target = $region9
    $region8: #{_lambda_.10} parent=1 // pred_region
      %18 = vsyncadd [#allocation3], 0
      %s19 = sshll.u32 %s1, 4
      %s20 = int_to_ptr.hbm [resolvable:$true] %s19
      %s21 = sshll.u32 [#allocation2], 4
      %s22 = int_to_ptr.vmem [resolvable:$true] %s21
      %27 = dma.hbm_to_vmem [thread:$0]  %s20, 4096, %s22, [#allocation3], 256, 256, 16
    $region9: #{_lambda_.10} parent=1 // pred_fallthru
      _
    // Predicated region
    $region10: #{_lambda_.10} parent=1 // pred_check
      _
    $region11: #{_lambda_.10} parent=1 // pred_check_branch
      %29 = sbr.rel (0) target = $region13
    $region12: #{_lambda_.10} parent=1 // pred_region
      _
    $region13: #{_lambda_.10} parent=1 // pred_fallthru
      _
    // Predicated region
    $region14: #{_lambda_.10} parent=1 // pred_check
      _
    $region15: #{_lambda_.10} parent=1 // pred_check_branch
      %31 = sbr.rel (0) target = $region17
    $region16: #{_lambda_.10} parent=1 // pred_region
      %33 = vsyncadd [#allocation5], 0
      %s34 = sshll.u32 %s3, 4
      %s35 = int_to_ptr.hbm [resolvable:$true] %s34
      %s36 = sshll.u32 [#allocation4], 4
      %s37 = int_to_ptr.vmem [resolvable:$true] %s36
      %42 = dma.hbm_to_vmem [thread:$0]  %s35, 4096, %s37, [#allocation5], 64, 64, 4
    $region17: #{_lambda_.10} parent=1 // pred_fallthru
      _
    // Predicated region
    $region18: #{_lambda_.10} parent=1 // pred_check
      _
    $region19: #{_lambda_.10} parent=1 // pred_check_branch
      %44 = sbr.rel (0) target = $region21
    $region20: #{_lambda_.10} parent=1 // pred_region
      %46 = vsyncadd [#allocation5], 0
      %s48 = sshll.u32 %s4, 4
      %s49 = int_to_ptr.hbm [resolvable:$true] %s48
      %s50 = sshll.u32 [#allocation6], 4
      %s51 = int_to_ptr.vmem [resolvable:$true] %s50
      %53 = dma.hbm_to_vmem [thread:$0]  %s49, 16, %s51, [#allocation5]
    $region21: #{_lambda_.10} parent=1 // pred_fallthru
      _
    // Predicated region
    $region22: #{_lambda_.10} parent=1 // pred_check
      _
    $region23: #{_lambda_.10} parent=1 // pred_check_branch
      %55 = sbr.rel (0) target = $region25
    $region24: #{_lambda_.10} parent=1 // pred_region
      _
    $region25: #{_lambda_.10} parent=1 // pred_fallthru
      _
    // Predicated region
    $region26: #{_lambda_.10} parent=1 // pred_check
      _
    $region27: #{_lambda_.10} parent=1 // pred_check_branch
      %57 = sbr.rel (0) target = $region29
    $region28: #{_lambda_.10} parent=1 // pred_region
      %59 = dma.done [#allocation3], 4096
    $region29: #{_lambda_.10} parent=1 // pred_fallthru
      _
    // Predicated region
    $region30: #{_lambda_.10} parent=1 // pred_check
      _
    $region31: #{_lambda_.10} parent=1 // pred_check_branch
      %61 = sbr.rel (0) target = $region33
    $region32: #{_lambda_.10} parent=1 // pred_region
      %63 = dma.done [#allocation5], 4096
    $region33: #{_lambda_.10} parent=1 // pred_fallthru
      _
    // Predicated region
    $region34: #{_lambda_.10} parent=1 // pred_check
      _
    $region35: #{_lambda_.10} parent=1 // pred_check_branch
      %65 = sbr.rel (0) target = $region37
    $region36: #{_lambda_.10} parent=1 // pred_region
      %67 = dma.done [#allocation5], 16
    $region37: #{_lambda_.10} parent=1 // pred_fallthru
      _
    %v68 = vld [vmem:[%s0] sm:$0xff]
    %v69 = vld [vmem:[%s0 + $0x8] sm:$0xff]
    %v70 = vpack.c.bf16 %v69, %v68
    %v71 = vld [vmem:[#allocation2] sm:$0xff]
    %v72 = vld [vmem:[#allocation2 + $0x8] sm:$0xff]
    %v73 = vld [vmem:[#allocation2 + $0x10] sm:$0xff]
    %v74 = vld [vmem:[#allocation2 + $0x18] sm:$0xff]
    %v75 = vld [vmem:[#allocation2 + $0x20] sm:$0xff]
    %v76 = vld [vmem:[#allocation2 + $0x28] sm:$0xff]
    %v77 = vld [vmem:[#allocation2 + $0x30] sm:$0xff]
    %v78 = vld [vmem:[#allocation2 + $0x38] sm:$0xff]
    %v79 = vld [vmem:[#allocation2 + $0x40] sm:$0xff]
    %v80 = vld [vmem:[#allocation2 + $0x48] sm:$0xff]
    %v81 = vld [vmem:[#allocation2 + $0x50] sm:$0xff]
    %v82 = vld [vmem:[#allocation2 + $0x58] sm:$0xff]
    %v83 = vld [vmem:[#allocation2 + $0x60] sm:$0xff]
    %v84 = vld [vmem:[#allocation2 + $0x68] sm:$0xff]
    %v85 = vld [vmem:[#allocation2 + $0x70] sm:$0xff]
    %v86 = vld [vmem:[#allocation2 + $0x78] sm:$0xff]
    %v87 = vld [vmem:[#allocation2 + $0x80] sm:$0xff]
    %v88 = vld [vmem:[#allocation2 + $0x88] sm:$0xff]
    %v89 = vld [vmem:[#allocation2 + $0x90] sm:$0xff]
    %v90 = vld [vmem:[#allocation2 + $0x98] sm:$0xff]
    %v91 = vld [vmem:[#allocation2 + $0xa0] sm:$0xff]
    %v92 = vld [vmem:[#allocation2 + $0xa8] sm:$0xff]
    %v93 = vld [vmem:[#allocation2 + $0xb0] sm:$0xff]
    %v94 = vld [vmem:[#allocation2 + $0xb8] sm:$0xff]
    %v95 = vld [vmem:[#allocation2 + $0xc0] sm:$0xff]
    %v96 = vld [vmem:[#allocation2 + $0xc8] sm:$0xff]
    %v97 = vld [vmem:[#allocation2 + $0xd0] sm:$0xff]
    %v98 = vld [vmem:[#allocation2 + $0xd8] sm:$0xff]
    %v99 = vld [vmem:[#allocation2 + $0xe0] sm:$0xff]
    %v100 = vld [vmem:[#allocation2 + $0xe8] sm:$0xff]
    %v101 = vld [vmem:[#allocation2 + $0xf0] sm:$0xff]
    %v102 = vld [vmem:[#allocation2 + $0xf8] sm:$0xff]
    %v103 = vld [vmem:[%s2] sm:$0xf]
    %v105 = vperm.slane %v103, 0
    %v106 = vperm.slane %v103, 1
    %v107 = vperm.slane %v103, 2
    %v108 = vperm.slane %v103, 3
    %v145 = vunpack.c.l.b16 %v71
    %v146 = vunpack.c.h.b16 %v71
    %v147 = vunpack.c.l.b16 %v72
    %v148 = vunpack.c.h.b16 %v72
    %v149 = vunpack.c.l.b16 %v73
    %v150 = vunpack.c.h.b16 %v73
    %v151 = vunpack.c.l.b16 %v74
    %v152 = vunpack.c.h.b16 %v74
    %v153 = vunpack.c.l.b16 %v75
    %v154 = vunpack.c.h.b16 %v75
    %v155 = vunpack.c.l.b16 %v76
    %v156 = vunpack.c.h.b16 %v76
    %v157 = vunpack.c.l.b16 %v77
    %v158 = vunpack.c.h.b16 %v77
    %v159 = vunpack.c.l.b16 %v78
    %v160 = vunpack.c.h.b16 %v78
    %v161 = vunpack.c.l.b16 %v79
    %v162 = vunpack.c.h.b16 %v79
    %v163 = vunpack.c.l.b16 %v80
    %v164 = vunpack.c.h.b16 %v80
    %v165 = vunpack.c.l.b16 %v81
    %v166 = vunpack.c.h.b16 %v81
    %v167 = vunpack.c.l.b16 %v82
    %v168 = vunpack.c.h.b16 %v82
    %v169 = vunpack.c.l.b16 %v83
    %v170 = vunpack.c.h.b16 %v83
    %v171 = vunpack.c.l.b16 %v84
    %v172 = vunpack.c.h.b16 %v84
    %v173 = vunpack.c.l.b16 %v85
    %v174 = vunpack.c.h.b16 %v85
    %v175 = vunpack.c.l.b16 %v86
    %v176 = vunpack.c.h.b16 %v86
    %v177 = vunpack.c.l.b16 %v87
    %v178 = vunpack.c.h.b16 %v87
    %v179 = vunpack.c.l.b16 %v88
    %v180 = vunpack.c.h.b16 %v88
    %v181 = vunpack.c.l.b16 %v89
    %v182 = vunpack.c.h.b16 %v89
    %v183 = vunpack.c.l.b16 %v90
    %v184 = vunpack.c.h.b16 %v90
    %v185 = vunpack.c.l.b16 %v91
    %v186 = vunpack.c.h.b16 %v91
    %v187 = vunpack.c.l.b16 %v92
    %v188 = vunpack.c.h.b16 %v92
    %v189 = vunpack.c.l.b16 %v93
    %v190 = vunpack.c.h.b16 %v93
    %v191 = vunpack.c.l.b16 %v94
    %v192 = vunpack.c.h.b16 %v94
    %v193 = vunpack.c.l.b16 %v95
    %v194 = vunpack.c.h.b16 %v95
    %v195 = vunpack.c.l.b16 %v96
    %v196 = vunpack.c.h.b16 %v96
    %v197 = vunpack.c.l.b16 %v97
    %v198 = vunpack.c.h.b16 %v97
    %v199 = vunpack.c.l.b16 %v98
    %v200 = vunpack.c.h.b16 %v98
    %v201 = vunpack.c.l.b16 %v99
    %v202 = vunpack.c.h.b16 %v99
    %v203 = vunpack.c.l.b16 %v100
    %v204 = vunpack.c.h.b16 %v100
    %v205 = vunpack.c.l.b16 %v101
    %v206 = vunpack.c.h.b16 %v101
    %v207 = vunpack.c.l.b16 %v102
    %v208 = vunpack.c.h.b16 %v102
    %v209 = vpack.c.b16 %v149, %v145
    %v210 = vpack.c.b16 %v150, %v146
    %v211 = vpack.c.b16 %v151, %v147
    %v212 = vpack.c.b16 %v152, %v148
    %v213 = vpack.c.b16 %v157, %v153
    %v214 = vpack.c.b16 %v158, %v154
    %v215 = vpack.c.b16 %v159, %v155
    %v216 = vpack.c.b16 %v160, %v156
    %v217 = vpack.c.b16 %v165, %v161
    %v218 = vpack.c.b16 %v166, %v162
    %v219 = vpack.c.b16 %v167, %v163
    %v220 = vpack.c.b16 %v168, %v164
    %v221 = vpack.c.b16 %v173, %v169
    %v222 = vpack.c.b16 %v174, %v170
    %v223 = vpack.c.b16 %v175, %v171
    %v224 = vpack.c.b16 %v176, %v172
    %v225 = vpack.c.b16 %v181, %v177
    %v226 = vpack.c.b16 %v182, %v178
    %v227 = vpack.c.b16 %v183, %v179
    %v228 = vpack.c.b16 %v184, %v180
    %v229 = vpack.c.b16 %v189, %v185
    %v230 = vpack.c.b16 %v190, %v186
    %v231 = vpack.c.b16 %v191, %v187
    %v232 = vpack.c.b16 %v192, %v188
    %v233 = vpack.c.b16 %v197, %v193
    %v234 = vpack.c.b16 %v198, %v194
    %v235 = vpack.c.b16 %v199, %v195
    %v236 = vpack.c.b16 %v200, %v196
    %v237 = vpack.c.b16 %v205, %v201
    %v238 = vpack.c.b16 %v206, %v202
    %v239 = vpack.c.b16 %v207, %v203
    %v240 = vpack.c.b16 %v208, %v204
    %273 = vmatpush.bf16.msra.mxu0 %v237
    %274 = vmatpush.bf16.msra.mxu0 %v233
    %275 = vmatpush.bf16.msra.mxu0 %v229
    %276 = vmatpush.bf16.msra.mxu0 %v225
    %277 = vmatpush.bf16.msra.mxu0 %v221
    %278 = vmatpush.bf16.msra.mxu0 %v217
    %279 = vmatpush.bf16.msra.mxu0 %v213
    %280 = vmatpush.bf16.msra.mxu0 %v209
    %281 = vmatmul.bf16.gmra.mxu0 %v70
    %v282 = vpop.f32.mrf.mxu0
    %v283 = vadd.f32 %v105, %v282
    %v284 = vpop.f32.mrf.mxu0
    %v285 = vadd.f32 %v105, %v284
    %286 = vdwg.mxu0
    %287 = vmatpush.bf16.msra.mxu0 %v238
    %288 = vmatpush.bf16.msra.mxu0 %v234
    %289 = vmatpush.bf16.msra.mxu0 %v230
    %290 = vmatpush.bf16.msra.mxu0 %v226
    %291 = vmatpush.bf16.msra.mxu0 %v222
    %292 = vmatpush.bf16.msra.mxu0 %v218
    %293 = vmatpush.bf16.msra.mxu0 %v214
    %294 = vmatpush.bf16.msra.mxu0 %v210
    %295 = vmatmul.bf16.gmra.mxu0 %v70
    %v296 = vpop.f32.mrf.mxu0
    %v297 = vadd.f32 %v106, %v296
    %v298 = vpop.f32.mrf.mxu0
    %v299 = vadd.f32 %v106, %v298
    %300 = vdwg.mxu0
    %301 = vmatpush.bf16.msra.mxu0 %v239
    %302 = vmatpush.bf16.msra.mxu0 %v235
    %303 = vmatpush.bf16.msra.mxu0 %v231
    %304 = vmatpush.bf16.msra.mxu0 %v227
    %305 = vmatpush.bf16.msra.mxu0 %v223
    %306 = vmatpush.bf16.msra.mxu0 %v219
    %307 = vmatpush.bf16.msra.mxu0 %v215
    %308 = vmatpush.bf16.msra.mxu0 %v211
    %309 = vmatmul.bf16.gmra.mxu0 %v70
    %v310 = vpop.f32.mrf.mxu0
    %v311 = vadd.f32 %v107, %v310
    %v312 = vpop.f32.mrf.mxu0
    %v313 = vadd.f32 %v107, %v312
    %314 = vdwg.mxu0
    %315 = vmatpush.bf16.msra.mxu0 %v240
    %316 = vmatpush.bf16.msra.mxu0 %v236
    %317 = vmatpush.bf16.msra.mxu0 %v232
    %318 = vmatpush.bf16.msra.mxu0 %v228
    %319 = vmatpush.bf16.msra.mxu0 %v224
    %320 = vmatpush.bf16.msra.mxu0 %v220
    %321 = vmatpush.bf16.msra.mxu0 %v216
    %322 = vmatpush.bf16.msra.mxu0 %v212
    %323 = vmatmul.bf16.gmra.mxu0 %v70
    %v324 = vpop.f32.mrf.mxu0
    %v325 = vadd.f32 %v108, %v324
    %v326 = vpop.f32.mrf.mxu0
    %v327 = vadd.f32 %v108, %v326
    %328 = vdwg.mxu0
    %v329 = vxor.u32 %v283, 2147483648
    %v330 = vxor.u32 %v297, 2147483648
    %v331 = vxor.u32 %v311, 2147483648
    %v332 = vxor.u32 %v325, 2147483648
    %v333 = vxor.u32 %v285, 2147483648
    %v334 = vxor.u32 %v299, 2147483648
    %v335 = vxor.u32 %v313, 2147483648
    %v336 = vxor.u32 %v327, 2147483648
    %v337 = vmul.f32 %v329, 1.442695
    %v338 = vpow.pop %v337
    %v339 = vmul.f32 %v330, 1.442695
    %v340 = vpow.pop %v339
    %v341 = vmul.f32 %v331, 1.442695
    %v342 = vpow.pop %v341
    %v343 = vmul.f32 %v332, 1.442695
    %v344 = vpow.pop %v343
    %v345 = vmul.f32 %v333, 1.442695
    %v346 = vpow.pop %v345
    %v347 = vmul.f32 %v334, 1.442695
    %v348 = vpow.pop %v347
    %v349 = vmul.f32 %v335, 1.442695
    %v350 = vpow.pop %v349
    %v351 = vmul.f32 %v336, 1.442695
    %v352 = vpow.pop %v351
    %v353 = vadd.f32 %v338, 1.0
    %v354 = vadd.f32 %v340, 1.0
    %v355 = vadd.f32 %v342, 1.0
    %v356 = vadd.f32 %v344, 1.0
    %v357 = vadd.f32 %v346, 1.0
    %v358 = vadd.f32 %v348, 1.0
    %v359 = vadd.f32 %v350, 1.0
    %v360 = vadd.f32 %v352, 1.0
    %v361 = vrcp.pop %v353
    %v362 = vmul.f32 %v353, %v361
    %v363 = vsub.f32 1.0, %v362
    %v364 = vmul.f32 %v361, %v363
    %v365 = vadd.f32 %v361, %v364
    %vm366 = vweird.f32 %v353
    %vm367 = vweird.f32 %v361
    %vm368 = vmor %vm366, %vm367
    %v369 = vsel %vm368, %v361, %v365
    %v370 = vand.u32 2147483647, %v353
    %vm371 = vcmp.eq.f32.partialorder %v370, 8.507059e+37
    %v372 = vand.u32 %v353, 2147483648
    %v373 = vor.u32 1.1754944e-38, %v372
    %v374 = vsel %vm371, %v373, %v369
    %v375 = vmul.f32 1.0, %v374
    %v376 = vrcp.pop %v354
    %v377 = vmul.f32 %v354, %v376
    %v378 = vsub.f32 1.0, %v377
    %v379 = vmul.f32 %v376, %v378
    %v380 = vadd.f32 %v376, %v379
    %vm381 = vweird.f32 %v354
    %vm382 = vweird.f32 %v376
    %vm383 = vmor %vm381, %vm382
    %v384 = vsel %vm383, %v376, %v380
    %v385 = vand.u32 2147483647, %v354
    %vm386 = vcmp.eq.f32.partialorder %v385, 8.507059e+37
    %v387 = vand.u32 %v354, 2147483648
    %v388 = vor.u32 1.1754944e-38, %v387
    %v389 = vsel %vm386, %v388, %v384
    %v390 = vmul.f32 1.0, %v389
    %v391 = vrcp.pop %v355
    %v392 = vmul.f32 %v355, %v391
    %v393 = vsub.f32 1.0, %v392
    %v394 = vmul.f32 %v391, %v393
    %v395 = vadd.f32 %v391, %v394
    %vm396 = vweird.f32 %v355
    %vm397 = vweird.f32 %v391
    %vm398 = vmor %vm396, %vm397
    %v399 = vsel %vm398, %v391, %v395
    %v400 = vand.u32 2147483647, %v355
    %vm401 = vcmp.eq.f32.partialorder %v400, 8.507059e+37
    %v402 = vand.u32 %v355, 2147483648
    %v403 = vor.u32 1.1754944e-38, %v402
    %v404 = vsel %vm401, %v403, %v399
    %v405 = vmul.f32 1.0, %v404
    %v406 = vrcp.pop %v356
    %v407 = vmul.f32 %v356, %v406
    %v408 = vsub.f32 1.0, %v407
    %v409 = vmul.f32 %v406, %v408
    %v410 = vadd.f32 %v406, %v409
    %vm411 = vweird.f32 %v356
    %vm412 = vweird.f32 %v406
    %vm413 = vmor %vm411, %vm412
    %v414 = vsel %vm413, %v406, %v410
    %v415 = vand.u32 2147483647, %v356
    %vm416 = vcmp.eq.f32.partialorder %v415, 8.507059e+37
    %v417 = vand.u32 %v356, 2147483648
    %v418 = vor.u32 1.1754944e-38, %v417
    %v419 = vsel %vm416, %v418, %v414
    %v420 = vmul.f32 1.0, %v419
    %v421 = vrcp.pop %v357
    %v422 = vmul.f32 %v357, %v421
    %v423 = vsub.f32 1.0, %v422
    %v424 = vmul.f32 %v421, %v423
    %v425 = vadd.f32 %v421, %v424
    %vm426 = vweird.f32 %v357
    %vm427 = vweird.f32 %v421
    %vm428 = vmor %vm426, %vm427
    %v429 = vsel %vm428, %v421, %v425
    %v430 = vand.u32 2147483647, %v357
    %vm431 = vcmp.eq.f32.partialorder %v430, 8.507059e+37
    %v432 = vand.u32 %v357, 2147483648
    %v433 = vor.u32 1.1754944e-38, %v432
    %v434 = vsel %vm431, %v433, %v429
    %v435 = vmul.f32 1.0, %v434
    %v436 = vrcp.pop %v358
    %v437 = vmul.f32 %v358, %v436
    %v438 = vsub.f32 1.0, %v437
    %v439 = vmul.f32 %v436, %v438
    %v440 = vadd.f32 %v436, %v439
    %vm441 = vweird.f32 %v358
    %vm442 = vweird.f32 %v436
    %vm443 = vmor %vm441, %vm442
    %v444 = vsel %vm443, %v436, %v440
    %v445 = vand.u32 2147483647, %v358
    %vm446 = vcmp.eq.f32.partialorder %v445, 8.507059e+37
    %v447 = vand.u32 %v358, 2147483648
    %v448 = vor.u32 1.1754944e-38, %v447
    %v449 = vsel %vm446, %v448, %v444
    %v450 = vmul.f32 1.0, %v449
    %v451 = vrcp.pop %v359
    %v452 = vmul.f32 %v359, %v451
    %v453 = vsub.f32 1.0, %v452
    %v454 = vmul.f32 %v451, %v453
    %v455 = vadd.f32 %v451, %v454
    %vm456 = vweird.f32 %v359
    %vm457 = vweird.f32 %v451
    %vm458 = vmor %vm456, %vm457
    %v459 = vsel %vm458, %v451, %v455
    %v460 = vand.u32 2147483647, %v359
    %vm461 = vcmp.eq.f32.partialorder %v460, 8.507059e+37
    %v462 = vand.u32 %v359, 2147483648
    %v463 = vor.u32 1.1754944e-38, %v462
    %v464 = vsel %vm461, %v463, %v459
    %v465 = vmul.f32 1.0, %v464
    %v466 = vrcp.pop %v360
    %v467 = vmul.f32 %v360, %v466
    %v468 = vsub.f32 1.0, %v467
    %v469 = vmul.f32 %v466, %v468
    %v470 = vadd.f32 %v466, %v469
    %vm471 = vweird.f32 %v360
    %vm472 = vweird.f32 %v466
    %vm473 = vmor %vm471, %vm472
    %v474 = vsel %vm473, %v466, %v470
    %v475 = vand.u32 2147483647, %v360
    %vm476 = vcmp.eq.f32.partialorder %v475, 8.507059e+37
    %v477 = vand.u32 %v360, 2147483648
    %v478 = vor.u32 1.1754944e-38, %v477
    %v479 = vsel %vm476, %v478, %v474
    %v480 = vmul.f32 1.0, %v479
    %v481 = vmul.f32 %v283, %v375
    %v482 = vmul.f32 %v297, %v390
    %v483 = vmul.f32 %v311, %v405
    %v484 = vmul.f32 %v325, %v420
    %v485 = vmul.f32 %v285, %v435
    %v486 = vmul.f32 %v299, %v450
    %v487 = vmul.f32 %v313, %v465
    %v488 = vmul.f32 %v327, %v480
    %v489 = vpack.c.bf16 %v485, %v481
    %v490 = vpack.c.bf16 %v486, %v482
    %v491 = vpack.c.bf16 %v487, %v483
    %v492 = vpack.c.bf16 %v488, %v484
    %v493 = vld [vmem:[#allocation4] sm:$0xf]
    %v494 = vld [vmem:[#allocation4 + $0x4] sm:$0xf]
    %v495 = vld [vmem:[#allocation4 + $0x8] sm:$0xf]
    %v496 = vld [vmem:[#allocation4 + $0xc] sm:$0xf]
    %v497 = vld [vmem:[#allocation4 + $0x10] sm:$0xf]
    %v498 = vld [vmem:[#allocation4 + $0x14] sm:$0xf]
    %v499 = vld [vmem:[#allocation4 + $0x18] sm:$0xf]
    %v500 = vld [vmem:[#allocation4 + $0x1c] sm:$0xf]
    %v501 = vld [vmem:[#allocation4 + $0x20] sm:$0xf]
    %v502 = vld [vmem:[#allocation4 + $0x24] sm:$0xf]
    %v503 = vld [vmem:[#allocation4 + $0x28] sm:$0xf]
    %v504 = vld [vmem:[#allocation4 + $0x2c] sm:$0xf]
    %v505 = vld [vmem:[#allocation4 + $0x30] sm:$0xf]
    %v506 = vld [vmem:[#allocation4 + $0x34] sm:$0xf]
    %v507 = vld [vmem:[#allocation4 + $0x38] sm:$0xf]
    %v508 = vld [vmem:[#allocation4 + $0x3c] sm:$0xf]
    %v509 = vld [vmem:[#allocation4 + $0x40] sm:$0xf]
    %v510 = vld [vmem:[#allocation4 + $0x44] sm:$0xf]
    %v511 = vld [vmem:[#allocation4 + $0x48] sm:$0xf]
    %v512 = vld [vmem:[#allocation4 + $0x4c] sm:$0xf]
    %v513 = vld [vmem:[#allocation4 + $0x50] sm:$0xf]
    %v514 = vld [vmem:[#allocation4 + $0x54] sm:$0xf]
    %v515 = vld [vmem:[#allocation4 + $0x58] sm:$0xf]
    %v516 = vld [vmem:[#allocation4 + $0x5c] sm:$0xf]
    %v517 = vld [vmem:[#allocation4 + $0x60] sm:$0xf]
    %v518 = vld [vmem:[#allocation4 + $0x64] sm:$0xf]
    %v519 = vld [vmem:[#allocation4 + $0x68] sm:$0xf]
    %v520 = vld [vmem:[#allocation4 + $0x6c] sm:$0xf]
    %v521 = vld [vmem:[#allocation4 + $0x70] sm:$0xf]
    %v522 = vld [vmem:[#allocation4 + $0x74] sm:$0xf]
    %v523 = vld [vmem:[#allocation4 + $0x78] sm:$0xf]
    %v524 = vld [vmem:[#allocation4 + $0x7c] sm:$0xf]
    %v525 = vld [vmem:[#allocation4 + $0x80] sm:$0xf]
    %v526 = vld [vmem:[#allocation4 + $0x84] sm:$0xf]
    %v527 = vld [vmem:[#allocation4 + $0x88] sm:$0xf]
    %v528 = vld [vmem:[#allocation4 + $0x8c] sm:$0xf]
    %v529 = vld [vmem:[#allocation4 + $0x90] sm:$0xf]
    %v530 = vld [vmem:[#allocation4 + $0x94] sm:$0xf]
    %v531 = vld [vmem:[#allocation4 + $0x98] sm:$0xf]
    %v532 = vld [vmem:[#allocation4 + $0x9c] sm:$0xf]
    %v533 = vld [vmem:[#allocation4 + $0xa0] sm:$0xf]
    %v534 = vld [vmem:[#allocation4 + $0xa4] sm:$0xf]
    %v535 = vld [vmem:[#allocation4 + $0xa8] sm:$0xf]
    %v536 = vld [vmem:[#allocation4 + $0xac] sm:$0xf]
    %v537 = vld [vmem:[#allocation4 + $0xb0] sm:$0xf]
    %v538 = vld [vmem:[#allocation4 + $0xb4] sm:$0xf]
    %v539 = vld [vmem:[#allocation4 + $0xb8] sm:$0xf]
    %v540 = vld [vmem:[#allocation4 + $0xbc] sm:$0xf]
    %v541 = vld [vmem:[#allocation4 + $0xc0] sm:$0xf]
    %v542 = vld [vmem:[#allocation4 + $0xc4] sm:$0xf]
    %v543 = vld [vmem:[#allocation4 + $0xc8] sm:$0xf]
    %v544 = vld [vmem:[#allocation4 + $0xcc] sm:$0xf]
    %v545 = vld [vmem:[#allocation4 + $0xd0] sm:$0xf]
    %v546 = vld [vmem:[#allocation4 + $0xd4] sm:$0xf]
    %v547 = vld [vmem:[#allocation4 + $0xd8] sm:$0xf]
    %v548 = vld [vmem:[#allocation4 + $0xdc] sm:$0xf]
    %v549 = vld [vmem:[#allocation4 + $0xe0] sm:$0xf]
    %v550 = vld [vmem:[#allocation4 + $0xe4] sm:$0xf]
    %v551 = vld [vmem:[#allocation4 + $0xe8] sm:$0xf]
    %v552 = vld [vmem:[#allocation4 + $0xec] sm:$0xf]
    %v553 = vld [vmem:[#allocation4 + $0xf0] sm:$0xf]
    %v554 = vld [vmem:[#allocation4 + $0xf4] sm:$0xf]
    %v555 = vld [vmem:[#allocation4 + $0xf8] sm:$0xf]
    %v556 = vld [vmem:[#allocation4 + $0xfc] sm:$0xf]
    %v557 = vld [vmem:[#allocation6] sm:$0x1]
    %v559 = vperm.slane %v557, 0
    %v625 = vunpack.c.l.b16 %v493
    %v626 = vunpack.c.l.b16 %v494
    %v627 = vunpack.c.l.b16 %v495
    %v628 = vunpack.c.l.b16 %v496
    %v629 = vunpack.c.l.b16 %v497
    %v630 = vunpack.c.l.b16 %v498
    %v631 = vunpack.c.l.b16 %v499
    %v632 = vunpack.c.l.b16 %v500
    %v633 = vunpack.c.l.b16 %v501
    %v634 = vunpack.c.l.b16 %v502
    %v635 = vunpack.c.l.b16 %v503
    %v636 = vunpack.c.l.b16 %v504
    %v637 = vunpack.c.l.b16 %v505
    %v638 = vunpack.c.l.b16 %v506
    %v639 = vunpack.c.l.b16 %v507
    %v640 = vunpack.c.l.b16 %v508
    %v641 = vunpack.c.l.b16 %v509
    %v642 = vunpack.c.l.b16 %v510
    %v643 = vunpack.c.l.b16 %v511
    %v644 = vunpack.c.l.b16 %v512
    %v645 = vunpack.c.l.b16 %v513
    %v646 = vunpack.c.l.b16 %v514
    %v647 = vunpack.c.l.b16 %v515
    %v648 = vunpack.c.l.b16 %v516
    %v649 = vunpack.c.l.b16 %v517
    %v650 = vunpack.c.l.b16 %v518
    %v651 = vunpack.c.l.b16 %v519
    %v652 = vunpack.c.l.b16 %v520
    %v653 = vunpack.c.l.b16 %v521
    %v654 = vunpack.c.l.b16 %v522
    %v655 = vunpack.c.l.b16 %v523
    %v656 = vunpack.c.l.b16 %v524
    %v657 = vunpack.c.l.b16 %v525
    %v658 = vunpack.c.l.b16 %v526
    %v659 = vunpack.c.l.b16 %v527
    %v660 = vunpack.c.l.b16 %v528
    %v661 = vunpack.c.l.b16 %v529
    %v662 = vunpack.c.l.b16 %v530
    %v663 = vunpack.c.l.b16 %v531
    %v664 = vunpack.c.l.b16 %v532
    %v665 = vunpack.c.l.b16 %v533
    %v666 = vunpack.c.l.b16 %v534
    %v667 = vunpack.c.l.b16 %v535
    %v668 = vunpack.c.l.b16 %v536
    %v669 = vunpack.c.l.b16 %v537
    %v670 = vunpack.c.l.b16 %v538
    %v671 = vunpack.c.l.b16 %v539
    %v672 = vunpack.c.l.b16 %v540
    %v673 = vunpack.c.l.b16 %v541
    %v674 = vunpack.c.l.b16 %v542
    %v675 = vunpack.c.l.b16 %v543
    %v676 = vunpack.c.l.b16 %v544
    %v677 = vunpack.c.l.b16 %v545
    %v678 = vunpack.c.l.b16 %v546
    %v679 = vunpack.c.l.b16 %v547
    %v680 = vunpack.c.l.b16 %v548
    %v681 = vunpack.c.l.b16 %v549
    %v682 = vunpack.c.l.b16 %v550
    %v683 = vunpack.c.l.b16 %v551
    %v684 = vunpack.c.l.b16 %v552
    %v685 = vunpack.c.l.b16 %v553
    %v686 = vunpack.c.l.b16 %v554
    %v687 = vunpack.c.l.b16 %v555
    %v688 = vunpack.c.l.b16 %v556
    %v689 = vpack.c.b16 %v626, %v625
    %v690 = vpack.c.b16 %v628, %v627
    %v691 = vpack.c.b16 %v630, %v629
    %v692 = vpack.c.b16 %v632, %v631
    %v693 = vpack.c.b16 %v634, %v633
    %v694 = vpack.c.b16 %v636, %v635
    %v695 = vpack.c.b16 %v638, %v637
    %v696 = vpack.c.b16 %v640, %v639
    %v697 = vpack.c.b16 %v642, %v641
    %v698 = vpack.c.b16 %v644, %v643
    %v699 = vpack.c.b16 %v646, %v645
    %v700 = vpack.c.b16 %v648, %v647
    %v701 = vpack.c.b16 %v650, %v649
    %v702 = vpack.c.b16 %v652, %v651
    %v703 = vpack.c.b16 %v654, %v653
    %v704 = vpack.c.b16 %v656, %v655
    %v705 = vpack.c.b16 %v658, %v657
    %v706 = vpack.c.b16 %v660, %v659
    %v707 = vpack.c.b16 %v662, %v661
    %v708 = vpack.c.b16 %v664, %v663
    %v709 = vpack.c.b16 %v666, %v665
    %v710 = vpack.c.b16 %v668, %v667
    %v711 = vpack.c.b16 %v670, %v669
    %v712 = vpack.c.b16 %v672, %v671
    %v713 = vpack.c.b16 %v674, %v673
    %v714 = vpack.c.b16 %v676, %v675
    %v715 = vpack.c.b16 %v678, %v677
    %v716 = vpack.c.b16 %v680, %v679
    %v717 = vpack.c.b16 %v682, %v681
    %v718 = vpack.c.b16 %v684, %v683
    %v719 = vpack.c.b16 %v686, %v685
    %v720 = vpack.c.b16 %v688, %v687
    %753 = vmatpush.bf16.msra.mxu0 %v696
    %754 = vmatpush.bf16.msra.mxu0 %v695
    %755 = vmatpush.bf16.msra.mxu0 %v694
    %756 = vmatpush.bf16.msra.mxu0 %v693
    %757 = vmatpush.bf16.msra.mxu0 %v692
    %758 = vmatpush.bf16.msra.mxu0 %v691
    %759 = vmatpush.bf16.msra.mxu0 %v690
    %760 = vmatpush.bf16.msra.mxu0 %v689
    %761 = vmatmul.bf16.gmra.mxu0 %v489
    %v762 = vpop.f32.mrf.mxu0
    %v763 = vadd.f32 %v559, %v762
    %v764 = vpop.f32.mrf.mxu0
    %v765 = vadd.f32 %v559, %v764
    %766 = vdwg.mxu0
    %767 = vmatpush.bf16.msra.mxu0 %v704
    %768 = vmatpush.bf16.msra.mxu0 %v703
    %769 = vmatpush.bf16.msra.mxu0 %v702
    %770 = vmatpush.bf16.msra.mxu0 %v701
    %771 = vmatpush.bf16.msra.mxu0 %v700
    %772 = vmatpush.bf16.msra.mxu0 %v699
    %773 = vmatpush.bf16.msra.mxu0 %v698
    %774 = vmatpush.bf16.msra.mxu0 %v697
    %775 = vmatmul.bf16.gmra.mxu0 %v490
    %v776 = vpop.f32.mrf.mxu0
    %v777 = vadd.f32 %v763, %v776
    %v778 = vpop.f32.mrf.mxu0
    %v779 = vadd.f32 %v765, %v778
    %780 = vdwg.mxu0
    %781 = vmatpush.bf16.msra.mxu0 %v712
    %782 = vmatpush.bf16.msra.mxu0 %v711
    %783 = vmatpush.bf16.msra.mxu0 %v710
    %784 = vmatpush.bf16.msra.mxu0 %v709
    %785 = vmatpush.bf16.msra.mxu0 %v708
    %786 = vmatpush.bf16.msra.mxu0 %v707
    %787 = vmatpush.bf16.msra.mxu0 %v706
    %788 = vmatpush.bf16.msra.mxu0 %v705
    %789 = vmatmul.bf16.gmra.mxu0 %v491
    %v790 = vpop.f32.mrf.mxu0
    %v791 = vadd.f32 %v777, %v790
    %v792 = vpop.f32.mrf.mxu0
    %v793 = vadd.f32 %v779, %v792
    %794 = vdwg.mxu0
    %795 = vmatpush.bf16.msra.mxu0 %v720
    %796 = vmatpush.bf16.msra.mxu0 %v719
    %797 = vmatpush.bf16.msra.mxu0 %v718
    %798 = vmatpush.bf16.msra.mxu0 %v717
    %799 = vmatpush.bf16.msra.mxu0 %v716
    %800 = vmatpush.bf16.msra.mxu0 %v715
    %801 = vmatpush.bf16.msra.mxu0 %v714
    %802 = vmatpush.bf16.msra.mxu0 %v713
    %803 = vmatmul.bf16.gmra.mxu0 %v492
    %v804 = vpop.f32.mrf.mxu0
    %v805 = vadd.f32 %v791, %v804
    %v806 = vpop.f32.mrf.mxu0
    %v807 = vadd.f32 %v793, %v806
    %808 = vdwg.mxu0
    %v809 = vpack.c.bf16 %v807, %v805
    %810 = vmatpush.bf16.msra.mxu0 %v237
    %811 = vmatpush.bf16.msra.mxu0 %v233
    %812 = vmatpush.bf16.msra.mxu0 %v229
    %813 = vmatpush.bf16.msra.mxu0 %v225
    %814 = vmatpush.bf16.msra.mxu0 %v221
    %815 = vmatpush.bf16.msra.mxu0 %v217
    %816 = vmatpush.bf16.msra.mxu0 %v213
    %817 = vmatpush.bf16.msra.mxu0 %v209
    %818 = vmatmul.bf16.gmra.mxu0 %v809
    %v819 = vpop.f32.mrf.mxu0
    %v820 = vadd.f32 %v105, %v819
    %v821 = vpop.f32.mrf.mxu0
    %v822 = vadd.f32 %v105, %v821
    %823 = vdwg.mxu0
    %824 = vmatpush.bf16.msra.mxu0 %v238
    %825 = vmatpush.bf16.msra.mxu0 %v234
    %826 = vmatpush.bf16.msra.mxu0 %v230
    %827 = vmatpush.bf16.msra.mxu0 %v226
    %828 = vmatpush.bf16.msra.mxu0 %v222
    %829 = vmatpush.bf16.msra.mxu0 %v218
    %830 = vmatpush.bf16.msra.mxu0 %v214
    %831 = vmatpush.bf16.msra.mxu0 %v210
    %832 = vmatmul.bf16.gmra.mxu0 %v809
    %v833 = vpop.f32.mrf.mxu0
    %v834 = vadd.f32 %v106, %v833
    %v835 = vpop.f32.mrf.mxu0
    %v836 = vadd.f32 %v106, %v835
    %837 = vdwg.mxu0
    %838 = vmatpush.bf16.msra.mxu0 %v239
    %839 = vmatpush.bf16.msra.mxu0 %v235
    %840 = vmatpush.bf16.msra.mxu0 %v231
    %841 = vmatpush.bf16.msra.mxu0 %v227
    %842 = vmatpush.bf16.msra.mxu0 %v223
    %843 = vmatpush.bf16.msra.mxu0 %v219
    %844 = vmatpush.bf16.msra.mxu0 %v215
    %845 = vmatpush.bf16.msra.mxu0 %v211
    %846 = vmatmul.bf16.gmra.mxu0 %v809
    %v847 = vpop.f32.mrf.mxu0
    %v848 = vadd.f32 %v107, %v847
    %v849 = vpop.f32.mrf.mxu0
    %v850 = vadd.f32 %v107, %v849
    %851 = vdwg.mxu0
    %852 = vmatpush.bf16.msra.mxu0 %v240
    %853 = vmatpush.bf16.msra.mxu0 %v236
    %854 = vmatpush.bf16.msra.mxu0 %v232
    %855 = vmatpush.bf16.msra.mxu0 %v228
    %856 = vmatpush.bf16.msra.mxu0 %v224
    %857 = vmatpush.bf16.msra.mxu0 %v220
    %858 = vmatpush.bf16.msra.mxu0 %v216
    %859 = vmatpush.bf16.msra.mxu0 %v212
    %860 = vmatmul.bf16.gmra.mxu0 %v809
    %v861 = vpop.f32.mrf.mxu0
    %v862 = vadd.f32 %v108, %v861
    %v863 = vpop.f32.mrf.mxu0
    %v864 = vadd.f32 %v108, %v863
    %865 = vdwg.mxu0
    %v866 = vxor.u32 %v820, 2147483648
    %v867 = vxor.u32 %v834, 2147483648
    %v868 = vxor.u32 %v848, 2147483648
    %v869 = vxor.u32 %v862, 2147483648
    %v870 = vxor.u32 %v822, 2147483648
    %v871 = vxor.u32 %v836, 2147483648
    %v872 = vxor.u32 %v850, 2147483648
    %v873 = vxor.u32 %v864, 2147483648
    %v874 = vmul.f32 %v866, 1.442695
    %v875 = vpow.pop %v874
    %v876 = vmul.f32 %v867, 1.442695
    %v877 = vpow.pop %v876
    %v878 = vmul.f32 %v868, 1.442695
    %v879 = vpow.pop %v878
    %v880 = vmul.f32 %v869, 1.442695
    %v881 = vpow.pop %v880
    %v882 = vmul.f32 %v870, 1.442695
    %v883 = vpow.pop %v882
    %v884 = vmul.f32 %v871, 1.442695
    %v885 = vpow.pop %v884
    %v886 = vmul.f32 %v872, 1.442695
    %v887 = vpow.pop %v886
    %v888 = vmul.f32 %v873, 1.442695
    %v889 = vpow.pop %v888
    %v890 = vadd.f32 %v875, 1.0
    %v891 = vadd.f32 %v877, 1.0
    %v892 = vadd.f32 %v879, 1.0
    %v893 = vadd.f32 %v881, 1.0
    %v894 = vadd.f32 %v883, 1.0
    %v895 = vadd.f32 %v885, 1.0
    %v896 = vadd.f32 %v887, 1.0
    %v897 = vadd.f32 %v889, 1.0
    %v898 = vrcp.pop %v890
    %v899 = vmul.f32 %v890, %v898
    %v900 = vsub.f32 1.0, %v899
    %v901 = vmul.f32 %v898, %v900
    %v902 = vadd.f32 %v898, %v901
    %vm903 = vweird.f32 %v890
    %vm904 = vweird.f32 %v898
    %vm905 = vmor %vm903, %vm904
    %v906 = vsel %vm905, %v898, %v902
    %v907 = vand.u32 2147483647, %v890
    %vm908 = vcmp.eq.f32.partialorder %v907, 8.507059e+37
    %v909 = vand.u32 %v890, 2147483648
    %v910 = vor.u32 1.1754944e-38, %v909
    %v911 = vsel %vm908, %v910, %v906
    %v912 = vmul.f32 1.0, %v911
    %v913 = vrcp.pop %v891
    %v914 = vmul.f32 %v891, %v913
    %v915 = vsub.f32 1.0, %v914
    %v916 = vmul.f32 %v913, %v915
    %v917 = vadd.f32 %v913, %v916
    %vm918 = vweird.f32 %v891
    %vm919 = vweird.f32 %v913
    %vm920 = vmor %vm918, %vm919
    %v921 = vsel %vm920, %v913, %v917
    %v922 = vand.u32 2147483647, %v891
    %vm923 = vcmp.eq.f32.partialorder %v922, 8.507059e+37
    %v924 = vand.u32 %v891, 2147483648
    %v925 = vor.u32 1.1754944e-38, %v924
    %v926 = vsel %vm923, %v925, %v921
    %v927 = vmul.f32 1.0, %v926
    %v928 = vrcp.pop %v892
    %v929 = vmul.f32 %v892, %v928
    %v930 = vsub.f32 1.0, %v929
    %v931 = vmul.f32 %v928, %v930
    %v932 = vadd.f32 %v928, %v931
    %vm933 = vweird.f32 %v892
    %vm934 = vweird.f32 %v928
    %vm935 = vmor %vm933, %vm934
    %v936 = vsel %vm935, %v928, %v932
    %v937 = vand.u32 2147483647, %v892
    %vm938 = vcmp.eq.f32.partialorder %v937, 8.507059e+37
    %v939 = vand.u32 %v892, 2147483648
    %v940 = vor.u32 1.1754944e-38, %v939
    %v941 = vsel %vm938, %v940, %v936
    %v942 = vmul.f32 1.0, %v941
    %v943 = vrcp.pop %v893
    %v944 = vmul.f32 %v893, %v943
    %v945 = vsub.f32 1.0, %v944
    %v946 = vmul.f32 %v943, %v945
    %v947 = vadd.f32 %v943, %v946
    %vm948 = vweird.f32 %v893
    %vm949 = vweird.f32 %v943
    %vm950 = vmor %vm948, %vm949
    %v951 = vsel %vm950, %v943, %v947
    %v952 = vand.u32 2147483647, %v893
    %vm953 = vcmp.eq.f32.partialorder %v952, 8.507059e+37
    %v954 = vand.u32 %v893, 2147483648
    %v955 = vor.u32 1.1754944e-38, %v954
    %v956 = vsel %vm953, %v955, %v951
    %v957 = vmul.f32 1.0, %v956
    %v958 = vrcp.pop %v894
    %v959 = vmul.f32 %v894, %v958
    %v960 = vsub.f32 1.0, %v959
    %v961 = vmul.f32 %v958, %v960
    %v962 = vadd.f32 %v958, %v961
    %vm963 = vweird.f32 %v894
    %vm964 = vweird.f32 %v958
    %vm965 = vmor %vm963, %vm964
    %v966 = vsel %vm965, %v958, %v962
    %v967 = vand.u32 2147483647, %v894
    %vm968 = vcmp.eq.f32.partialorder %v967, 8.507059e+37
    %v969 = vand.u32 %v894, 2147483648
    %v970 = vor.u32 1.1754944e-38, %v969
    %v971 = vsel %vm968, %v970, %v966
    %v972 = vmul.f32 1.0, %v971
    %v973 = vrcp.pop %v895
    %v974 = vmul.f32 %v895, %v973
    %v975 = vsub.f32 1.0, %v974
    %v976 = vmul.f32 %v973, %v975
    %v977 = vadd.f32 %v973, %v976
    %vm978 = vweird.f32 %v895
    %vm979 = vweird.f32 %v973
    %vm980 = vmor %vm978, %vm979
    %v981 = vsel %vm980, %v973, %v977
    %v982 = vand.u32 2147483647, %v895
    %vm983 = vcmp.eq.f32.partialorder %v982, 8.507059e+37
    %v984 = vand.u32 %v895, 2147483648
    %v985 = vor.u32 1.1754944e-38, %v984
    %v986 = vsel %vm983, %v985, %v981
    %v987 = vmul.f32 1.0, %v986
    %v988 = vrcp.pop %v896
    %v989 = vmul.f32 %v896, %v988
    %v990 = vsub.f32 1.0, %v989
    %v991 = vmul.f32 %v988, %v990
    %v992 = vadd.f32 %v988, %v991
    %vm993 = vweird.f32 %v896
    %vm994 = vweird.f32 %v988
    %vm995 = vmor %vm993, %vm994
    %v996 = vsel %vm995, %v988, %v992
    %v997 = vand.u32 2147483647, %v896
    %vm998 = vcmp.eq.f32.partialorder %v997, 8.507059e+37
    %v999 = vand.u32 %v896, 2147483648
    %v1000 = vor.u32 1.1754944e-38, %v999
    %v1001 = vsel %vm998, %v1000, %v996
    %v1002 = vmul.f32 1.0, %v1001
    %v1003 = vrcp.pop %v897
    %v1004 = vmul.f32 %v897, %v1003
    %v1005 = vsub.f32 1.0, %v1004
    %v1006 = vmul.f32 %v1003, %v1005
    %v1007 = vadd.f32 %v1003, %v1006
    %vm1008 = vweird.f32 %v897
    %vm1009 = vweird.f32 %v1003
    %vm1010 = vmor %vm1008, %vm1009
    %v1011 = vsel %vm1010, %v1003, %v1007
    %v1012 = vand.u32 2147483647, %v897
    %vm1013 = vcmp.eq.f32.partialorder %v1012, 8.507059e+37
    %v1014 = vand.u32 %v897, 2147483648
    %v1015 = vor.u32 1.1754944e-38, %v1014
    %v1016 = vsel %vm1013, %v1015, %v1011
    %v1017 = vmul.f32 1.0, %v1016
    %v1018 = vmul.f32 %v820, %v912
    %v1019 = vmul.f32 %v834, %v927
    %v1020 = vmul.f32 %v848, %v942
    %v1021 = vmul.f32 %v862, %v957
    %v1022 = vmul.f32 %v822, %v972
    %v1023 = vmul.f32 %v836, %v987
    %v1024 = vmul.f32 %v850, %v1002
    %v1025 = vmul.f32 %v864, %v1017
    %v1026 = vpack.c.bf16 %v1022, %v1018
    %v1027 = vpack.c.bf16 %v1023, %v1019
    %v1028 = vpack.c.bf16 %v1024, %v1020
    %v1029 = vpack.c.bf16 %v1025, %v1021
    %1030 = vmatpush.bf16.msra.mxu0 %v696
    %1031 = vmatpush.bf16.msra.mxu0 %v695
    %1032 = vmatpush.bf16.msra.mxu0 %v694
    %1033 = vmatpush.bf16.msra.mxu0 %v693
    %1034 = vmatpush.bf16.msra.mxu0 %v692
    %1035 = vmatpush.bf16.msra.mxu0 %v691
    %1036 = vmatpush.bf16.msra.mxu0 %v690
    %1037 = vmatpush.bf16.msra.mxu0 %v689
    %1038 = vmatmul.bf16.gmra.mxu0 %v1026
    %v1039 = vpop.f32.mrf.mxu0
    %v1040 = vadd.f32 %v559, %v1039
    %v1041 = vpop.f32.mrf.mxu0
    %v1042 = vadd.f32 %v559, %v1041
    %1043 = vdwg.mxu0
    %1044 = vmatpush.bf16.msra.mxu0 %v704
    %1045 = vmatpush.bf16.msra.mxu0 %v703
    %1046 = vmatpush.bf16.msra.mxu0 %v702
    %1047 = vmatpush.bf16.msra.mxu0 %v701
    %1048 = vmatpush.bf16.msra.mxu0 %v700
    %1049 = vmatpush.bf16.msra.mxu0 %v699
    %1050 = vmatpush.bf16.msra.mxu0 %v698
    %1051 = vmatpush.bf16.msra.mxu0 %v697
    %1052 = vmatmul.bf16.gmra.mxu0 %v1027
    %v1053 = vpop.f32.mrf.mxu0
    %v1054 = vadd.f32 %v1040, %v1053
    %v1055 = vpop.f32.mrf.mxu0
    %v1056 = vadd.f32 %v1042, %v1055
    %1057 = vdwg.mxu0
    %1058 = vmatpush.bf16.msra.mxu0 %v712
    %1059 = vmatpush.bf16.msra.mxu0 %v711
    %1060 = vmatpush.bf16.msra.mxu0 %v710
    %1061 = vmatpush.bf16.msra.mxu0 %v709
    %1062 = vmatpush.bf16.msra.mxu0 %v708
    %1063 = vmatpush.bf16.msra.mxu0 %v707
    %1064 = vmatpush.bf16.msra.mxu0 %v706
    %1065 = vmatpush.bf16.msra.mxu0 %v705
    %1066 = vmatmul.bf16.gmra.mxu0 %v1028
    %v1067 = vpop.f32.mrf.mxu0
    %v1068 = vadd.f32 %v1054, %v1067
    %v1069 = vpop.f32.mrf.mxu0
    %v1070 = vadd.f32 %v1056, %v1069
    %1071 = vdwg.mxu0
    %1072 = vmatpush.bf16.msra.mxu0 %v720
    %1073 = vmatpush.bf16.msra.mxu0 %v719
    %1074 = vmatpush.bf16.msra.mxu0 %v718
    %1075 = vmatpush.bf16.msra.mxu0 %v717
    %1076 = vmatpush.bf16.msra.mxu0 %v716
    %1077 = vmatpush.bf16.msra.mxu0 %v715
    %1078 = vmatpush.bf16.msra.mxu0 %v714
    %1079 = vmatpush.bf16.msra.mxu0 %v713
    %1080 = vmatmul.bf16.gmra.mxu0 %v1029
    %v1081 = vpop.f32.mrf.mxu0
    %v1082 = vadd.f32 %v1068, %v1081
    %v1083 = vpop.f32.mrf.mxu0
    %v1084 = vadd.f32 %v1070, %v1083
    %1085 = vdwg.mxu0
    %v1086 = vld [vmem:[%s5] sm:$0x1]
    %v1088 = vperm.slane %v1086, 0
    %v1090 = vmul.f32 %v1088, %v1082
    %v1091 = vmul.f32 %v1088, %v1084
    %v1092 = vadd.f32 %v68, %v1090
    %v1093 = vadd.f32 %v69, %v1091
    %1094 = vst [vmem:[%s6] sm:$0xff] %v1092
    %1095 = vst [vmem:[%s6 + $0x8] sm:$0xff] %v1093
    // Predicated region
    $region38: #{_lambda_.10} parent=1 // pred_check
      _
    $region39: #{_lambda_.10} parent=1 // pred_check_branch
      %1097 = sbr.rel (0) target = $region41
    $region40: #{_lambda_.10} parent=1 // pred_region
      _
    $region41: #{_lambda_.10} parent=1 // pred_fallthru
      _
    // Predicated region
    $region42: #{_lambda_.10} parent=1 // pred_check
      _
    $region43: #{_lambda_.10} parent=1 // pred_check_branch
      %1099 = sbr.rel (0) target = $region45
    $region44: #{_lambda_.10} parent=1 // pred_region
      _
    $region45: #{_lambda_.10} parent=1 // pred_fallthru
      _
    %1100 = vsyncpa [#allocation3], 1
    %1101 = vsyncpa [#allocation5], 1

// kernel: _lambda_.12
$region0: #{_lambda_.12}
  #allocation0 [shape = 'u32[]', space=smem, size = 0x4, offset = 0x4, fixed_abs, tag = 'smem constant byte address 0x4 - core index']
  #allocation1 [shape = 'u32[72,128]{1,0:T(1,128)}', space=vmem, size = 0x9000, scoped, tag = 'internal scratch']
  %s0 = inlined_call_operand.vmem [shape: f32[2,8,128], index: 0, kind: input, shape index: {}]
  %s1 = inlined_call_operand.hbm [shape: bf16[128,384], index: 1, kind: input, shape index: {}]
  %s2 = inlined_call_operand.hbm [shape: f32[1,384], index: 2, kind: input, shape index: {}]
  %s3 = inlined_call_operand.hbm [shape: bf16[128,128], index: 3, kind: input, shape index: {}]
  %s4 = inlined_call_operand.hbm [shape: f32[1,128], index: 4, kind: input, shape index: {}]
  %s5 = inlined_call_operand.vmem [shape: f32[1,128], index: 5, kind: input, shape index: {}]
  %s6 = inlined_call_operand.vmem [shape: f32[2,8,128], index: 6, kind: output, shape index: {}]
  %s7 = sld [smem:[#allocation0]]
  $region50: #{_lambda_.12} parent=0
    _
  %s9 = ssub.s32 1, %s7
  %s10 = scalar_select 0, %s9, %s7
  $region1: #{_lambda_.12} parent=0
    #allocation2 [shape = 'u8[98304]{0}', space=vmem, size = 0x18000, scoped, tag = 'input window, operand 1, single buffered']
    #allocation3 [shape = 's32[1]{0}', space=sflag, size = 0x4, scoped, tag = 'scoped memory for _lambda_.12']
    #allocation4 [shape = 'u8[1536]{0}', space=vmem, size = 0x800, scoped, tag = 'input window, operand 2, single buffered']
    #allocation5 [shape = 's32[1]{0}', space=sflag, size = 0x4, scoped, tag = 'scoped memory for _lambda_.12']
    #allocation6 [shape = 'u8[32768]{0}', space=vmem, size = 0x8000, scoped, tag = 'input window, operand 3, single buffered']
    #allocation7 [shape = 'u8[512]{0}', space=vmem, size = 0x400, scoped, tag = 'input window, operand 4, single buffered']
    #allocation8 [shape = 's32[1]{0}', space=sflag, size = 0x4, scoped, tag = 'scoped memory for _lambda_.12']
    %11 = vsyncpa [#allocation3], 0
    %12 = vsyncpa [#allocation5], 0
    %13 = vsyncpa [#allocation8], 0
    // Predicated region
    $region2: #{_lambda_.12} parent=1 // pred_check
      _
    $region3: #{_lambda_.12} parent=1 // pred_check_branch
      %15 = sbr.rel (0) target = $region5
    $region4: #{_lambda_.12} parent=1 // pred_region
      _
    $region5: #{_lambda_.12} parent=1 // pred_fallthru
      _
    // Predicated region
    $region6: #{_lambda_.12} parent=1 // pred_check
      _
    $region7: #{_lambda_.12} parent=1 // pred_check_branch
      %17 = sbr.rel (0) target = $region9
    $region8: #{_lambda_.12} parent=1 // pred_region
      %19 = vsyncadd [#allocation3], 0
      %s20 = sshll.u32 %s1, 4
      %s21 = int_to_ptr.hbm [resolvable:$true] %s20
      %s22 = sshll.u32 [#allocation2], 4
      %s23 = int_to_ptr.vmem [resolvable:$true] %s22
      %28 = dma.hbm_to_vmem [thread:$0]  %s21, 3072, %s23, [#allocation3], 192, 192, 12
    $region9: #{_lambda_.12} parent=1 // pred_fallthru
      _
    // Predicated region
    $region10: #{_lambda_.12} parent=1 // pred_check
      _
    $region11: #{_lambda_.12} parent=1 // pred_check_branch
      %30 = sbr.rel (0) target = $region13
    $region12: #{_lambda_.12} parent=1 // pred_region
      %32 = vsyncadd [#allocation5], 0
      %s34 = sshll.u32 %s2, 4
      %s35 = int_to_ptr.hbm [resolvable:$true] %s34
      %s36 = sshll.u32 [#allocation4], 4
      %s37 = int_to_ptr.vmem [resolvable:$true] %s36
      %39 = dma.hbm_to_vmem [thread:$0]  %s35, 48, %s37, [#allocation5]
    $region13: #{_lambda_.12} parent=1 // pred_fallthru
      _
    // Predicated region
    $region14: #{_lambda_.12} parent=1 // pred_check
      _
    $region15: #{_lambda_.12} parent=1 // pred_check_branch
      %41 = sbr.rel (0) target = $region17
    $region16: #{_lambda_.12} parent=1 // pred_region
      %43 = vsyncadd [#allocation5], 0
      %s44 = sshll.u32 %s3, 4
      %s45 = int_to_ptr.hbm [resolvable:$true] %s44
      %s46 = sshll.u32 [#allocation6], 4
      %s47 = int_to_ptr.vmem [resolvable:$true] %s46
      %52 = dma.hbm_to_vmem [thread:$0]  %s45, 1024, %s47, [#allocation5], 64, 64, 4
    $region17: #{_lambda_.12} parent=1 // pred_fallthru
      _
    // Predicated region
    $region18: #{_lambda_.12} parent=1 // pred_check
      _
    $region19: #{_lambda_.12} parent=1 // pred_check_branch
      %54 = sbr.rel (0) target = $region21
    $region20: #{_lambda_.12} parent=1 // pred_region
      %56 = vsyncadd [#allocation8], 0
      %s58 = sshll.u32 %s4, 4
      %s59 = int_to_ptr.hbm [resolvable:$true] %s58
      %s60 = sshll.u32 [#allocation7], 4
      %s61 = int_to_ptr.vmem [resolvable:$true] %s60
      %63 = dma.hbm_to_vmem [thread:$0]  %s59, 16, %s61, [#allocation8]
    $region21: #{_lambda_.12} parent=1 // pred_fallthru
      _
    // Predicated region
    $region22: #{_lambda_.12} parent=1 // pred_check
      _
    $region23: #{_lambda_.12} parent=1 // pred_check_branch
      %65 = sbr.rel (0) target = $region25
    $region24: #{_lambda_.12} parent=1 // pred_region
      _
    $region25: #{_lambda_.12} parent=1 // pred_fallthru
      _
    // Predicated region
    $region26: #{_lambda_.12} parent=1 // pred_check
      _
    $region27: #{_lambda_.12} parent=1 // pred_check_branch
      %67 = sbr.rel (0) target = $region29
    $region28: #{_lambda_.12} parent=1 // pred_region
      %69 = dma.done [#allocation3], 3072
    $region29: #{_lambda_.12} parent=1 // pred_fallthru
      _
    // Predicated region
    $region30: #{_lambda_.12} parent=1 // pred_check
      _
    $region31: #{_lambda_.12} parent=1 // pred_check_branch
      %71 = sbr.rel (0) target = $region33
    $region32: #{_lambda_.12} parent=1 // pred_region
      %73 = dma.done [#allocation5], 48
    $region33: #{_lambda_.12} parent=1 // pred_fallthru
      _
    // Predicated region
    $region34: #{_lambda_.12} parent=1 // pred_check
      _
    $region35: #{_lambda_.12} parent=1 // pred_check_branch
      %75 = sbr.rel (0) target = $region37
    $region36: #{_lambda_.12} parent=1 // pred_region
      %77 = dma.done [#allocation5], 1024
    $region37: #{_lambda_.12} parent=1 // pred_fallthru
      _
    // Predicated region
    $region38: #{_lambda_.12} parent=1 // pred_check
      _
    $region39: #{_lambda_.12} parent=1 // pred_check_branch
      %79 = sbr.rel (0) target = $region41
    $region40: #{_lambda_.12} parent=1 // pred_region
      %81 = dma.done [#allocation8], 16
    $region41: #{_lambda_.12} parent=1 // pred_fallthru
      _
    %v83 = vld [vmem:[%s0] sm:$0xff]
    %v84 = vld [vmem:[%s0 + $0x8] sm:$0xff]
    %v85 = vpack.c.bf16 %v84, %v83
    %v86 = vld [vmem:[#allocation2] sm:$0xff]
    %v87 = vld [vmem:[#allocation2 + $0x8] sm:$0xf]
    %v88 = vld [vmem:[#allocation2 + $0xc] sm:$0xff]
    %v89 = vld [vmem:[#allocation2 + $0x14] sm:$0xf]
    %v90 = vld [vmem:[#allocation2 + $0x18] sm:$0xff]
    %v91 = vld [vmem:[#allocation2 + $0x20] sm:$0xf]
    %v92 = vld [vmem:[#allocation2 + $0x24] sm:$0xff]
    %v93 = vld [vmem:[#allocation2 + $0x2c] sm:$0xf]
    %v94 = vld [vmem:[#allocation2 + $0x30] sm:$0xff]
    %v95 = vld [vmem:[#allocation2 + $0x38] sm:$0xf]
    %v96 = vld [vmem:[#allocation2 + $0x3c] sm:$0xff]
    %v97 = vld [vmem:[#allocation2 + $0x44] sm:$0xf]
    %v98 = vld [vmem:[#allocation2 + $0x48] sm:$0xff]
    %v99 = vld [vmem:[#allocation2 + $0x50] sm:$0xf]
    %v100 = vld [vmem:[#allocation2 + $0x54] sm:$0xff]
    %v101 = vld [vmem:[#allocation2 + $0x5c] sm:$0xf]
    %v102 = vld [vmem:[#allocation2 + $0x60] sm:$0xff]
    %v103 = vld [vmem:[#allocation2 + $0x68] sm:$0xf]
    %v104 = vld [vmem:[#allocation2 + $0x6c] sm:$0xff]
    %v105 = vld [vmem:[#allocation2 + $0x74] sm:$0xf]
    %v106 = vld [vmem:[#allocation2 + $0x78] sm:$0xff]
    %v107 = vld [vmem:[#allocation2 + $0x80] sm:$0xf]
    %v108 = vld [vmem:[#allocation2 + $0x84] sm:$0xff]
    %v109 = vld [vmem:[#allocation2 + $0x8c] sm:$0xf]
    %v110 = vld [vmem:[#allocation2 + $0x90] sm:$0xff]
    %v111 = vld [vmem:[#allocation2 + $0x98] sm:$0xf]
    %v112 = vld [vmem:[#allocation2 + $0x9c] sm:$0xff]
    %v113 = vld [vmem:[#allocation2 + $0xa4] sm:$0xf]
    %v114 = vld [vmem:[#allocation2 + $0xa8] sm:$0xff]
    %v115 = vld [vmem:[#allocation2 + $0xb0] sm:$0xf]
    %v116 = vld [vmem:[#allocation2 + $0xb4] sm:$0xff]
    %v117 = vld [vmem:[#allocation2 + $0xbc] sm:$0xf]
    %v118 = vld [vmem:[#allocation4] sm:$0x7]
    %v120 = vperm.slane %v118, 0
    %v121 = vperm.slane %v118, 1
    %v122 = vperm.slane %v118, 2
    %v158 = vunpack.c.l.b16 %v86
    %v159 = vunpack.c.h.b16 %v86
    %v160 = vunpack.c.l.b16 %v87
    %v161 = vunpack.c.l.b16 %v88
    %v162 = vunpack.c.h.b16 %v88
    %v163 = vunpack.c.l.b16 %v89
    %v164 = vunpack.c.l.b16 %v90
    %v165 = vunpack.c.h.b16 %v90
    %v166 = vunpack.c.l.b16 %v91
    %v167 = vunpack.c.l.b16 %v92
    %v168 = vunpack.c.h.b16 %v92
    %v169 = vunpack.c.l.b16 %v93
    %v170 = vunpack.c.l.b16 %v94
    %v171 = vunpack.c.h.b16 %v94
    %v172 = vunpack.c.l.b16 %v95
    %v173 = vunpack.c.l.b16 %v96
    %v174 = vunpack.c.h.b16 %v96
    %v175 = vunpack.c.l.b16 %v97
    %v176 = vunpack.c.l.b16 %v98
    %v177 = vunpack.c.h.b16 %v98
    %v178 = vunpack.c.l.b16 %v99
    %v179 = vunpack.c.l.b16 %v100
    %v180 = vunpack.c.h.b16 %v100
    %v181 = vunpack.c.l.b16 %v101
    %v182 = vunpack.c.l.b16 %v102
    %v183 = vunpack.c.h.b16 %v102
    %v184 = vunpack.c.l.b16 %v103
    %v185 = vunpack.c.l.b16 %v104
    %v186 = vunpack.c.h.b16 %v104
    %v187 = vunpack.c.l.b16 %v105
    %v188 = vunpack.c.l.b16 %v106
    %v189 = vunpack.c.h.b16 %v106
    %v190 = vunpack.c.l.b16 %v107
    %v191 = vunpack.c.l.b16 %v108
    %v192 = vunpack.c.h.b16 %v108
    %v193 = vunpack.c.l.b16 %v109
    %v194 = vunpack.c.l.b16 %v110
    %v195 = vunpack.c.h.b16 %v110
    %v196 = vunpack.c.l.b16 %v111
    %v197 = vunpack.c.l.b16 %v112
    %v198 = vunpack.c.h.b16 %v112
    %v199 = vunpack.c.l.b16 %v113
    %v200 = vunpack.c.l.b16 %v114
    %v201 = vunpack.c.h.b16 %v114
    %v202 = vunpack.c.l.b16 %v115
    %v203 = vunpack.c.l.b16 %v116
    %v204 = vunpack.c.h.b16 %v116
    %v205 = vunpack.c.l.b16 %v117
    %v206 = vpack.c.b16 %v161, %v158
    %v207 = vpack.c.b16 %v162, %v159
    %v208 = vpack.c.b16 %v163, %v160
    %v209 = vpack.c.b16 %v167, %v164
    %v210 = vpack.c.b16 %v168, %v165
    %v211 = vpack.c.b16 %v169, %v166
    %v212 = vpack.c.b16 %v173, %v170
    %v213 = vpack.c.b16 %v174, %v171
    %v214 = vpack.c.b16 %v175, %v172
    %v215 = vpack.c.b16 %v179, %v176
    %v216 = vpack.c.b16 %v180, %v177
    %v217 = vpack.c.b16 %v181, %v178
    %v218 = vpack.c.b16 %v185, %v182
    %v219 = vpack.c.b16 %v186, %v183
    %v220 = vpack.c.b16 %v187, %v184
    %v221 = vpack.c.b16 %v191, %v188
    %v222 = vpack.c.b16 %v192, %v189
    %v223 = vpack.c.b16 %v193, %v190
    %v224 = vpack.c.b16 %v197, %v194
    %v225 = vpack.c.b16 %v198, %v195
    %v226 = vpack.c.b16 %v199, %v196
    %v227 = vpack.c.b16 %v203, %v200
    %v228 = vpack.c.b16 %v204, %v201
    %v229 = vpack.c.b16 %v205, %v202
    %254 = vmatpush.bf16.msra.mxu0 %v227
    %255 = vmatpush.bf16.msra.mxu0 %v224
    %256 = vmatpush.bf16.msra.mxu0 %v221
    %257 = vmatpush.bf16.msra.mxu0 %v218
    %258 = vmatpush.bf16.msra.mxu0 %v215
    %259 = vmatpush.bf16.msra.mxu0 %v212
    %260 = vmatpush.bf16.msra.mxu0 %v209
    %261 = vmatpush.bf16.msra.mxu0 %v206
    %262 = vmatmul.bf16.gmra.mxu0 %v85
    %v263 = vpop.f32.mrf.mxu0
    %v264 = vadd.f32 %v120, %v263
    %v265 = vpop.f32.mrf.mxu0
    %v266 = vadd.f32 %v120, %v265
    %267 = vdwg.mxu0
    %268 = vmatpush.bf16.msra.mxu0 %v228
    %269 = vmatpush.bf16.msra.mxu0 %v225
    %270 = vmatpush.bf16.msra.mxu0 %v222
    %271 = vmatpush.bf16.msra.mxu0 %v219
    %272 = vmatpush.bf16.msra.mxu0 %v216
    %273 = vmatpush.bf16.msra.mxu0 %v213
    %274 = vmatpush.bf16.msra.mxu0 %v210
    %275 = vmatpush.bf16.msra.mxu0 %v207
    %276 = vmatmul.bf16.gmra.mxu0 %v85
    %v277 = vpop.f32.mrf.mxu0
    %v278 = vadd.f32 %v121, %v277
    %v279 = vpop.f32.mrf.mxu0
    %v280 = vadd.f32 %v121, %v279
    %281 = vdwg.mxu0
    %282 = vmatpush.bf16.msra.mxu0 %v229
    %283 = vmatpush.bf16.msra.mxu0 %v226
    %284 = vmatpush.bf16.msra.mxu0 %v223
    %285 = vmatpush.bf16.msra.mxu0 %v220
    %286 = vmatpush.bf16.msra.mxu0 %v217
    %287 = vmatpush.bf16.msra.mxu0 %v214
    %288 = vmatpush.bf16.msra.mxu0 %v211
    %289 = vmatpush.bf16.msra.mxu0 %v208
    %290 = vmatmul.bf16.gmra.mxu0 %v85
    %v291 = vpop.f32.mrf.mxu0
    %v292 = vadd.f32 %v122, %v291
    %v293 = vpop.f32.mrf.mxu0
    %v294 = vadd.f32 %v122, %v293
    %295 = vdwg.mxu0
    %v296 = vmul.f32 %v264, 0.17677669
    %v297 = vmul.f32 %v266, 0.17677669
    %vm298 = vcmask 261120
    %v300 = vsel %vm298, %v296, 0
    %v303 = vsel %vm298, %v278, 0
    %305 = vmatpush.xpose.msra.mxu0 0.0
    %306 = vmatpush.xpose.msra.mxu0 0.0
    %307 = vmatpush.xpose.msra.mxu0 0.0
    %308 = vmatpush.xpose.msra.mxu0 0.0
    %309 = vmatpush.xpose.msra.mxu0 0.0
    %310 = vmatpush.xpose.msra.mxu0 0.0
    %311 = vmatpush.xpose.msra.mxu0 0.0
    %312 = vmatpush.xpose.msra.mxu0 0.0
    %313 = vmatpush.xpose.msra.mxu0 0.0
    %314 = vmatpush.xpose.msra.mxu0 0.0
    %315 = vmatpush.xpose.msra.mxu0 0.0
    %316 = vmatpush.xpose.msra.mxu0 0.0
    %317 = vmatpush.xpose.msra.mxu0 0.0
    %318 = vmatpush.xpose.msra.mxu0 0.0
    %319 = vmatpush.xpose.msra.mxu0 0.0
    %320 = vmatpush.xpose.msra.mxu0 %v303
    %321 = vmatmul.f32.gmra.mxu0 %v300
    %v322 = vpop.f32.mrf.mxu0
    %v323 = vadd.f32 0.0, %v322
    %324 = vdwg.mxu0
    %v326 = vsel %vm298, %v297, 0
    %v329 = vsel %vm298, %v280, 0
    %331 = vmatpush.xpose.msra.mxu0 0.0
    %332 = vmatpush.xpose.msra.mxu0 0.0
    %333 = vmatpush.xpose.msra.mxu0 0.0
    %334 = vmatpush.xpose.msra.mxu0 0.0
    %335 = vmatpush.xpose.msra.mxu0 0.0
    %336 = vmatpush.xpose.msra.mxu0 0.0
    %337 = vmatpush.xpose.msra.mxu0 0.0
    %338 = vmatpush.xpose.msra.mxu0 0.0
    %339 = vmatpush.xpose.msra.mxu0 0.0
    %340 = vmatpush.xpose.msra.mxu0 0.0
    %341 = vmatpush.xpose.msra.mxu0 0.0
    %342 = vmatpush.xpose.msra.mxu0 0.0
    %343 = vmatpush.xpose.msra.mxu0 0.0
    %344 = vmatpush.xpose.msra.mxu0 0.0
    %345 = vmatpush.xpose.msra.mxu0 0.0
    %346 = vmatpush.xpose.msra.mxu0 %v329
    %347 = vmatmul.f32.gmra.mxu0 %v326
    %v348 = vpop.f32.mrf.mxu0
    %v349 = vadd.f32 0.0, %v348
    %350 = vdwg.mxu0
    %vm351 = vcmask 64512
    %v352 = vsel %vm351, %v323, -inf
    %353 = vmax.xlane.f32.xlu0 %v352
    %v354 = vpop.xlane.xlu0 %353
    %v355 = vsel %vm351, %v349, -inf
    %356 = vmax.xlane.f32.xlu0 %v355
    %v357 = vpop.xlane.xlu0 %356
    %v358 = vsub.f32 %v323, %v354
    %v359 = vsub.f32 %v349, %v357
    %v360 = vmul.f32 %v358, 1.442695
    %v361 = vpow.pop %v360
    %v362 = vmul.f32 %v359, 1.442695
    %v363 = vpow.pop %v362
    %v364 = vsel %vm351, %v361, 0.0
    %365 = vadd.xlane.f32.xlu0 %v364
    %v366 = vpop.xlane.xlu0 %365
    %v367 = vsel %vm351, %v363, 0.0
    %368 = vadd.xlane.f32.xlu0 %v367
    %v369 = vpop.xlane.xlu0 %368
    %v370 = vrcp.pop %v366
    %v371 = vrcp.pop %v369
    %v372 = vmul.f32 %v361, %v370
    %v373 = vmul.f32 %v363, %v371
    %v375 = vsel %vm351, %v372, 0
    %377 = vmatpush.msra.mxu0 0.0
    %378 = vmatpush.msra.mxu0 0.0
    %379 = vmatpush.msra.mxu0 0.0
    %380 = vmatpush.msra.mxu0 0.0
    %381 = vmatpush.msra.mxu0 0.0
    %382 = vmatpush.msra.mxu0 0.0
    %383 = vmatpush.msra.mxu0 0.0
    %384 = vmatpush.msra.mxu0 0.0
    %385 = vmatpush.msra.mxu0 0.0
    %386 = vmatpush.msra.mxu0 0.0
    %387 = vmatpush.msra.mxu0 0.0
    %388 = vmatpush.msra.mxu0 0.0
    %389 = vmatpush.msra.mxu0 0.0
    %390 = vmatpush.msra.mxu0 0.0
    %391 = vmatpush.msra.mxu0 0.0
    %392 = vmatpush.msra.mxu0 %v292
    %393 = vmatmul.f32.gmra.mxu0 %v375
    %v394 = vpop.f32.mrf.mxu0
    %v395 = vadd.f32 0.0, %v394
    %396 = vdwg.mxu0
    %v398 = vsel %vm351, %v373, 0
    %400 = vmatpush.msra.mxu0 0.0
    %401 = vmatpush.msra.mxu0 0.0
    %402 = vmatpush.msra.mxu0 0.0
    %403 = vmatpush.msra.mxu0 0.0
    %404 = vmatpush.msra.mxu0 0.0
    %405 = vmatpush.msra.mxu0 0.0
    %406 = vmatpush.msra.mxu0 0.0
    %407 = vmatpush.msra.mxu0 0.0
    %408 = vmatpush.msra.mxu0 0.0
    %409 = vmatpush.msra.mxu0 0.0
    %410 = vmatpush.msra.mxu0 0.0
    %411 = vmatpush.msra.mxu0 0.0
    %412 = vmatpush.msra.mxu0 0.0
    %413 = vmatpush.msra.mxu0 0.0
    %414 = vmatpush.msra.mxu0 0.0
    %415 = vmatpush.msra.mxu0 %v294
    %416 = vmatmul.f32.gmra.mxu0 %v398
    %v417 = vpop.f32.mrf.mxu0
    %v418 = vadd.f32 0.0, %v417
    %419 = vdwg.mxu0
    %v420 = vpack.c.bf16 %v418, %v395
    %v421 = vld [vmem:[#allocation6] sm:$0xf]
    %v422 = vld [vmem:[#allocation6 + $0x4] sm:$0xf]
    %v423 = vld [vmem:[#allocation6 + $0x8] sm:$0xf]
    %v424 = vld [vmem:[#allocation6 + $0xc] sm:$0xf]
    %425 = vrot.lane.b32.xlu0 %v296, 96
    %v426 = vpop.permute.xlu0 %425
    %427 = vrot.lane.b32.xlu0 %v278, 96
    %v428 = vpop.permute.xlu0 %427
    %v429 = vsel %vm298, %v426, 0
    %v431 = vsel %vm298, %v428, 0
    %433 = vmatpush.xpose.msra.mxu0 0.0
    %434 = vmatpush.xpose.msra.mxu0 0.0
    %435 = vmatpush.xpose.msra.mxu0 0.0
    %436 = vmatpush.xpose.msra.mxu0 0.0
    %437 = vmatpush.xpose.msra.mxu0 0.0
    %438 = vmatpush.xpose.msra.mxu0 0.0
    %439 = vmatpush.xpose.msra.mxu0 0.0
    %440 = vmatpush.xpose.msra.mxu0 0.0
    %441 = vmatpush.xpose.msra.mxu0 0.0
    %442 = vmatpush.xpose.msra.mxu0 0.0
    %443 = vmatpush.xpose.msra.mxu0 0.0
    %444 = vmatpush.xpose.msra.mxu0 0.0
    %445 = vmatpush.xpose.msra.mxu0 0.0
    %446 = vmatpush.xpose.msra.mxu0 0.0
    %447 = vmatpush.xpose.msra.mxu0 0.0
    %448 = vmatpush.xpose.msra.mxu0 %v431
    %449 = vmatmul.f32.gmra.mxu0 %v429
    %v450 = vpop.f32.mrf.mxu0
    %v451 = vadd.f32 0.0, %v450
    %452 = vdwg.mxu0
    %453 = vrot.lane.b32.xlu0 %v297, 96
    %v454 = vpop.permute.xlu0 %453
    %455 = vrot.lane.b32.xlu0 %v280, 96
    %v456 = vpop.permute.xlu0 %455
    %v457 = vsel %vm298, %v454, 0
    %v459 = vsel %vm298, %v456, 0
    %461 = vmatpush.xpose.msra.mxu0 0.0
    %462 = vmatpush.xpose.msra.mxu0 0.0
    %463 = vmatpush.xpose.msra.mxu0 0.0
    %464 = vmatpush.xpose.msra.mxu0 0.0
    %465 = vmatpush.xpose.msra.mxu0 0.0
    %466 = vmatpush.xpose.msra.mxu0 0.0
    %467 = vmatpush.xpose.msra.mxu0 0.0
    %468 = vmatpush.xpose.msra.mxu0 0.0
    %469 = vmatpush.xpose.msra.mxu0 0.0
    %470 = vmatpush.xpose.msra.mxu0 0.0
    %471 = vmatpush.xpose.msra.mxu0 0.0
    %472 = vmatpush.xpose.msra.mxu0 0.0
    %473 = vmatpush.xpose.msra.mxu0 0.0
    %474 = vmatpush.xpose.msra.mxu0 0.0
    %475 = vmatpush.xpose.msra.mxu0 0.0
    %476 = vmatpush.xpose.msra.mxu0 %v459
    %477 = vmatmul.f32.gmra.mxu0 %v457
    %v478 = vpop.f32.mrf.mxu0
    %v479 = vadd.f32 0.0, %v478
    %480 = vdwg.mxu0
    %v481 = vsel %vm351, %v451, -inf
    %482 = vmax.xlane.f32.xlu0 %v481
    %v483 = vpop.xlane.xlu0 %482
    %v484 = vsel %vm351, %v479, -inf
    %485 = vmax.xlane.f32.xlu0 %v484
    %v486 = vpop.xlane.xlu0 %485
    %v487 = vsub.f32 %v451, %v483
    %v488 = vsub.f32 %v479, %v486
    %v489 = vmul.f32 %v487, 1.442695
    %v490 = vpow.pop %v489
    %v491 = vmul.f32 %v488, 1.442695
    %v492 = vpow.pop %v491
    %v493 = vsel %vm351, %v490, 0.0
    %494 = vadd.xlane.f32.xlu0 %v493
    %v495 = vpop.xlane.xlu0 %494
    %v496 = vsel %vm351, %v492, 0.0
    %497 = vadd.xlane.f32.xlu0 %v496
    %v498 = vpop.xlane.xlu0 %497
    %v499 = vrcp.pop %v495
    %v500 = vrcp.pop %v498
    %v501 = vmul.f32 %v490, %v499
    %v502 = vmul.f32 %v492, %v500
    %504 = vrot.lane.b32.xlu0 %v292, 96
    %v505 = vpop.permute.xlu0 %504
    %v508 = vsel %vm351, %v501, 0
    %510 = vmatpush.msra.mxu0 0.0
    %511 = vmatpush.msra.mxu0 0.0
    %512 = vmatpush.msra.mxu0 0.0
    %513 = vmatpush.msra.mxu0 0.0
    %514 = vmatpush.msra.mxu0 0.0
    %515 = vmatpush.msra.mxu0 0.0
    %516 = vmatpush.msra.mxu0 0.0
    %517 = vmatpush.msra.mxu0 0.0
    %518 = vmatpush.msra.mxu0 0.0
    %519 = vmatpush.msra.mxu0 0.0
    %520 = vmatpush.msra.mxu0 0.0
    %521 = vmatpush.msra.mxu0 0.0
    %522 = vmatpush.msra.mxu0 0.0
    %523 = vmatpush.msra.mxu0 0.0
    %524 = vmatpush.msra.mxu0 0.0
    %525 = vmatpush.msra.mxu0 %v505
    %526 = vmatmul.f32.gmra.mxu0 %v508
    %v527 = vpop.f32.mrf.mxu0
    %v528 = vadd.f32 0.0, %v527
    %529 = vdwg.mxu0
    %531 = vrot.lane.b32.xlu0 %v294, 96
    %v532 = vpop.permute.xlu0 %531
    %v535 = vsel %vm351, %v502, 0
    %537 = vmatpush.msra.mxu0 0.0
    %538 = vmatpush.msra.mxu0 0.0
    %539 = vmatpush.msra.mxu0 0.0
    %540 = vmatpush.msra.mxu0 0.0
    %541 = vmatpush.msra.mxu0 0.0
    %542 = vmatpush.msra.mxu0 0.0
    %543 = vmatpush.msra.mxu0 0.0
    %544 = vmatpush.msra.mxu0 0.0
    %545 = vmatpush.msra.mxu0 0.0
    %546 = vmatpush.msra.mxu0 0.0
    %547 = vmatpush.msra.mxu0 0.0
    %548 = vmatpush.msra.mxu0 0.0
    %549 = vmatpush.msra.mxu0 0.0
    %550 = vmatpush.msra.mxu0 0.0
    %551 = vmatpush.msra.mxu0 0.0
    %552 = vmatpush.msra.mxu0 %v532
    %553 = vmatmul.f32.gmra.mxu0 %v535
    %v554 = vpop.f32.mrf.mxu0
    %v555 = vadd.f32 0.0, %v554
    %556 = vdwg.mxu0
    %v557 = vpack.c.bf16 %v555, %v528
    %v558 = vld [vmem:[#allocation6 + $0x10] sm:$0xf]
    %v559 = vld [vmem:[#allocation6 + $0x14] sm:$0xf]
    %v560 = vld [vmem:[#allocation6 + $0x18] sm:$0xf]
    %v561 = vld [vmem:[#allocation6 + $0x1c] sm:$0xf]
    %v566 = vunpack.c.l.b16 %v558
    %v567 = vunpack.c.l.b16 %v559
    %v568 = vunpack.c.l.b16 %v560
    %v569 = vunpack.c.l.b16 %v561
    %v570 = vpack.c.b16 %v567, %v566
    %v571 = vpack.c.b16 %v569, %v568
    %v575 = vsel %vm298, %v557, 0
    %577 = vmatpush.bf16.msra.mxu0 0
    %578 = vmatpush.bf16.msra.mxu0 0
    %579 = vmatpush.bf16.msra.mxu0 0
    %580 = vmatpush.bf16.msra.mxu0 0
    %581 = vmatpush.bf16.msra.mxu0 0
    %582 = vmatpush.bf16.msra.mxu0 0
    %583 = vmatpush.bf16.msra.mxu0 %v571
    %584 = vmatpush.bf16.msra.mxu0 %v570
    %585 = vmatmul.bf16.gmra.mxu0 %v575
    %v586 = vpop.f32.mrf.mxu0
    %v587 = vadd.f32 0.0, %v586
    %v588 = vpop.f32.mrf.mxu0
    %v589 = vadd.f32 0.0, %v588
    %590 = vdwg.mxu0
    %v595 = vunpack.c.l.b16 %v421
    %v596 = vunpack.c.l.b16 %v422
    %v597 = vunpack.c.l.b16 %v423
    %v598 = vunpack.c.l.b16 %v424
    %v599 = vpack.c.b16 %v596, %v595
    %v600 = vpack.c.b16 %v598, %v597
    %v604 = vsel %vm298, %v420, 0
    %606 = vmatpush.bf16.msra.mxu0 0
    %607 = vmatpush.bf16.msra.mxu0 0
    %608 = vmatpush.bf16.msra.mxu0 0
    %609 = vmatpush.bf16.msra.mxu0 0
    %610 = vmatpush.bf16.msra.mxu0 0
    %611 = vmatpush.bf16.msra.mxu0 0
    %612 = vmatpush.bf16.msra.mxu0 %v600
    %613 = vmatpush.bf16.msra.mxu0 %v599
    %614 = vmatmul.bf16.gmra.mxu0 %v604
    %v615 = vpop.f32.mrf.mxu0
    %v616 = vadd.f32 %v587, %v615
    %v617 = vpop.f32.mrf.mxu0
    %v618 = vadd.f32 %v589, %v617
    %619 = vdwg.mxu0
    %620 = vrot.lane.b32.xlu0 %v296, 64
    %v621 = vpop.permute.xlu0 %620
    %622 = vrot.lane.b32.xlu0 %v278, 64
    %v623 = vpop.permute.xlu0 %622
    %v624 = vsel %vm298, %v621, 0
    %v626 = vsel %vm298, %v623, 0
    %628 = vmatpush.xpose.msra.mxu0 0.0
    %629 = vmatpush.xpose.msra.mxu0 0.0
    %630 = vmatpush.xpose.msra.mxu0 0.0
    %631 = vmatpush.xpose.msra.mxu0 0.0
    %632 = vmatpush.xpose.msra.mxu0 0.0
    %633 = vmatpush.xpose.msra.mxu0 0.0
    %634 = vmatpush.xpose.msra.mxu0 0.0
    %635 = vmatpush.xpose.msra.mxu0 0.0
    %636 = vmatpush.xpose.msra.mxu0 0.0
    %637 = vmatpush.xpose.msra.mxu0 0.0
    %638 = vmatpush.xpose.msra.mxu0 0.0
    %639 = vmatpush.xpose.msra.mxu0 0.0
    %640 = vmatpush.xpose.msra.mxu0 0.0
    %641 = vmatpush.xpose.msra.mxu0 0.0
    %642 = vmatpush.xpose.msra.mxu0 0.0
    %643 = vmatpush.xpose.msra.mxu0 %v626
    %644 = vmatmul.f32.gmra.mxu0 %v624
    %v645 = vpop.f32.mrf.mxu0
    %v646 = vadd.f32 0.0, %v645
    %647 = vdwg.mxu0
    %648 = vrot.lane.b32.xlu0 %v297, 64
    %v649 = vpop.permute.xlu0 %648
    %650 = vrot.lane.b32.xlu0 %v280, 64
    %v651 = vpop.permute.xlu0 %650
    %v652 = vsel %vm298, %v649, 0
    %v654 = vsel %vm298, %v651, 0
    %656 = vmatpush.xpose.msra.mxu0 0.0
    %657 = vmatpush.xpose.msra.mxu0 0.0
    %658 = vmatpush.xpose.msra.mxu0 0.0
    %659 = vmatpush.xpose.msra.mxu0 0.0
    %660 = vmatpush.xpose.msra.mxu0 0.0
    %661 = vmatpush.xpose.msra.mxu0 0.0
    %662 = vmatpush.xpose.msra.mxu0 0.0
    %663 = vmatpush.xpose.msra.mxu0 0.0
    %664 = vmatpush.xpose.msra.mxu0 0.0
    %665 = vmatpush.xpose.msra.mxu0 0.0
    %666 = vmatpush.xpose.msra.mxu0 0.0
    %667 = vmatpush.xpose.msra.mxu0 0.0
    %668 = vmatpush.xpose.msra.mxu0 0.0
    %669 = vmatpush.xpose.msra.mxu0 0.0
    %670 = vmatpush.xpose.msra.mxu0 0.0
    %671 = vmatpush.xpose.msra.mxu0 %v654
    %672 = vmatmul.f32.gmra.mxu0 %v652
    %v673 = vpop.f32.mrf.mxu0
    %v674 = vadd.f32 0.0, %v673
    %675 = vdwg.mxu0
    %v676 = vsel %vm351, %v646, -inf
    %677 = vmax.xlane.f32.xlu0 %v676
    %v678 = vpop.xlane.xlu0 %677
    %v679 = vsel %vm351, %v674, -inf
    %680 = vmax.xlane.f32.xlu0 %v679
    %v681 = vpop.xlane.xlu0 %680
    %v682 = vsub.f32 %v646, %v678
    %v683 = vsub.f32 %v674, %v681
    %v684 = vmul.f32 %v682, 1.442695
    %v685 = vpow.pop %v684
    %v686 = vmul.f32 %v683, 1.442695
    %v687 = vpow.pop %v686
    %v688 = vsel %vm351, %v685, 0.0
    %689 = vadd.xlane.f32.xlu0 %v688
    %v690 = vpop.xlane.xlu0 %689
    %v691 = vsel %vm351, %v687, 0.0
    %692 = vadd.xlane.f32.xlu0 %v691
    %v693 = vpop.xlane.xlu0 %692
    %v694 = vrcp.pop %v690
    %v695 = vrcp.pop %v693
    %v696 = vmul.f32 %v685, %v694
    %v697 = vmul.f32 %v687, %v695
    %698 = vrot.lane.b32.xlu0 %v292, 64
    %v699 = vpop.permute.xlu0 %698
    %v702 = vsel %vm351, %v696, 0
    %704 = vmatpush.msra.mxu0 0.0
    %705 = vmatpush.msra.mxu0 0.0
    %706 = vmatpush.msra.mxu0 0.0
    %707 = vmatpush.msra.mxu0 0.0
    %708 = vmatpush.msra.mxu0 0.0
    %709 = vmatpush.msra.mxu0 0.0
    %710 = vmatpush.msra.mxu0 0.0
    %711 = vmatpush.msra.mxu0 0.0
    %712 = vmatpush.msra.mxu0 0.0
    %713 = vmatpush.msra.mxu0 0.0
    %714 = vmatpush.msra.mxu0 0.0
    %715 = vmatpush.msra.mxu0 0.0
    %716 = vmatpush.msra.mxu0 0.0
    %717 = vmatpush.msra.mxu0 0.0
    %718 = vmatpush.msra.mxu0 0.0
    %719 = vmatpush.msra.mxu0 %v699
    %720 = vmatmul.f32.gmra.mxu0 %v702
    %v721 = vpop.f32.mrf.mxu0
    %v722 = vadd.f32 0.0, %v721
    %723 = vdwg.mxu0
    %724 = vrot.lane.b32.xlu0 %v294, 64
    %v725 = vpop.permute.xlu0 %724
    %v728 = vsel %vm351, %v697, 0
    %730 = vmatpush.msra.mxu0 0.0
    %731 = vmatpush.msra.mxu0 0.0
    %732 = vmatpush.msra.mxu0 0.0
    %733 = vmatpush.msra.mxu0 0.0
    %734 = vmatpush.msra.mxu0 0.0
    %735 = vmatpush.msra.mxu0 0.0
    %736 = vmatpush.msra.mxu0 0.0
    %737 = vmatpush.msra.mxu0 0.0
    %738 = vmatpush.msra.mxu0 0.0
    %739 = vmatpush.msra.mxu0 0.0
    %740 = vmatpush.msra.mxu0 0.0
    %741 = vmatpush.msra.mxu0 0.0
    %742 = vmatpush.msra.mxu0 0.0
    %743 = vmatpush.msra.mxu0 0.0
    %744 = vmatpush.msra.mxu0 0.0
    %745 = vmatpush.msra.mxu0 %v725
    %746 = vmatmul.f32.gmra.mxu0 %v728
    %v747 = vpop.f32.mrf.mxu0
    %v748 = vadd.f32 0.0, %v747
    %749 = vdwg.mxu0
    %v750 = vpack.c.bf16 %v748, %v722
    %v751 = vld [vmem:[#allocation6 + $0x20] sm:$0xf]
    %v752 = vld [vmem:[#allocation6 + $0x24] sm:$0xf]
    %v753 = vld [vmem:[#allocation6 + $0x28] sm:$0xf]
    %v754 = vld [vmem:[#allocation6 + $0x2c] sm:$0xf]
    %v759 = vunpack.c.l.b16 %v751
    %v760 = vunpack.c.l.b16 %v752
    %v761 = vunpack.c.l.b16 %v753
    %v762 = vunpack.c.l.b16 %v754
    %v763 = vpack.c.b16 %v760, %v759
    %v764 = vpack.c.b16 %v762, %v761
    %v768 = vsel %vm298, %v750, 0
    %770 = vmatpush.bf16.msra.mxu0 0
    %771 = vmatpush.bf16.msra.mxu0 0
    %772 = vmatpush.bf16.msra.mxu0 0
    %773 = vmatpush.bf16.msra.mxu0 0
    %774 = vmatpush.bf16.msra.mxu0 0
    %775 = vmatpush.bf16.msra.mxu0 0
    %776 = vmatpush.bf16.msra.mxu0 %v764
    %777 = vmatpush.bf16.msra.mxu0 %v763
    %778 = vmatmul.bf16.gmra.mxu0 %v768
    %v779 = vpop.f32.mrf.mxu0
    %v780 = vadd.f32 0.0, %v779
    %v781 = vpop.f32.mrf.mxu0
    %v782 = vadd.f32 0.0, %v781
    %783 = vdwg.mxu0
    %v784 = vadd.f32 %v616, %v780
    %v785 = vadd.f32 %v618, %v782
    %786 = vrot.lane.b32.xlu0 %v296, 32
    %v787 = vpop.permute.xlu0 %786
    %788 = vrot.lane.b32.xlu0 %v278, 32
    %v789 = vpop.permute.xlu0 %788
    %v790 = vsel %vm298, %v787, 0
    %v792 = vsel %vm298, %v789, 0
    %794 = vmatpush.xpose.msra.mxu0 0.0
    %795 = vmatpush.xpose.msra.mxu0 0.0
    %796 = vmatpush.xpose.msra.mxu0 0.0
    %797 = vmatpush.xpose.msra.mxu0 0.0
    %798 = vmatpush.xpose.msra.mxu0 0.0
    %799 = vmatpush.xpose.msra.mxu0 0.0
    %800 = vmatpush.xpose.msra.mxu0 0.0
    %801 = vmatpush.xpose.msra.mxu0 0.0
    %802 = vmatpush.xpose.msra.mxu0 0.0
    %803 = vmatpush.xpose.msra.mxu0 0.0
    %804 = vmatpush.xpose.msra.mxu0 0.0
    %805 = vmatpush.xpose.msra.mxu0 0.0
    %806 = vmatpush.xpose.msra.mxu0 0.0
    %807 = vmatpush.xpose.msra.mxu0 0.0
    %808 = vmatpush.xpose.msra.mxu0 0.0
    %809 = vmatpush.xpose.msra.mxu0 %v792
    %810 = vmatmul.f32.gmra.mxu0 %v790
    %v811 = vpop.f32.mrf.mxu0
    %v812 = vadd.f32 0.0, %v811
    %813 = vdwg.mxu0
    %814 = vrot.lane.b32.xlu0 %v297, 32
    %v815 = vpop.permute.xlu0 %814
    %816 = vrot.lane.b32.xlu0 %v280, 32
    %v817 = vpop.permute.xlu0 %816
    %v818 = vsel %vm298, %v815, 0
    %v820 = vsel %vm298, %v817, 0
    %822 = vmatpush.xpose.msra.mxu0 0.0
    %823 = vmatpush.xpose.msra.mxu0 0.0
    %824 = vmatpush.xpose.msra.mxu0 0.0
    %825 = vmatpush.xpose.msra.mxu0 0.0
    %826 = vmatpush.xpose.msra.mxu0 0.0
    %827 = vmatpush.xpose.msra.mxu0 0.0
    %828 = vmatpush.xpose.msra.mxu0 0.0
    %829 = vmatpush.xpose.msra.mxu0 0.0
    %830 = vmatpush.xpose.msra.mxu0 0.0
    %831 = vmatpush.xpose.msra.mxu0 0.0
    %832 = vmatpush.xpose.msra.mxu0 0.0
    %833 = vmatpush.xpose.msra.mxu0 0.0
    %834 = vmatpush.xpose.msra.mxu0 0.0
    %835 = vmatpush.xpose.msra.mxu0 0.0
    %836 = vmatpush.xpose.msra.mxu0 0.0
    %837 = vmatpush.xpose.msra.mxu0 %v820
    %838 = vmatmul.f32.gmra.mxu0 %v818
    %v839 = vpop.f32.mrf.mxu0
    %v840 = vadd.f32 0.0, %v839
    %841 = vdwg.mxu0
    %v842 = vsel %vm351, %v812, -inf
    %843 = vmax.xlane.f32.xlu0 %v842
    %v844 = vpop.xlane.xlu0 %843
    %v845 = vsel %vm351, %v840, -inf
    %846 = vmax.xlane.f32.xlu0 %v845
    %v847 = vpop.xlane.xlu0 %846
    %v848 = vsub.f32 %v812, %v844
    %v849 = vsub.f32 %v840, %v847
    %v850 = vmul.f32 %v848, 1.442695
    %v851 = vpow.pop %v850
    %v852 = vmul.f32 %v849, 1.442695
    %v853 = vpow.pop %v852
    %v854 = vsel %vm351, %v851, 0.0
    %855 = vadd.xlane.f32.xlu0 %v854
    %v856 = vpop.xlane.xlu0 %855
    %v857 = vsel %vm351, %v853, 0.0
    %858 = vadd.xlane.f32.xlu0 %v857
    %v859 = vpop.xlane.xlu0 %858
    %v860 = vrcp.pop %v856
    %v861 = vrcp.pop %v859
    %v862 = vmul.f32 %v851, %v860
    %v863 = vmul.f32 %v853, %v861
    %864 = vrot.lane.b32.xlu0 %v292, 32
    %v865 = vpop.permute.xlu0 %864
    %v868 = vsel %vm351, %v862, 0
    %870 = vmatpush.msra.mxu0 0.0
    %871 = vmatpush.msra.mxu0 0.0
    %872 = vmatpush.msra.mxu0 0.0
    %873 = vmatpush.msra.mxu0 0.0
    %874 = vmatpush.msra.mxu0 0.0
    %875 = vmatpush.msra.mxu0 0.0
    %876 = vmatpush.msra.mxu0 0.0
    %877 = vmatpush.msra.mxu0 0.0
    %878 = vmatpush.msra.mxu0 0.0
    %879 = vmatpush.msra.mxu0 0.0
    %880 = vmatpush.msra.mxu0 0.0
    %881 = vmatpush.msra.mxu0 0.0
    %882 = vmatpush.msra.mxu0 0.0
    %883 = vmatpush.msra.mxu0 0.0
    %884 = vmatpush.msra.mxu0 0.0
    %885 = vmatpush.msra.mxu0 %v865
    %886 = vmatmul.f32.gmra.mxu0 %v868
    %v887 = vpop.f32.mrf.mxu0
    %v888 = vadd.f32 0.0, %v887
    %889 = vdwg.mxu0
    %890 = vrot.lane.b32.xlu0 %v294, 32
    %v891 = vpop.permute.xlu0 %890
    %v894 = vsel %vm351, %v863, 0
    %896 = vmatpush.msra.mxu0 0.0
    %897 = vmatpush.msra.mxu0 0.0
    %898 = vmatpush.msra.mxu0 0.0
    %899 = vmatpush.msra.mxu0 0.0
    %900 = vmatpush.msra.mxu0 0.0
    %901 = vmatpush.msra.mxu0 0.0
    %902 = vmatpush.msra.mxu0 0.0
    %903 = vmatpush.msra.mxu0 0.0
    %904 = vmatpush.msra.mxu0 0.0
    %905 = vmatpush.msra.mxu0 0.0
    %906 = vmatpush.msra.mxu0 0.0
    %907 = vmatpush.msra.mxu0 0.0
    %908 = vmatpush.msra.mxu0 0.0
    %909 = vmatpush.msra.mxu0 0.0
    %910 = vmatpush.msra.mxu0 0.0
    %911 = vmatpush.msra.mxu0 %v891
    %912 = vmatmul.f32.gmra.mxu0 %v894
    %v913 = vpop.f32.mrf.mxu0
    %v914 = vadd.f32 0.0, %v913
    %915 = vdwg.mxu0
    %v916 = vpack.c.bf16 %v914, %v888
    %v917 = vld [vmem:[#allocation6 + $0x30] sm:$0xf]
    %v918 = vld [vmem:[#allocation6 + $0x34] sm:$0xf]
    %v919 = vld [vmem:[#allocation6 + $0x38] sm:$0xf]
    %v920 = vld [vmem:[#allocation6 + $0x3c] sm:$0xf]
    %v925 = vunpack.c.l.b16 %v917
    %v926 = vunpack.c.l.b16 %v918
    %v927 = vunpack.c.l.b16 %v919
    %v928 = vunpack.c.l.b16 %v920
    %v929 = vpack.c.b16 %v926, %v925
    %v930 = vpack.c.b16 %v928, %v927
    %v934 = vsel %vm298, %v916, 0
    %936 = vmatpush.bf16.msra.mxu0 0
    %937 = vmatpush.bf16.msra.mxu0 0
    %938 = vmatpush.bf16.msra.mxu0 0
    %939 = vmatpush.bf16.msra.mxu0 0
    %940 = vmatpush.bf16.msra.mxu0 0
    %941 = vmatpush.bf16.msra.mxu0 0
    %942 = vmatpush.bf16.msra.mxu0 %v930
    %943 = vmatpush.bf16.msra.mxu0 %v929
    %944 = vmatmul.bf16.gmra.mxu0 %v934
    %v945 = vpop.f32.mrf.mxu0
    %v946 = vadd.f32 0.0, %v945
    %v947 = vpop.f32.mrf.mxu0
    %v948 = vadd.f32 0.0, %v947
    %949 = vdwg.mxu0
    %v950 = vadd.f32 %v784, %v946
    %v951 = vadd.f32 %v785, %v948
    %v952 = vld [vmem:[#allocation7] sm:$0x1]
    %v954 = vperm.slane %v952, 0
    %v956 = vadd.f32 %v950, %v954
    %v957 = vadd.f32 %v951, %v954
    %v958 = vld [vmem:[%s5] sm:$0x1]
    %v960 = vperm.slane %v958, 0
    %v962 = vmul.f32 %v960, %v956
    %v963 = vmul.f32 %v960, %v957
    %v964 = vadd.f32 %v83, %v962
    %v965 = vadd.f32 %v84, %v963
    %966 = vst [vmem:[%s6] sm:$0xff] %v964
    %967 = vst [vmem:[%s6 + $0x8] sm:$0xff] %v965
    // Predicated region
    $region42: #{_lambda_.12} parent=1 // pred_check
      _
    $region43: #{_lambda_.12} parent=1 // pred_check_branch
      %969 = sbr.rel (0) target = $region45
    $region44: #{_lambda_.12} parent=1 // pred_region
      _
    $region45: #{_lambda_.12} parent=1 // pred_fallthru
      _
    // Predicated region
    $region46: #{_lambda_.12} parent=1 // pred_check
      _
    $region47: #{_lambda_.12} parent=1 // pred_check_branch
      %971 = sbr.rel (0) target = $region49
    $region48: #{_lambda_.12} parent=1 // pred_region
      _
    $region49: #{_lambda_.12} parent=1 // pred_fallthru
      _
    %972 = vsyncpa [#allocation3], 1
    %973 = vsyncpa [#allocation5], 1
    %974 = vsyncpa [#allocation8], 1

// kernel: _lambda_.15
$region0: #{_lambda_.15}
  #allocation0 [shape = 'u32[]', space=smem, size = 0x4, offset = 0x4, fixed_abs, tag = 'smem constant byte address 0x4 - core index']
  #allocation1 [shape = 'u32[72,128]{1,0:T(1,128)}', space=vmem, size = 0x9000, scoped, tag = 'internal scratch']
  %s0 = inlined_call_operand.vmem [shape: f32[2,8,128], index: 0, kind: input, shape index: {}]
  %s1 = inlined_call_operand.vmem [shape: f32[2,8,128], index: 1, kind: input, shape index: {}]
  %s2 = inlined_call_operand.hbm [shape: f32[1,128], index: 2, kind: input, shape index: {}]
  %s3 = inlined_call_operand.vmem [shape: f32[2,8,128], index: 3, kind: output, shape index: {}]
  %s4 = sld [smem:[#allocation0]]
  $region26: #{_lambda_.15} parent=0
    _
  %s6 = ssub.s32 1, %s4
  %s7 = scalar_select 0, %s6, %s4
  $region1: #{_lambda_.15} parent=0
    #allocation2 [shape = 'u8[512]{0}', space=vmem, size = 0x400, scoped, tag = 'input window, operand 2, single buffered']
    #allocation3 [shape = 's32[1]{0}', space=sflag, size = 0x4, scoped, tag = 'scoped memory for _lambda_.15']
    %8 = vsyncpa [#allocation3], 0
    // Predicated region
    $region2: #{_lambda_.15} parent=1 // pred_check
      _
    $region3: #{_lambda_.15} parent=1 // pred_check_branch
      %10 = sbr.rel (0) target = $region5
    $region4: #{_lambda_.15} parent=1 // pred_region
      _
    $region5: #{_lambda_.15} parent=1 // pred_fallthru
      _
    // Predicated region
    $region6: #{_lambda_.15} parent=1 // pred_check
      _
    $region7: #{_lambda_.15} parent=1 // pred_check_branch
      %12 = sbr.rel (0) target = $region9
    $region8: #{_lambda_.15} parent=1 // pred_region
      _
    $region9: #{_lambda_.15} parent=1 // pred_fallthru
      _
    // Predicated region
    $region10: #{_lambda_.15} parent=1 // pred_check
      _
    $region11: #{_lambda_.15} parent=1 // pred_check_branch
      %14 = sbr.rel (0) target = $region13
    $region12: #{_lambda_.15} parent=1 // pred_region
      %16 = vsyncadd [#allocation3], 0
      %s18 = sshll.u32 %s2, 4
      %s19 = int_to_ptr.hbm [resolvable:$true] %s18
      %s20 = sshll.u32 [#allocation2], 4
      %s21 = int_to_ptr.vmem [resolvable:$true] %s20
      %23 = dma.hbm_to_vmem [thread:$0]  %s19, 16, %s21, [#allocation3]
    $region13: #{_lambda_.15} parent=1 // pred_fallthru
      _
    // Predicated region
    $region14: #{_lambda_.15} parent=1 // pred_check
      _
    $region15: #{_lambda_.15} parent=1 // pred_check_branch
      %25 = sbr.rel (0) target = $region17
    $region16: #{_lambda_.15} parent=1 // pred_region
      %27 = dma.done [#allocation3], 16
    $region17: #{_lambda_.15} parent=1 // pred_fallthru
      _
    %v28 = vld [vmem:[%s0] sm:$0xff]
    %v29 = vld [vmem:[%s0 + $0x8] sm:$0xff]
    %v30 = vld [vmem:[%s1] sm:$0xff]
    %v31 = vld [vmem:[%s1 + $0x8] sm:$0xff]
    %v32 = vld [vmem:[#allocation2] sm:$0x1]
    %v33 = vsub.f32 1.0, %v32
    %v35 = vperm.slane %v33, 0
    %v37 = vmul.f32 %v35, %v28
    %v38 = vmul.f32 %v35, %v29
    %v40 = vperm.slane %v32, 0
    %v42 = vmul.f32 %v40, %v30
    %v43 = vmul.f32 %v40, %v31
    %v44 = vadd.f32 %v37, %v42
    %v45 = vadd.f32 %v38, %v43
    %v46 = vsub.f32 1.0, %v44
    %v47 = vsub.f32 1.0, %v45
    %v48 = vmul.f32 %v46, %v28
    %v49 = vmul.f32 %v47, %v29
    %v50 = vmul.f32 %v44, %v30
    %v51 = vmul.f32 %v45, %v31
    %v52 = vadd.f32 %v48, %v50
    %v53 = vadd.f32 %v49, %v51
    %54 = vst [vmem:[%s3] sm:$0xff] %v52
    %55 = vst [vmem:[%s3 + $0x8] sm:$0xff] %v53
    // Predicated region
    $region18: #{_lambda_.15} parent=1 // pred_check
      _
    $region19: #{_lambda_.15} parent=1 // pred_check_branch
      %57 = sbr.rel (0) target = $region21
    $region20: #{_lambda_.15} parent=1 // pred_region
      _
    $region21: #{_lambda_.15} parent=1 // pred_fallthru
      _
    // Predicated region
    $region22: #{_lambda_.15} parent=1 // pred_check
      _
    $region23: #{_lambda_.15} parent=1 // pred_check_branch
      %59 = sbr.rel (0) target = $region25
    $region24: #{_lambda_.15} parent=1 // pred_region
      _
    $region25: #{_lambda_.15} parent=1 // pred_fallthru
      _
    %60 = vsyncpa [#allocation3], 1

// kernel: _lambda_.19
$region0: #{_lambda_.19}
  #allocation0 [shape = 'u32[]', space=smem, size = 0x4, offset = 0x4, fixed_abs, tag = 'smem constant byte address 0x4 - core index']
  #allocation1 [shape = 'u32[72,128]{1,0:T(1,128)}', space=vmem, size = 0x9000, scoped, tag = 'internal scratch']
  %s0 = inlined_call_operand.vmem [shape: f32[2,8,128], index: 0, kind: input, shape index: {}]
  %s1 = inlined_call_operand.vmem [shape: f32[2,8,128], index: 1, kind: input, shape index: {}]
  %s2 = inlined_call_operand.vmem [shape: f32[1,128], index: 2, kind: input, shape index: {}]
  %s3 = inlined_call_operand.vmem [shape: f32[1,128], index: 3, kind: input, shape index: {}]
  %s4 = inlined_call_operand.hbm [shape: f32[1,128], index: 4, kind: input, shape index: {}]
  %s5 = inlined_call_operand.hbm [shape: f32[2,8,128], index: 5, kind: output, shape index: {}]
  %s6 = sld [smem:[#allocation0]]
  $region34: #{_lambda_.19} parent=0
    _
  %s8 = ssub.s32 1, %s6
  %s9 = scalar_select 0, %s8, %s6
  $region1: #{_lambda_.19} parent=0
    #allocation2 [shape = 'u8[512]{0}', space=vmem, size = 0x400, scoped, tag = 'input window, operand 4, single buffered']
    #allocation3 [shape = 's32[1]{0}', space=sflag, size = 0x4, scoped, tag = 'scoped memory for _lambda_.19']
    #allocation4 [shape = 's32[1]{0}', space=sflag, size = 0x4, scoped, tag = 'scoped memory for _lambda_.19']
    #allocation5 [shape = 'u8[8192]{0}', space=vmem, size = 0x2000, scoped, tag = 'output window, operand 0, single buffered']
    %10 = vsyncpa [#allocation3], 0
    %11 = vsyncpa [#allocation4], 0
    // Predicated region
    $region2: #{_lambda_.19} parent=1 // pred_check
      _
    $region3: #{_lambda_.19} parent=1 // pred_check_branch
      %13 = sbr.rel (0) target = $region5
    $region4: #{_lambda_.19} parent=1 // pred_region
      _
    $region5: #{_lambda_.19} parent=1 // pred_fallthru
      _
    // Predicated region
    $region6: #{_lambda_.19} parent=1 // pred_check
      _
    $region7: #{_lambda_.19} parent=1 // pred_check_branch
      %15 = sbr.rel (0) target = $region9
    $region8: #{_lambda_.19} parent=1 // pred_region
      _
    $region9: #{_lambda_.19} parent=1 // pred_fallthru
      _
    // Predicated region
    $region10: #{_lambda_.19} parent=1 // pred_check
      _
    $region11: #{_lambda_.19} parent=1 // pred_check_branch
      %17 = sbr.rel (0) target = $region13
    $region12: #{_lambda_.19} parent=1 // pred_region
      _
    $region13: #{_lambda_.19} parent=1 // pred_fallthru
      _
    // Predicated region
    $region14: #{_lambda_.19} parent=1 // pred_check
      _
    $region15: #{_lambda_.19} parent=1 // pred_check_branch
      %19 = sbr.rel (0) target = $region17
    $region16: #{_lambda_.19} parent=1 // pred_region
      _
    $region17: #{_lambda_.19} parent=1 // pred_fallthru
      _
    // Predicated region
    $region18: #{_lambda_.19} parent=1 // pred_check
      _
    $region19: #{_lambda_.19} parent=1 // pred_check_branch
      %21 = sbr.rel (0) target = $region21
    $region20: #{_lambda_.19} parent=1 // pred_region
      %23 = vsyncadd [#allocation3], 0
      %s25 = sshll.u32 %s4, 4
      %s26 = int_to_ptr.hbm [resolvable:$true] %s25
      %s27 = sshll.u32 [#allocation2], 4
      %s28 = int_to_ptr.vmem [resolvable:$true] %s27
      %30 = dma.hbm_to_vmem [thread:$0]  %s26, 16, %s28, [#allocation3]
    $region21: #{_lambda_.19} parent=1 // pred_fallthru
      _
    // Predicated region
    $region22: #{_lambda_.19} parent=1 // pred_check
      _
    $region23: #{_lambda_.19} parent=1 // pred_check_branch
      %32 = sbr.rel (0) target = $region25
    $region24: #{_lambda_.19} parent=1 // pred_region
      %34 = dma.done [#allocation3], 16
    $region25: #{_lambda_.19} parent=1 // pred_fallthru
      _
    %v35 = vld [vmem:[%s0] sm:$0xff]
    %v36 = vld [vmem:[%s0 + $0x8] sm:$0xff]
    %v37 = vld [vmem:[%s1] sm:$0xff]
    %v38 = vld [vmem:[%s1 + $0x8] sm:$0xff]
    %v39 = vld [vmem:[%s2] sm:$0x1]
    %v41 = vperm.slane %v39, 0
    %v43 = vsub.f32 %v37, %v41
    %v44 = vsub.f32 %v38, %v41
    %v45 = vmul.f32 %v43, %v43
    %v46 = vmul.f32 %v44, %v44
    %47 = vadd.xlane.f32.xlu0 %v45
    %v48 = vpop.xlane.xlu0 %47
    %49 = vadd.xlane.f32.xlu0 %v46
    %v50 = vpop.xlane.xlu0 %49
    %v51 = vrcp.pop 128.0
    %v52 = vmul.f32 128.0, %v51
    %v53 = vsub.f32 1.0, %v52
    %v54 = vmul.f32 %v51, %v53
    %v55 = vadd.f32 %v51, %v54
    %vm56 = vweird.f32 %v51
    %v57 = vsel %vm56, %v51, %v55
    %v58 = vmul.f32 %v48, %v57
    %v59 = vmul.f32 %v50, %v57
    %v60 = vadd.f32 %v58, 1e-05
    %v61 = vadd.f32 %v59, 1e-05
    %v62 = vrsqrt.pop %v60
    %v63 = vmul.f32 %v62, %v60
    %v64 = vmul.f32 %v63, %v62
    %v65 = vmul.f32 0.5, %v64
    %v66 = vsub.f32 1.5, %v65
    %v67 = vmul.f32 %v62, %v66
    %v68 = vmul.f32 %v60, %v67
    %vm69 = vcmp.eq.f32.partialorder %v60, inf
    %v70 = vsel %vm69, %v60, %v68
    %vm71 = vcmp.eq.f32.partialorder %v60, 0.0
    %v72 = vand.u32 %v60, 2147483648
    %v73 = vsel %vm71, %v72, %v70
    %v74 = vrsqrt.pop %v61
    %v75 = vmul.f32 %v74, %v61
    %v76 = vmul.f32 %v75, %v74
    %v77 = vmul.f32 0.5, %v76
    %v78 = vsub.f32 1.5, %v77
    %v79 = vmul.f32 %v74, %v78
    %v80 = vmul.f32 %v61, %v79
    %vm81 = vcmp.eq.f32.partialorder %v61, inf
    %v82 = vsel %vm81, %v61, %v80
    %vm83 = vcmp.eq.f32.partialorder %v61, 0.0
    %v84 = vand.u32 %v61, 2147483648
    %v85 = vsel %vm83, %v84, %v82
    %v86 = vrcp.pop %v73
    %v87 = vmul.f32 %v73, %v86
    %v88 = vsub.f32 1.0, %v87
    %v89 = vmul.f32 %v86, %v88
    %v90 = vadd.f32 %v86, %v89
    %vm91 = vweird.f32 %v73
    %vm92 = vweird.f32 %v86
    %vm93 = vmor %vm91, %vm92
    %v94 = vsel %vm93, %v86, %v90
    %v95 = vand.u32 2147483647, %v73
    %vm96 = vcmp.eq.f32.partialorder %v95, 8.507059e+37
    %v97 = vand.u32 %v73, 2147483648
    %v98 = vor.u32 1.1754944e-38, %v97
    %v99 = vsel %vm96, %v98, %v94
    %v100 = vrcp.pop %v85
    %v101 = vmul.f32 %v85, %v100
    %v102 = vsub.f32 1.0, %v101
    %v103 = vmul.f32 %v100, %v102
    %v104 = vadd.f32 %v100, %v103
    %vm105 = vweird.f32 %v85
    %vm106 = vweird.f32 %v100
    %vm107 = vmor %vm105, %vm106
    %v108 = vsel %vm107, %v100, %v104
    %v109 = vand.u32 2147483647, %v85
    %vm110 = vcmp.eq.f32.partialorder %v109, 8.507059e+37
    %v111 = vand.u32 %v85, 2147483648
    %v112 = vor.u32 1.1754944e-38, %v111
    %v113 = vsel %vm110, %v112, %v108
    %v114 = vmul.f32 %v37, %v99
    %v115 = vmul.f32 %v38, %v113
    %v116 = vld [vmem:[%s3] sm:$0x1]
    %v118 = vperm.slane %v116, 0
    %v120 = vmul.f32 %v114, %v118
    %v121 = vmul.f32 %v115, %v118
    %v122 = vld [vmem:[#allocation2] sm:$0x1]
    %v123 = vsub.f32 1.0, %v122
    %v125 = vperm.slane %v123, 0
    %v127 = vmul.f32 %v125, %v35
    %v128 = vmul.f32 %v125, %v36
    %v130 = vperm.slane %v122, 0
    %v132 = vmul.f32 %v130, %v120
    %v133 = vmul.f32 %v130, %v121
    %v134 = vadd.f32 %v127, %v132
    %v135 = vadd.f32 %v128, %v133
    %v136 = vsub.f32 1.0, %v134
    %v137 = vsub.f32 1.0, %v135
    %v138 = vmul.f32 %v136, %v35
    %v139 = vmul.f32 %v137, %v36
    %v140 = vmul.f32 %v134, %v120
    %v141 = vmul.f32 %v135, %v121
    %v142 = vadd.f32 %v138, %v140
    %v143 = vadd.f32 %v139, %v141
    %144 = vst [vmem:[#allocation5] sm:$0xff] %v142
    %145 = vst [vmem:[#allocation5 + $0x8] sm:$0xff] %v143
    // Predicated region
    $region26: #{_lambda_.19} parent=1 // pred_check
      _
    $region27: #{_lambda_.19} parent=1 // pred_check_branch
      %147 = sbr.rel (0) target = $region29
    $region28: #{_lambda_.19} parent=1 // pred_region
      %149 = vsyncadd [#allocation4], 0
      %s150 = sshll.u32 [#allocation5], 4
      %s151 = int_to_ptr.vmem [resolvable:$true] %s150
      %s152 = sshll.u32 %s5, 4
      %s153 = int_to_ptr.hbm [resolvable:$true] %s152
      %158 = dma.vmem_to_hbm [thread:$0]  %s151, 256, %s153, [#allocation4], 128, 128, 8
    $region29: #{_lambda_.19} parent=1 // pred_fallthru
      _
    // Predicated region
    $region30: #{_lambda_.19} parent=1 // pred_check
      _
    $region31: #{_lambda_.19} parent=1 // pred_check_branch
      %160 = sbr.rel (0) target = $region33
    $region32: #{_lambda_.19} parent=1 // pred_region
      %162 = dma.done [#allocation4], 256
    $region33: #{_lambda_.19} parent=1 // pred_fallthru
      _
    %163 = vsyncpa [#allocation3], 1
    %164 = vsyncpa [#allocation4], 1

// kernel: _lambda_.18
$region0: #{_lambda_.18}
  #allocation0 [shape = 'u32[]', space=smem, size = 0x4, offset = 0x4, fixed_abs, tag = 'smem constant byte address 0x4 - core index']
  #allocation1 [shape = 'u32[72,128]{1,0:T(1,128)}', space=vmem, size = 0x9000, scoped, tag = 'internal scratch']
  %s0 = inlined_call_operand.vmem [shape: f32[2,8,128], index: 0, kind: input, shape index: {}]
  %s1 = inlined_call_operand.hbm [shape: bf16[128,512], index: 1, kind: input, shape index: {}]
  %s2 = inlined_call_operand.vmem [shape: f32[1,512], index: 2, kind: input, shape index: {}]
  %s3 = inlined_call_operand.hbm [shape: bf16[512,128], index: 3, kind: input, shape index: {}]
  %s4 = inlined_call_operand.vmem [shape: f32[1,128], index: 4, kind: input, shape index: {}]
  %s5 = inlined_call_operand.vmem [shape: f32[1,128], index: 5, kind: input, shape index: {}]
  %s6 = inlined_call_operand.vmem [shape: f32[2,8,128], index: 6, kind: output, shape index: {}]
  %s7 = sld [smem:[#allocation0]]
  $region42: #{_lambda_.18} parent=0
    _
  %s9 = ssub.s32 1, %s7
  %s10 = scalar_select 0, %s9, %s7
  $region1: #{_lambda_.18} parent=0
    #allocation2 [shape = 'u8[131072]{0}', space=vmem, size = 0x20000, scoped, tag = 'input window, operand 1, single buffered']
    #allocation3 [shape = 's32[1]{0}', space=sflag, size = 0x4, scoped, tag = 'scoped memory for _lambda_.18']
    #allocation4 [shape = 'u8[131072]{0}', space=vmem, size = 0x20000, scoped, tag = 'input window, operand 3, single buffered']
    #allocation5 [shape = 's32[1]{0}', space=sflag, size = 0x4, scoped, tag = 'scoped memory for _lambda_.18']
    %11 = vsyncpa [#allocation3], 0
    %12 = vsyncpa [#allocation5], 0
    // Predicated region
    $region2: #{_lambda_.18} parent=1 // pred_check
      _
    $region3: #{_lambda_.18} parent=1 // pred_check_branch
      %14 = sbr.rel (0) target = $region5
    $region4: #{_lambda_.18} parent=1 // pred_region
      _
    $region5: #{_lambda_.18} parent=1 // pred_fallthru
      _
    // Predicated region
    $region6: #{_lambda_.18} parent=1 // pred_check
      _
    $region7: #{_lambda_.18} parent=1 // pred_check_branch
      %16 = sbr.rel (0) target = $region9
    $region8: #{_lambda_.18} parent=1 // pred_region
      %18 = vsyncadd [#allocation3], 0
      %s19 = sshll.u32 %s1, 4
      %s20 = int_to_ptr.hbm [resolvable:$true] %s19
      %s21 = sshll.u32 [#allocation2], 4
      %s22 = int_to_ptr.vmem [resolvable:$true] %s21
      %27 = dma.hbm_to_vmem [thread:$0]  %s20, 4096, %s22, [#allocation3], 256, 256, 16
    $region9: #{_lambda_.18} parent=1 // pred_fallthru
      _
    // Predicated region
    $region10: #{_lambda_.18} parent=1 // pred_check
      _
    $region11: #{_lambda_.18} parent=1 // pred_check_branch
      %29 = sbr.rel (0) target = $region13
    $region12: #{_lambda_.18} parent=1 // pred_region
      _
    $region13: #{_lambda_.18} parent=1 // pred_fallthru
      _
    // Predicated region
    $region14: #{_lambda_.18} parent=1 // pred_check
      _
    $region15: #{_lambda_.18} parent=1 // pred_check_branch
      %31 = sbr.rel (0) target = $region17
    $region16: #{_lambda_.18} parent=1 // pred_region
      %33 = vsyncadd [#allocation5], 0
      %s34 = sshll.u32 %s3, 4
      %s35 = int_to_ptr.hbm [resolvable:$true] %s34
      %s36 = sshll.u32 [#allocation4], 4
      %s37 = int_to_ptr.vmem [resolvable:$true] %s36
      %42 = dma.hbm_to_vmem [thread:$0]  %s35, 4096, %s37, [#allocation5], 64, 64, 4
    $region17: #{_lambda_.18} parent=1 // pred_fallthru
      _
    // Predicated region
    $region18: #{_lambda_.18} parent=1 // pred_check
      _
    $region19: #{_lambda_.18} parent=1 // pred_check_branch
      %44 = sbr.rel (0) target = $region21
    $region20: #{_lambda_.18} parent=1 // pred_region
      _
    $region21: #{_lambda_.18} parent=1 // pred_fallthru
      _
    // Predicated region
    $region22: #{_lambda_.18} parent=1 // pred_check
      _
    $region23: #{_lambda_.18} parent=1 // pred_check_branch
      %46 = sbr.rel (0) target = $region25
    $region24: #{_lambda_.18} parent=1 // pred_region
      _
    $region25: #{_lambda_.18} parent=1 // pred_fallthru
      _
    // Predicated region
    $region26: #{_lambda_.18} parent=1 // pred_check
      _
    $region27: #{_lambda_.18} parent=1 // pred_check_branch
      %48 = sbr.rel (0) target = $region29
    $region28: #{_lambda_.18} parent=1 // pred_region
      %50 = dma.done [#allocation3], 4096
    $region29: #{_lambda_.18} parent=1 // pred_fallthru
      _
    // Predicated region
    $region30: #{_lambda_.18} parent=1 // pred_check
      _
    $region31: #{_lambda_.18} parent=1 // pred_check_branch
      %52 = sbr.rel (0) target = $region33
    $region32: #{_lambda_.18} parent=1 // pred_region
      %54 = dma.done [#allocation5], 4096
    $region33: #{_lambda_.18} parent=1 // pred_fallthru
      _
    %v55 = vld [vmem:[%s0] sm:$0xff]
    %v56 = vld [vmem:[%s0 + $0x8] sm:$0xff]
    %v57 = vpack.c.bf16 %v56, %v55
    %v58 = vld [vmem:[#allocation2] sm:$0xff]
    %v59 = vld [vmem:[#allocation2 + $0x8] sm:$0xff]
    %v60 = vld [vmem:[#allocation2 + $0x10] sm:$0xff]
    %v61 = vld [vmem:[#allocation2 + $0x18] sm:$0xff]
    %v62 = vld [vmem:[#allocation2 + $0x20] sm:$0xff]
    %v63 = vld [vmem:[#allocation2 + $0x28] sm:$0xff]
    %v64 = vld [vmem:[#allocation2 + $0x30] sm:$0xff]
    %v65 = vld [vmem:[#allocation2 + $0x38] sm:$0xff]
    %v66 = vld [vmem:[#allocation2 + $0x40] sm:$0xff]
    %v67 = vld [vmem:[#allocation2 + $0x48] sm:$0xff]
    %v68 = vld [vmem:[#allocation2 + $0x50] sm:$0xff]
    %v69 = vld [vmem:[#allocation2 + $0x58] sm:$0xff]
    %v70 = vld [vmem:[#allocation2 + $0x60] sm:$0xff]
    %v71 = vld [vmem:[#allocation2 + $0x68] sm:$0xff]
    %v72 = vld [vmem:[#allocation2 + $0x70] sm:$0xff]
    %v73 = vld [vmem:[#allocation2 + $0x78] sm:$0xff]
    %v74 = vld [vmem:[#allocation2 + $0x80] sm:$0xff]
    %v75 = vld [vmem:[#allocation2 + $0x88] sm:$0xff]
    %v76 = vld [vmem:[#allocation2 + $0x90] sm:$0xff]
    %v77 = vld [vmem:[#allocation2 + $0x98] sm:$0xff]
    %v78 = vld [vmem:[#allocation2 + $0xa0] sm:$0xff]
    %v79 = vld [vmem:[#allocation2 + $0xa8] sm:$0xff]
    %v80 = vld [vmem:[#allocation2 + $0xb0] sm:$0xff]
    %v81 = vld [vmem:[#allocation2 + $0xb8] sm:$0xff]
    %v82 = vld [vmem:[#allocation2 + $0xc0] sm:$0xff]
    %v83 = vld [vmem:[#allocation2 + $0xc8] sm:$0xff]
    %v84 = vld [vmem:[#allocation2 + $0xd0] sm:$0xff]
    %v85 = vld [vmem:[#allocation2 + $0xd8] sm:$0xff]
    %v86 = vld [vmem:[#allocation2 + $0xe0] sm:$0xff]
    %v87 = vld [vmem:[#allocation2 + $0xe8] sm:$0xff]
    %v88 = vld [vmem:[#allocation2 + $0xf0] sm:$0xff]
    %v89 = vld [vmem:[#allocation2 + $0xf8] sm:$0xff]
    %v90 = vld [vmem:[%s2] sm:$0xf]
    %v92 = vperm.slane %v90, 0
    %v93 = vperm.slane %v90, 1
    %v94 = vperm.slane %v90, 2
    %v95 = vperm.slane %v90, 3
    %v132 = vunpack.c.l.b16 %v58
    %v133 = vunpack.c.h.b16 %v58
    %v134 = vunpack.c.l.b16 %v59
    %v135 = vunpack.c.h.b16 %v59
    %v136 = vunpack.c.l.b16 %v60
    %v137 = vunpack.c.h.b16 %v60
    %v138 = vunpack.c.l.b16 %v61
    %v139 = vunpack.c.h.b16 %v61
    %v140 = vunpack.c.l.b16 %v62
    %v141 = vunpack.c.h.b16 %v62
    %v142 = vunpack.c.l.b16 %v63
    %v143 = vunpack.c.h.b16 %v63
    %v144 = vunpack.c.l.b16 %v64
    %v145 = vunpack.c.h.b16 %v64
    %v146 = vunpack.c.l.b16 %v65
    %v147 = vunpack.c.h.b16 %v65
    %v148 = vunpack.c.l.b16 %v66
    %v149 = vunpack.c.h.b16 %v66
    %v150 = vunpack.c.l.b16 %v67
    %v151 = vunpack.c.h.b16 %v67
    %v152 = vunpack.c.l.b16 %v68
    %v153 = vunpack.c.h.b16 %v68
    %v154 = vunpack.c.l.b16 %v69
    %v155 = vunpack.c.h.b16 %v69
    %v156 = vunpack.c.l.b16 %v70
    %v157 = vunpack.c.h.b16 %v70
    %v158 = vunpack.c.l.b16 %v71
    %v159 = vunpack.c.h.b16 %v71
    %v160 = vunpack.c.l.b16 %v72
    %v161 = vunpack.c.h.b16 %v72
    %v162 = vunpack.c.l.b16 %v73
    %v163 = vunpack.c.h.b16 %v73
    %v164 = vunpack.c.l.b16 %v74
    %v165 = vunpack.c.h.b16 %v74
    %v166 = vunpack.c.l.b16 %v75
    %v167 = vunpack.c.h.b16 %v75
    %v168 = vunpack.c.l.b16 %v76
    %v169 = vunpack.c.h.b16 %v76
    %v170 = vunpack.c.l.b16 %v77
    %v171 = vunpack.c.h.b16 %v77
    %v172 = vunpack.c.l.b16 %v78
    %v173 = vunpack.c.h.b16 %v78
    %v174 = vunpack.c.l.b16 %v79
    %v175 = vunpack.c.h.b16 %v79
    %v176 = vunpack.c.l.b16 %v80
    %v177 = vunpack.c.h.b16 %v80
    %v178 = vunpack.c.l.b16 %v81
    %v179 = vunpack.c.h.b16 %v81
    %v180 = vunpack.c.l.b16 %v82
    %v181 = vunpack.c.h.b16 %v82
    %v182 = vunpack.c.l.b16 %v83
    %v183 = vunpack.c.h.b16 %v83
    %v184 = vunpack.c.l.b16 %v84
    %v185 = vunpack.c.h.b16 %v84
    %v186 = vunpack.c.l.b16 %v85
    %v187 = vunpack.c.h.b16 %v85
    %v188 = vunpack.c.l.b16 %v86
    %v189 = vunpack.c.h.b16 %v86
    %v190 = vunpack.c.l.b16 %v87
    %v191 = vunpack.c.h.b16 %v87
    %v192 = vunpack.c.l.b16 %v88
    %v193 = vunpack.c.h.b16 %v88
    %v194 = vunpack.c.l.b16 %v89
    %v195 = vunpack.c.h.b16 %v89
    %v196 = vpack.c.b16 %v136, %v132
    %v197 = vpack.c.b16 %v137, %v133
    %v198 = vpack.c.b16 %v138, %v134
    %v199 = vpack.c.b16 %v139, %v135
    %v200 = vpack.c.b16 %v144, %v140
    %v201 = vpack.c.b16 %v145, %v141
    %v202 = vpack.c.b16 %v146, %v142
    %v203 = vpack.c.b16 %v147, %v143
    %v204 = vpack.c.b16 %v152, %v148
    %v205 = vpack.c.b16 %v153, %v149
    %v206 = vpack.c.b16 %v154, %v150
    %v207 = vpack.c.b16 %v155, %v151
    %v208 = vpack.c.b16 %v160, %v156
    %v209 = vpack.c.b16 %v161, %v157
    %v210 = vpack.c.b16 %v162, %v158
    %v211 = vpack.c.b16 %v163, %v159
    %v212 = vpack.c.b16 %v168, %v164
    %v213 = vpack.c.b16 %v169, %v165
    %v214 = vpack.c.b16 %v170, %v166
    %v215 = vpack.c.b16 %v171, %v167
    %v216 = vpack.c.b16 %v176, %v172
    %v217 = vpack.c.b16 %v177, %v173
    %v218 = vpack.c.b16 %v178, %v174
    %v219 = vpack.c.b16 %v179, %v175
    %v220 = vpack.c.b16 %v184, %v180
    %v221 = vpack.c.b16 %v185, %v181
    %v222 = vpack.c.b16 %v186, %v182
    %v223 = vpack.c.b16 %v187, %v183
    %v224 = vpack.c.b16 %v192, %v188
    %v225 = vpack.c.b16 %v193, %v189
    %v226 = vpack.c.b16 %v194, %v190
    %v227 = vpack.c.b16 %v195, %v191
    %260 = vmatpush.bf16.msra.mxu0 %v224
    %261 = vmatpush.bf16.msra.mxu0 %v220
    %262 = vmatpush.bf16.msra.mxu0 %v216
    %263 = vmatpush.bf16.msra.mxu0 %v212
    %264 = vmatpush.bf16.msra.mxu0 %v208
    %265 = vmatpush.bf16.msra.mxu0 %v204
    %266 = vmatpush.bf16.msra.mxu0 %v200
    %267 = vmatpush.bf16.msra.mxu0 %v196
    %268 = vmatmul.bf16.gmra.mxu0 %v57
    %v269 = vpop.f32.mrf.mxu0
    %v270 = vadd.f32 %v92, %v269
    %v271 = vpop.f32.mrf.mxu0
    %v272 = vadd.f32 %v92, %v271
    %273 = vdwg.mxu0
    %274 = vmatpush.bf16.msra.mxu0 %v225
    %275 = vmatpush.bf16.msra.mxu0 %v221
    %276 = vmatpush.bf16.msra.mxu0 %v217
    %277 = vmatpush.bf16.msra.mxu0 %v213
    %278 = vmatpush.bf16.msra.mxu0 %v209
    %279 = vmatpush.bf16.msra.mxu0 %v205
    %280 = vmatpush.bf16.msra.mxu0 %v201
    %281 = vmatpush.bf16.msra.mxu0 %v197
    %282 = vmatmul.bf16.gmra.mxu0 %v57
    %v283 = vpop.f32.mrf.mxu0
    %v284 = vadd.f32 %v93, %v283
    %v285 = vpop.f32.mrf.mxu0
    %v286 = vadd.f32 %v93, %v285
    %287 = vdwg.mxu0
    %288 = vmatpush.bf16.msra.mxu0 %v226
    %289 = vmatpush.bf16.msra.mxu0 %v222
    %290 = vmatpush.bf16.msra.mxu0 %v218
    %291 = vmatpush.bf16.msra.mxu0 %v214
    %292 = vmatpush.bf16.msra.mxu0 %v210
    %293 = vmatpush.bf16.msra.mxu0 %v206
    %294 = vmatpush.bf16.msra.mxu0 %v202
    %295 = vmatpush.bf16.msra.mxu0 %v198
    %296 = vmatmul.bf16.gmra.mxu0 %v57
    %v297 = vpop.f32.mrf.mxu0
    %v298 = vadd.f32 %v94, %v297
    %v299 = vpop.f32.mrf.mxu0
    %v300 = vadd.f32 %v94, %v299
    %301 = vdwg.mxu0
    %302 = vmatpush.bf16.msra.mxu0 %v227
    %303 = vmatpush.bf16.msra.mxu0 %v223
    %304 = vmatpush.bf16.msra.mxu0 %v219
    %305 = vmatpush.bf16.msra.mxu0 %v215
    %306 = vmatpush.bf16.msra.mxu0 %v211
    %307 = vmatpush.bf16.msra.mxu0 %v207
    %308 = vmatpush.bf16.msra.mxu0 %v203
    %309 = vmatpush.bf16.msra.mxu0 %v199
    %310 = vmatmul.bf16.gmra.mxu0 %v57
    %v311 = vpop.f32.mrf.mxu0
    %v312 = vadd.f32 %v95, %v311
    %v313 = vpop.f32.mrf.mxu0
    %v314 = vadd.f32 %v95, %v313
    %315 = vdwg.mxu0
    %v316 = vxor.u32 %v270, 2147483648
    %v317 = vxor.u32 %v284, 2147483648
    %v318 = vxor.u32 %v298, 2147483648
    %v319 = vxor.u32 %v312, 2147483648
    %v320 = vxor.u32 %v272, 2147483648
    %v321 = vxor.u32 %v286, 2147483648
    %v322 = vxor.u32 %v300, 2147483648
    %v323 = vxor.u32 %v314, 2147483648
    %v324 = vmul.f32 %v316, 1.442695
    %v325 = vpow.pop %v324
    %v326 = vmul.f32 %v317, 1.442695
    %v327 = vpow.pop %v326
    %v328 = vmul.f32 %v318, 1.442695
    %v329 = vpow.pop %v328
    %v330 = vmul.f32 %v319, 1.442695
    %v331 = vpow.pop %v330
    %v332 = vmul.f32 %v320, 1.442695
    %v333 = vpow.pop %v332
    %v334 = vmul.f32 %v321, 1.442695
    %v335 = vpow.pop %v334
    %v336 = vmul.f32 %v322, 1.442695
    %v337 = vpow.pop %v336
    %v338 = vmul.f32 %v323, 1.442695
    %v339 = vpow.pop %v338
    %v340 = vadd.f32 %v325, 1.0
    %v341 = vadd.f32 %v327, 1.0
    %v342 = vadd.f32 %v329, 1.0
    %v343 = vadd.f32 %v331, 1.0
    %v344 = vadd.f32 %v333, 1.0
    %v345 = vadd.f32 %v335, 1.0
    %v346 = vadd.f32 %v337, 1.0
    %v347 = vadd.f32 %v339, 1.0
    %v348 = vrcp.pop %v340
    %v349 = vmul.f32 %v340, %v348
    %v350 = vsub.f32 1.0, %v349
    %v351 = vmul.f32 %v348, %v350
    %v352 = vadd.f32 %v348, %v351
    %vm353 = vweird.f32 %v340
    %vm354 = vweird.f32 %v348
    %vm355 = vmor %vm353, %vm354
    %v356 = vsel %vm355, %v348, %v352
    %v357 = vand.u32 2147483647, %v340
    %vm358 = vcmp.eq.f32.partialorder %v357, 8.507059e+37
    %v359 = vand.u32 %v340, 2147483648
    %v360 = vor.u32 1.1754944e-38, %v359
    %v361 = vsel %vm358, %v360, %v356
    %v362 = vmul.f32 1.0, %v361
    %v363 = vrcp.pop %v341
    %v364 = vmul.f32 %v341, %v363
    %v365 = vsub.f32 1.0, %v364
    %v366 = vmul.f32 %v363, %v365
    %v367 = vadd.f32 %v363, %v366
    %vm368 = vweird.f32 %v341
    %vm369 = vweird.f32 %v363
    %vm370 = vmor %vm368, %vm369
    %v371 = vsel %vm370, %v363, %v367
    %v372 = vand.u32 2147483647, %v341
    %vm373 = vcmp.eq.f32.partialorder %v372, 8.507059e+37
    %v374 = vand.u32 %v341, 2147483648
    %v375 = vor.u32 1.1754944e-38, %v374
    %v376 = vsel %vm373, %v375, %v371
    %v377 = vmul.f32 1.0, %v376
    %v378 = vrcp.pop %v342
    %v379 = vmul.f32 %v342, %v378
    %v380 = vsub.f32 1.0, %v379
    %v381 = vmul.f32 %v378, %v380
    %v382 = vadd.f32 %v378, %v381
    %vm383 = vweird.f32 %v342
    %vm384 = vweird.f32 %v378
    %vm385 = vmor %vm383, %vm384
    %v386 = vsel %vm385, %v378, %v382
    %v387 = vand.u32 2147483647, %v342
    %vm388 = vcmp.eq.f32.partialorder %v387, 8.507059e+37
    %v389 = vand.u32 %v342, 2147483648
    %v390 = vor.u32 1.1754944e-38, %v389
    %v391 = vsel %vm388, %v390, %v386
    %v392 = vmul.f32 1.0, %v391
    %v393 = vrcp.pop %v343
    %v394 = vmul.f32 %v343, %v393
    %v395 = vsub.f32 1.0, %v394
    %v396 = vmul.f32 %v393, %v395
    %v397 = vadd.f32 %v393, %v396
    %vm398 = vweird.f32 %v343
    %vm399 = vweird.f32 %v393
    %vm400 = vmor %vm398, %vm399
    %v401 = vsel %vm400, %v393, %v397
    %v402 = vand.u32 2147483647, %v343
    %vm403 = vcmp.eq.f32.partialorder %v402, 8.507059e+37
    %v404 = vand.u32 %v343, 2147483648
    %v405 = vor.u32 1.1754944e-38, %v404
    %v406 = vsel %vm403, %v405, %v401
    %v407 = vmul.f32 1.0, %v406
    %v408 = vrcp.pop %v344
    %v409 = vmul.f32 %v344, %v408
    %v410 = vsub.f32 1.0, %v409
    %v411 = vmul.f32 %v408, %v410
    %v412 = vadd.f32 %v408, %v411
    %vm413 = vweird.f32 %v344
    %vm414 = vweird.f32 %v408
    %vm415 = vmor %vm413, %vm414
    %v416 = vsel %vm415, %v408, %v412
    %v417 = vand.u32 2147483647, %v344
    %vm418 = vcmp.eq.f32.partialorder %v417, 8.507059e+37
    %v419 = vand.u32 %v344, 2147483648
    %v420 = vor.u32 1.1754944e-38, %v419
    %v421 = vsel %vm418, %v420, %v416
    %v422 = vmul.f32 1.0, %v421
    %v423 = vrcp.pop %v345
    %v424 = vmul.f32 %v345, %v423
    %v425 = vsub.f32 1.0, %v424
    %v426 = vmul.f32 %v423, %v425
    %v427 = vadd.f32 %v423, %v426
    %vm428 = vweird.f32 %v345
    %vm429 = vweird.f32 %v423
    %vm430 = vmor %vm428, %vm429
    %v431 = vsel %vm430, %v423, %v427
    %v432 = vand.u32 2147483647, %v345
    %vm433 = vcmp.eq.f32.partialorder %v432, 8.507059e+37
    %v434 = vand.u32 %v345, 2147483648
    %v435 = vor.u32 1.1754944e-38, %v434
    %v436 = vsel %vm433, %v435, %v431
    %v437 = vmul.f32 1.0, %v436
    %v438 = vrcp.pop %v346
    %v439 = vmul.f32 %v346, %v438
    %v440 = vsub.f32 1.0, %v439
    %v441 = vmul.f32 %v438, %v440
    %v442 = vadd.f32 %v438, %v441
    %vm443 = vweird.f32 %v346
    %vm444 = vweird.f32 %v438
    %vm445 = vmor %vm443, %vm444
    %v446 = vsel %vm445, %v438, %v442
    %v447 = vand.u32 2147483647, %v346
    %vm448 = vcmp.eq.f32.partialorder %v447, 8.507059e+37
    %v449 = vand.u32 %v346, 2147483648
    %v450 = vor.u32 1.1754944e-38, %v449
    %v451 = vsel %vm448, %v450, %v446
    %v452 = vmul.f32 1.0, %v451
    %v453 = vrcp.pop %v347
    %v454 = vmul.f32 %v347, %v453
    %v455 = vsub.f32 1.0, %v454
    %v456 = vmul.f32 %v453, %v455
    %v457 = vadd.f32 %v453, %v456
    %vm458 = vweird.f32 %v347
    %vm459 = vweird.f32 %v453
    %vm460 = vmor %vm458, %vm459
    %v461 = vsel %vm460, %v453, %v457
    %v462 = vand.u32 2147483647, %v347
    %vm463 = vcmp.eq.f32.partialorder %v462, 8.507059e+37
    %v464 = vand.u32 %v347, 2147483648
    %v465 = vor.u32 1.1754944e-38, %v464
    %v466 = vsel %vm463, %v465, %v461
    %v467 = vmul.f32 1.0, %v466
    %v468 = vmul.f32 %v270, %v362
    %v469 = vmul.f32 %v284, %v377
    %v470 = vmul.f32 %v298, %v392
    %v471 = vmul.f32 %v312, %v407
    %v472 = vmul.f32 %v272, %v422
    %v473 = vmul.f32 %v286, %v437
    %v474 = vmul.f32 %v300, %v452
    %v475 = vmul.f32 %v314, %v467
    %v476 = vpack.c.bf16 %v472, %v468
    %v477 = vpack.c.bf16 %v473, %v469
    %v478 = vpack.c.bf16 %v474, %v470
    %v479 = vpack.c.bf16 %v475, %v471
    %v480 = vld [vmem:[#allocation4] sm:$0xf]
    %v481 = vld [vmem:[#allocation4 + $0x4] sm:$0xf]
    %v482 = vld [vmem:[#allocation4 + $0x8] sm:$0xf]
    %v483 = vld [vmem:[#allocation4 + $0xc] sm:$0xf]
    %v484 = vld [vmem:[#allocation4 + $0x10] sm:$0xf]
    %v485 = vld [vmem:[#allocation4 + $0x14] sm:$0xf]
    %v486 = vld [vmem:[#allocation4 + $0x18] sm:$0xf]
    %v487 = vld [vmem:[#allocation4 + $0x1c] sm:$0xf]
    %v488 = vld [vmem:[#allocation4 + $0x20] sm:$0xf]
    %v489 = vld [vmem:[#allocation4 + $0x24] sm:$0xf]
    %v490 = vld [vmem:[#allocation4 + $0x28] sm:$0xf]
    %v491 = vld [vmem:[#allocation4 + $0x2c] sm:$0xf]
    %v492 = vld [vmem:[#allocation4 + $0x30] sm:$0xf]
    %v493 = vld [vmem:[#allocation4 + $0x34] sm:$0xf]
    %v494 = vld [vmem:[#allocation4 + $0x38] sm:$0xf]
    %v495 = vld [vmem:[#allocation4 + $0x3c] sm:$0xf]
    %v496 = vld [vmem:[#allocation4 + $0x40] sm:$0xf]
    %v497 = vld [vmem:[#allocation4 + $0x44] sm:$0xf]
    %v498 = vld [vmem:[#allocation4 + $0x48] sm:$0xf]
    %v499 = vld [vmem:[#allocation4 + $0x4c] sm:$0xf]
    %v500 = vld [vmem:[#allocation4 + $0x50] sm:$0xf]
    %v501 = vld [vmem:[#allocation4 + $0x54] sm:$0xf]
    %v502 = vld [vmem:[#allocation4 + $0x58] sm:$0xf]
    %v503 = vld [vmem:[#allocation4 + $0x5c] sm:$0xf]
    %v504 = vld [vmem:[#allocation4 + $0x60] sm:$0xf]
    %v505 = vld [vmem:[#allocation4 + $0x64] sm:$0xf]
    %v506 = vld [vmem:[#allocation4 + $0x68] sm:$0xf]
    %v507 = vld [vmem:[#allocation4 + $0x6c] sm:$0xf]
    %v508 = vld [vmem:[#allocation4 + $0x70] sm:$0xf]
    %v509 = vld [vmem:[#allocation4 + $0x74] sm:$0xf]
    %v510 = vld [vmem:[#allocation4 + $0x78] sm:$0xf]
    %v511 = vld [vmem:[#allocation4 + $0x7c] sm:$0xf]
    %v512 = vld [vmem:[#allocation4 + $0x80] sm:$0xf]
    %v513 = vld [vmem:[#allocation4 + $0x84] sm:$0xf]
    %v514 = vld [vmem:[#allocation4 + $0x88] sm:$0xf]
    %v515 = vld [vmem:[#allocation4 + $0x8c] sm:$0xf]
    %v516 = vld [vmem:[#allocation4 + $0x90] sm:$0xf]
    %v517 = vld [vmem:[#allocation4 + $0x94] sm:$0xf]
    %v518 = vld [vmem:[#allocation4 + $0x98] sm:$0xf]
    %v519 = vld [vmem:[#allocation4 + $0x9c] sm:$0xf]
    %v520 = vld [vmem:[#allocation4 + $0xa0] sm:$0xf]
    %v521 = vld [vmem:[#allocation4 + $0xa4] sm:$0xf]
    %v522 = vld [vmem:[#allocation4 + $0xa8] sm:$0xf]
    %v523 = vld [vmem:[#allocation4 + $0xac] sm:$0xf]
    %v524 = vld [vmem:[#allocation4 + $0xb0] sm:$0xf]
    %v525 = vld [vmem:[#allocation4 + $0xb4] sm:$0xf]
    %v526 = vld [vmem:[#allocation4 + $0xb8] sm:$0xf]
    %v527 = vld [vmem:[#allocation4 + $0xbc] sm:$0xf]
    %v528 = vld [vmem:[#allocation4 + $0xc0] sm:$0xf]
    %v529 = vld [vmem:[#allocation4 + $0xc4] sm:$0xf]
    %v530 = vld [vmem:[#allocation4 + $0xc8] sm:$0xf]
    %v531 = vld [vmem:[#allocation4 + $0xcc] sm:$0xf]
    %v532 = vld [vmem:[#allocation4 + $0xd0] sm:$0xf]
    %v533 = vld [vmem:[#allocation4 + $0xd4] sm:$0xf]
    %v534 = vld [vmem:[#allocation4 + $0xd8] sm:$0xf]
    %v535 = vld [vmem:[#allocation4 + $0xdc] sm:$0xf]
    %v536 = vld [vmem:[#allocation4 + $0xe0] sm:$0xf]
    %v537 = vld [vmem:[#allocation4 + $0xe4] sm:$0xf]
    %v538 = vld [vmem:[#allocation4 + $0xe8] sm:$0xf]
    %v539 = vld [vmem:[#allocation4 + $0xec] sm:$0xf]
    %v540 = vld [vmem:[#allocation4 + $0xf0] sm:$0xf]
    %v541 = vld [vmem:[#allocation4 + $0xf4] sm:$0xf]
    %v542 = vld [vmem:[#allocation4 + $0xf8] sm:$0xf]
    %v543 = vld [vmem:[#allocation4 + $0xfc] sm:$0xf]
    %v544 = vld [vmem:[%s4] sm:$0x1]
    %v546 = vperm.slane %v544, 0
    %v612 = vunpack.c.l.b16 %v480
    %v613 = vunpack.c.l.b16 %v481
    %v614 = vunpack.c.l.b16 %v482
    %v615 = vunpack.c.l.b16 %v483
    %v616 = vunpack.c.l.b16 %v484
    %v617 = vunpack.c.l.b16 %v485
    %v618 = vunpack.c.l.b16 %v486
    %v619 = vunpack.c.l.b16 %v487
    %v620 = vunpack.c.l.b16 %v488
    %v621 = vunpack.c.l.b16 %v489
    %v622 = vunpack.c.l.b16 %v490
    %v623 = vunpack.c.l.b16 %v491
    %v624 = vunpack.c.l.b16 %v492
    %v625 = vunpack.c.l.b16 %v493
    %v626 = vunpack.c.l.b16 %v494
    %v627 = vunpack.c.l.b16 %v495
    %v628 = vunpack.c.l.b16 %v496
    %v629 = vunpack.c.l.b16 %v497
    %v630 = vunpack.c.l.b16 %v498
    %v631 = vunpack.c.l.b16 %v499
    %v632 = vunpack.c.l.b16 %v500
    %v633 = vunpack.c.l.b16 %v501
    %v634 = vunpack.c.l.b16 %v502
    %v635 = vunpack.c.l.b16 %v503
    %v636 = vunpack.c.l.b16 %v504
    %v637 = vunpack.c.l.b16 %v505
    %v638 = vunpack.c.l.b16 %v506
    %v639 = vunpack.c.l.b16 %v507
    %v640 = vunpack.c.l.b16 %v508
    %v641 = vunpack.c.l.b16 %v509
    %v642 = vunpack.c.l.b16 %v510
    %v643 = vunpack.c.l.b16 %v511
    %v644 = vunpack.c.l.b16 %v512
    %v645 = vunpack.c.l.b16 %v513
    %v646 = vunpack.c.l.b16 %v514
    %v647 = vunpack.c.l.b16 %v515
    %v648 = vunpack.c.l.b16 %v516
    %v649 = vunpack.c.l.b16 %v517
    %v650 = vunpack.c.l.b16 %v518
    %v651 = vunpack.c.l.b16 %v519
    %v652 = vunpack.c.l.b16 %v520
    %v653 = vunpack.c.l.b16 %v521
    %v654 = vunpack.c.l.b16 %v522
    %v655 = vunpack.c.l.b16 %v523
    %v656 = vunpack.c.l.b16 %v524
    %v657 = vunpack.c.l.b16 %v525
    %v658 = vunpack.c.l.b16 %v526
    %v659 = vunpack.c.l.b16 %v527
    %v660 = vunpack.c.l.b16 %v528
    %v661 = vunpack.c.l.b16 %v529
    %v662 = vunpack.c.l.b16 %v530
    %v663 = vunpack.c.l.b16 %v531
    %v664 = vunpack.c.l.b16 %v532
    %v665 = vunpack.c.l.b16 %v533
    %v666 = vunpack.c.l.b16 %v534
    %v667 = vunpack.c.l.b16 %v535
    %v668 = vunpack.c.l.b16 %v536
    %v669 = vunpack.c.l.b16 %v537
    %v670 = vunpack.c.l.b16 %v538
    %v671 = vunpack.c.l.b16 %v539
    %v672 = vunpack.c.l.b16 %v540
    %v673 = vunpack.c.l.b16 %v541
    %v674 = vunpack.c.l.b16 %v542
    %v675 = vunpack.c.l.b16 %v543
    %v676 = vpack.c.b16 %v613, %v612
    %v677 = vpack.c.b16 %v615, %v614
    %v678 = vpack.c.b16 %v617, %v616
    %v679 = vpack.c.b16 %v619, %v618
    %v680 = vpack.c.b16 %v621, %v620
    %v681 = vpack.c.b16 %v623, %v622
    %v682 = vpack.c.b16 %v625, %v624
    %v683 = vpack.c.b16 %v627, %v626
    %v684 = vpack.c.b16 %v629, %v628
    %v685 = vpack.c.b16 %v631, %v630
    %v686 = vpack.c.b16 %v633, %v632
    %v687 = vpack.c.b16 %v635, %v634
    %v688 = vpack.c.b16 %v637, %v636
    %v689 = vpack.c.b16 %v639, %v638
    %v690 = vpack.c.b16 %v641, %v640
    %v691 = vpack.c.b16 %v643, %v642
    %v692 = vpack.c.b16 %v645, %v644
    %v693 = vpack.c.b16 %v647, %v646
    %v694 = vpack.c.b16 %v649, %v648
    %v695 = vpack.c.b16 %v651, %v650
    %v696 = vpack.c.b16 %v653, %v652
    %v697 = vpack.c.b16 %v655, %v654
    %v698 = vpack.c.b16 %v657, %v656
    %v699 = vpack.c.b16 %v659, %v658
    %v700 = vpack.c.b16 %v661, %v660
    %v701 = vpack.c.b16 %v663, %v662
    %v702 = vpack.c.b16 %v665, %v664
    %v703 = vpack.c.b16 %v667, %v666
    %v704 = vpack.c.b16 %v669, %v668
    %v705 = vpack.c.b16 %v671, %v670
    %v706 = vpack.c.b16 %v673, %v672
    %v707 = vpack.c.b16 %v675, %v674
    %740 = vmatpush.bf16.msra.mxu0 %v683
    %741 = vmatpush.bf16.msra.mxu0 %v682
    %742 = vmatpush.bf16.msra.mxu0 %v681
    %743 = vmatpush.bf16.msra.mxu0 %v680
    %744 = vmatpush.bf16.msra.mxu0 %v679
    %745 = vmatpush.bf16.msra.mxu0 %v678
    %746 = vmatpush.bf16.msra.mxu0 %v677
    %747 = vmatpush.bf16.msra.mxu0 %v676
    %748 = vmatmul.bf16.gmra.mxu0 %v476
    %v749 = vpop.f32.mrf.mxu0
    %v750 = vadd.f32 %v546, %v749
    %v751 = vpop.f32.mrf.mxu0
    %v752 = vadd.f32 %v546, %v751
    %753 = vdwg.mxu0
    %754 = vmatpush.bf16.msra.mxu0 %v691
    %755 = vmatpush.bf16.msra.mxu0 %v690
    %756 = vmatpush.bf16.msra.mxu0 %v689
    %757 = vmatpush.bf16.msra.mxu0 %v688
    %758 = vmatpush.bf16.msra.mxu0 %v687
    %759 = vmatpush.bf16.msra.mxu0 %v686
    %760 = vmatpush.bf16.msra.mxu0 %v685
    %761 = vmatpush.bf16.msra.mxu0 %v684
    %762 = vmatmul.bf16.gmra.mxu0 %v477
    %v763 = vpop.f32.mrf.mxu0
    %v764 = vadd.f32 %v750, %v763
    %v765 = vpop.f32.mrf.mxu0
    %v766 = vadd.f32 %v752, %v765
    %767 = vdwg.mxu0
    %768 = vmatpush.bf16.msra.mxu0 %v699
    %769 = vmatpush.bf16.msra.mxu0 %v698
    %770 = vmatpush.bf16.msra.mxu0 %v697
    %771 = vmatpush.bf16.msra.mxu0 %v696
    %772 = vmatpush.bf16.msra.mxu0 %v695
    %773 = vmatpush.bf16.msra.mxu0 %v694
    %774 = vmatpush.bf16.msra.mxu0 %v693
    %775 = vmatpush.bf16.msra.mxu0 %v692
    %776 = vmatmul.bf16.gmra.mxu0 %v478
    %v777 = vpop.f32.mrf.mxu0
    %v778 = vadd.f32 %v764, %v777
    %v779 = vpop.f32.mrf.mxu0
    %v780 = vadd.f32 %v766, %v779
    %781 = vdwg.mxu0
    %782 = vmatpush.bf16.msra.mxu0 %v707
    %783 = vmatpush.bf16.msra.mxu0 %v706
    %784 = vmatpush.bf16.msra.mxu0 %v705
    %785 = vmatpush.bf16.msra.mxu0 %v704
    %786 = vmatpush.bf16.msra.mxu0 %v703
    %787 = vmatpush.bf16.msra.mxu0 %v702
    %788 = vmatpush.bf16.msra.mxu0 %v701
    %789 = vmatpush.bf16.msra.mxu0 %v700
    %790 = vmatmul.bf16.gmra.mxu0 %v479
    %v791 = vpop.f32.mrf.mxu0
    %v792 = vadd.f32 %v778, %v791
    %v793 = vpop.f32.mrf.mxu0
    %v794 = vadd.f32 %v780, %v793
    %795 = vdwg.mxu0
    %v796 = vpack.c.bf16 %v794, %v792
    %797 = vmatpush.bf16.msra.mxu0 %v224
    %798 = vmatpush.bf16.msra.mxu0 %v220
    %799 = vmatpush.bf16.msra.mxu0 %v216
    %800 = vmatpush.bf16.msra.mxu0 %v212
    %801 = vmatpush.bf16.msra.mxu0 %v208
    %802 = vmatpush.bf16.msra.mxu0 %v204
    %803 = vmatpush.bf16.msra.mxu0 %v200
    %804 = vmatpush.bf16.msra.mxu0 %v196
    %805 = vmatmul.bf16.gmra.mxu0 %v796
    %v806 = vpop.f32.mrf.mxu0
    %v807 = vadd.f32 %v92, %v806
    %v808 = vpop.f32.mrf.mxu0
    %v809 = vadd.f32 %v92, %v808
    %810 = vdwg.mxu0
    %811 = vmatpush.bf16.msra.mxu0 %v225
    %812 = vmatpush.bf16.msra.mxu0 %v221
    %813 = vmatpush.bf16.msra.mxu0 %v217
    %814 = vmatpush.bf16.msra.mxu0 %v213
    %815 = vmatpush.bf16.msra.mxu0 %v209
    %816 = vmatpush.bf16.msra.mxu0 %v205
    %817 = vmatpush.bf16.msra.mxu0 %v201
    %818 = vmatpush.bf16.msra.mxu0 %v197
    %819 = vmatmul.bf16.gmra.mxu0 %v796
    %v820 = vpop.f32.mrf.mxu0
    %v821 = vadd.f32 %v93, %v820
    %v822 = vpop.f32.mrf.mxu0
    %v823 = vadd.f32 %v93, %v822
    %824 = vdwg.mxu0
    %825 = vmatpush.bf16.msra.mxu0 %v226
    %826 = vmatpush.bf16.msra.mxu0 %v222
    %827 = vmatpush.bf16.msra.mxu0 %v218
    %828 = vmatpush.bf16.msra.mxu0 %v214
    %829 = vmatpush.bf16.msra.mxu0 %v210
    %830 = vmatpush.bf16.msra.mxu0 %v206
    %831 = vmatpush.bf16.msra.mxu0 %v202
    %832 = vmatpush.bf16.msra.mxu0 %v198
    %833 = vmatmul.bf16.gmra.mxu0 %v796
    %v834 = vpop.f32.mrf.mxu0
    %v835 = vadd.f32 %v94, %v834
    %v836 = vpop.f32.mrf.mxu0
    %v837 = vadd.f32 %v94, %v836
    %838 = vdwg.mxu0
    %839 = vmatpush.bf16.msra.mxu0 %v227
    %840 = vmatpush.bf16.msra.mxu0 %v223
    %841 = vmatpush.bf16.msra.mxu0 %v219
    %842 = vmatpush.bf16.msra.mxu0 %v215
    %843 = vmatpush.bf16.msra.mxu0 %v211
    %844 = vmatpush.bf16.msra.mxu0 %v207
    %845 = vmatpush.bf16.msra.mxu0 %v203
    %846 = vmatpush.bf16.msra.mxu0 %v199
    %847 = vmatmul.bf16.gmra.mxu0 %v796
    %v848 = vpop.f32.mrf.mxu0
    %v849 = vadd.f32 %v95, %v848
    %v850 = vpop.f32.mrf.mxu0
    %v851 = vadd.f32 %v95, %v850
    %852 = vdwg.mxu0
    %v853 = vxor.u32 %v807, 2147483648
    %v854 = vxor.u32 %v821, 2147483648
    %v855 = vxor.u32 %v835, 2147483648
    %v856 = vxor.u32 %v849, 2147483648
    %v857 = vxor.u32 %v809, 2147483648
    %v858 = vxor.u32 %v823, 2147483648
    %v859 = vxor.u32 %v837, 2147483648
    %v860 = vxor.u32 %v851, 2147483648
    %v861 = vmul.f32 %v853, 1.442695
    %v862 = vpow.pop %v861
    %v863 = vmul.f32 %v854, 1.442695
    %v864 = vpow.pop %v863
    %v865 = vmul.f32 %v855, 1.442695
    %v866 = vpow.pop %v865
    %v867 = vmul.f32 %v856, 1.442695
    %v868 = vpow.pop %v867
    %v869 = vmul.f32 %v857, 1.442695
    %v870 = vpow.pop %v869
    %v871 = vmul.f32 %v858, 1.442695
    %v872 = vpow.pop %v871
    %v873 = vmul.f32 %v859, 1.442695
    %v874 = vpow.pop %v873
    %v875 = vmul.f32 %v860, 1.442695
    %v876 = vpow.pop %v875
    %v877 = vadd.f32 %v862, 1.0
    %v878 = vadd.f32 %v864, 1.0
    %v879 = vadd.f32 %v866, 1.0
    %v880 = vadd.f32 %v868, 1.0
    %v881 = vadd.f32 %v870, 1.0
    %v882 = vadd.f32 %v872, 1.0
    %v883 = vadd.f32 %v874, 1.0
    %v884 = vadd.f32 %v876, 1.0
    %v885 = vrcp.pop %v877
    %v886 = vmul.f32 %v877, %v885
    %v887 = vsub.f32 1.0, %v886
    %v888 = vmul.f32 %v885, %v887
    %v889 = vadd.f32 %v885, %v888
    %vm890 = vweird.f32 %v877
    %vm891 = vweird.f32 %v885
    %vm892 = vmor %vm890, %vm891
    %v893 = vsel %vm892, %v885, %v889
    %v894 = vand.u32 2147483647, %v877
    %vm895 = vcmp.eq.f32.partialorder %v894, 8.507059e+37
    %v896 = vand.u32 %v877, 2147483648
    %v897 = vor.u32 1.1754944e-38, %v896
    %v898 = vsel %vm895, %v897, %v893
    %v899 = vmul.f32 1.0, %v898
    %v900 = vrcp.pop %v878
    %v901 = vmul.f32 %v878, %v900
    %v902 = vsub.f32 1.0, %v901
    %v903 = vmul.f32 %v900, %v902
    %v904 = vadd.f32 %v900, %v903
    %vm905 = vweird.f32 %v878
    %vm906 = vweird.f32 %v900
    %vm907 = vmor %vm905, %vm906
    %v908 = vsel %vm907, %v900, %v904
    %v909 = vand.u32 2147483647, %v878
    %vm910 = vcmp.eq.f32.partialorder %v909, 8.507059e+37
    %v911 = vand.u32 %v878, 2147483648
    %v912 = vor.u32 1.1754944e-38, %v911
    %v913 = vsel %vm910, %v912, %v908
    %v914 = vmul.f32 1.0, %v913
    %v915 = vrcp.pop %v879
    %v916 = vmul.f32 %v879, %v915
    %v917 = vsub.f32 1.0, %v916
    %v918 = vmul.f32 %v915, %v917
    %v919 = vadd.f32 %v915, %v918
    %vm920 = vweird.f32 %v879
    %vm921 = vweird.f32 %v915
    %vm922 = vmor %vm920, %vm921
    %v923 = vsel %vm922, %v915, %v919
    %v924 = vand.u32 2147483647, %v879
    %vm925 = vcmp.eq.f32.partialorder %v924, 8.507059e+37
    %v926 = vand.u32 %v879, 2147483648
    %v927 = vor.u32 1.1754944e-38, %v926
    %v928 = vsel %vm925, %v927, %v923
    %v929 = vmul.f32 1.0, %v928
    %v930 = vrcp.pop %v880
    %v931 = vmul.f32 %v880, %v930
    %v932 = vsub.f32 1.0, %v931
    %v933 = vmul.f32 %v930, %v932
    %v934 = vadd.f32 %v930, %v933
    %vm935 = vweird.f32 %v880
    %vm936 = vweird.f32 %v930
    %vm937 = vmor %vm935, %vm936
    %v938 = vsel %vm937, %v930, %v934
    %v939 = vand.u32 2147483647, %v880
    %vm940 = vcmp.eq.f32.partialorder %v939, 8.507059e+37
    %v941 = vand.u32 %v880, 2147483648
    %v942 = vor.u32 1.1754944e-38, %v941
    %v943 = vsel %vm940, %v942, %v938
    %v944 = vmul.f32 1.0, %v943
    %v945 = vrcp.pop %v881
    %v946 = vmul.f32 %v881, %v945
    %v947 = vsub.f32 1.0, %v946
    %v948 = vmul.f32 %v945, %v947
    %v949 = vadd.f32 %v945, %v948
    %vm950 = vweird.f32 %v881
    %vm951 = vweird.f32 %v945
    %vm952 = vmor %vm950, %vm951
    %v953 = vsel %vm952, %v945, %v949
    %v954 = vand.u32 2147483647, %v881
    %vm955 = vcmp.eq.f32.partialorder %v954, 8.507059e+37
    %v956 = vand.u32 %v881, 2147483648
    %v957 = vor.u32 1.1754944e-38, %v956
    %v958 = vsel %vm955, %v957, %v953
    %v959 = vmul.f32 1.0, %v958
    %v960 = vrcp.pop %v882
    %v961 = vmul.f32 %v882, %v960
    %v962 = vsub.f32 1.0, %v961
    %v963 = vmul.f32 %v960, %v962
    %v964 = vadd.f32 %v960, %v963
    %vm965 = vweird.f32 %v882
    %vm966 = vweird.f32 %v960
    %vm967 = vmor %vm965, %vm966
    %v968 = vsel %vm967, %v960, %v964
    %v969 = vand.u32 2147483647, %v882
    %vm970 = vcmp.eq.f32.partialorder %v969, 8.507059e+37
    %v971 = vand.u32 %v882, 2147483648
    %v972 = vor.u32 1.1754944e-38, %v971
    %v973 = vsel %vm970, %v972, %v968
    %v974 = vmul.f32 1.0, %v973
    %v975 = vrcp.pop %v883
    %v976 = vmul.f32 %v883, %v975
    %v977 = vsub.f32 1.0, %v976
    %v978 = vmul.f32 %v975, %v977
    %v979 = vadd.f32 %v975, %v978
    %vm980 = vweird.f32 %v883
    %vm981 = vweird.f32 %v975
    %vm982 = vmor %vm980, %vm981
    %v983 = vsel %vm982, %v975, %v979
    %v984 = vand.u32 2147483647, %v883
    %vm985 = vcmp.eq.f32.partialorder %v984, 8.507059e+37
    %v986 = vand.u32 %v883, 2147483648
    %v987 = vor.u32 1.1754944e-38, %v986
    %v988 = vsel %vm985, %v987, %v983
    %v989 = vmul.f32 1.0, %v988
    %v990 = vrcp.pop %v884
    %v991 = vmul.f32 %v884, %v990
    %v992 = vsub.f32 1.0, %v991
    %v993 = vmul.f32 %v990, %v992
    %v994 = vadd.f32 %v990, %v993
    %vm995 = vweird.f32 %v884
    %vm996 = vweird.f32 %v990
    %vm997 = vmor %vm995, %vm996
    %v998 = vsel %vm997, %v990, %v994
    %v999 = vand.u32 2147483647, %v884
    %vm1000 = vcmp.eq.f32.partialorder %v999, 8.507059e+37
    %v1001 = vand.u32 %v884, 2147483648
    %v1002 = vor.u32 1.1754944e-38, %v1001
    %v1003 = vsel %vm1000, %v1002, %v998
    %v1004 = vmul.f32 1.0, %v1003
    %v1005 = vmul.f32 %v807, %v899
    %v1006 = vmul.f32 %v821, %v914
    %v1007 = vmul.f32 %v835, %v929
    %v1008 = vmul.f32 %v849, %v944
    %v1009 = vmul.f32 %v809, %v959
    %v1010 = vmul.f32 %v823, %v974
    %v1011 = vmul.f32 %v837, %v989
    %v1012 = vmul.f32 %v851, %v1004
    %v1013 = vpack.c.bf16 %v1009, %v1005
    %v1014 = vpack.c.bf16 %v1010, %v1006
    %v1015 = vpack.c.bf16 %v1011, %v1007
    %v1016 = vpack.c.bf16 %v1012, %v1008
    %1017 = vmatpush.bf16.msra.mxu0 %v683
    %1018 = vmatpush.bf16.msra.mxu0 %v682
    %1019 = vmatpush.bf16.msra.mxu0 %v681
    %1020 = vmatpush.bf16.msra.mxu0 %v680
    %1021 = vmatpush.bf16.msra.mxu0 %v679
    %1022 = vmatpush.bf16.msra.mxu0 %v678
    %1023 = vmatpush.bf16.msra.mxu0 %v677
    %1024 = vmatpush.bf16.msra.mxu0 %v676
    %1025 = vmatmul.bf16.gmra.mxu0 %v1013
    %v1026 = vpop.f32.mrf.mxu0
    %v1027 = vadd.f32 %v546, %v1026
    %v1028 = vpop.f32.mrf.mxu0
    %v1029 = vadd.f32 %v546, %v1028
    %1030 = vdwg.mxu0
    %1031 = vmatpush.bf16.msra.mxu0 %v691
    %1032 = vmatpush.bf16.msra.mxu0 %v690
    %1033 = vmatpush.bf16.msra.mxu0 %v689
    %1034 = vmatpush.bf16.msra.mxu0 %v688
    %1035 = vmatpush.bf16.msra.mxu0 %v687
    %1036 = vmatpush.bf16.msra.mxu0 %v686
    %1037 = vmatpush.bf16.msra.mxu0 %v685
    %1038 = vmatpush.bf16.msra.mxu0 %v684
    %1039 = vmatmul.bf16.gmra.mxu0 %v1014
    %v1040 = vpop.f32.mrf.mxu0
    %v1041 = vadd.f32 %v1027, %v1040
    %v1042 = vpop.f32.mrf.mxu0
    %v1043 = vadd.f32 %v1029, %v1042
    %1044 = vdwg.mxu0
    %1045 = vmatpush.bf16.msra.mxu0 %v699
    %1046 = vmatpush.bf16.msra.mxu0 %v698
    %1047 = vmatpush.bf16.msra.mxu0 %v697
    %1048 = vmatpush.bf16.msra.mxu0 %v696
    %1049 = vmatpush.bf16.msra.mxu0 %v695
    %1050 = vmatpush.bf16.msra.mxu0 %v694
    %1051 = vmatpush.bf16.msra.mxu0 %v693
    %1052 = vmatpush.bf16.msra.mxu0 %v692
    %1053 = vmatmul.bf16.gmra.mxu0 %v1015
    %v1054 = vpop.f32.mrf.mxu0
    %v1055 = vadd.f32 %v1041, %v1054
    %v1056 = vpop.f32.mrf.mxu0
    %v1057 = vadd.f32 %v1043, %v1056
    %1058 = vdwg.mxu0
    %1059 = vmatpush.bf16.msra.mxu0 %v707
    %1060 = vmatpush.bf16.msra.mxu0 %v706
    %1061 = vmatpush.bf16.msra.mxu0 %v705
    %1062 = vmatpush.bf16.msra.mxu0 %v704
    %1063 = vmatpush.bf16.msra.mxu0 %v703
    %1064 = vmatpush.bf16.msra.mxu0 %v702
    %1065 = vmatpush.bf16.msra.mxu0 %v701
    %1066 = vmatpush.bf16.msra.mxu0 %v700
    %1067 = vmatmul.bf16.gmra.mxu0 %v1016
    %v1068 = vpop.f32.mrf.mxu0
    %v1069 = vadd.f32 %v1055, %v1068
    %v1070 = vpop.f32.mrf.mxu0
    %v1071 = vadd.f32 %v1057, %v1070
    %1072 = vdwg.mxu0
    %v1073 = vld [vmem:[%s5] sm:$0x1]
    %v1075 = vperm.slane %v1073, 0
    %v1077 = vmul.f32 %v1075, %v1069
    %v1078 = vmul.f32 %v1075, %v1071
    %v1079 = vadd.f32 %v55, %v1077
    %v1080 = vadd.f32 %v56, %v1078
    %1081 = vst [vmem:[%s6] sm:$0xff] %v1079
    %1082 = vst [vmem:[%s6 + $0x8] sm:$0xff] %v1080
    // Predicated region
    $region34: #{_lambda_.18} parent=1 // pred_check
      _
    $region35: #{_lambda_.18} parent=1 // pred_check_branch
      %1084 = sbr.rel (0) target = $region37
    $region36: #{_lambda_.18} parent=1 // pred_region
      _
    $region37: #{_lambda_.18} parent=1 // pred_fallthru
      _
    // Predicated region
    $region38: #{_lambda_.18} parent=1 // pred_check
      _
    $region39: #{_lambda_.18} parent=1 // pred_check_branch
      %1086 = sbr.rel (0) target = $region41
    $region40: #{_lambda_.18} parent=1 // pred_region
      _
    $region41: #{_lambda_.18} parent=1 // pred_fallthru
      _
    %1087 = vsyncpa [#allocation3], 1
    %1088 = vsyncpa [#allocation5], 1

</llo_original>
